<compile_context>
chip_gen: v7x
topology: tpu7x:2x2x1
jax: 0.10.0
libtpu: 0.0.40
codegen_flags: <defaults>
</compile_context>

<pallas_src>
import math
import functools

import jax
import jax.numpy as jnp
from jax.experimental import pallas as pl
from jax.experimental.pallas import tpu as pltpu

# ----------------------------- model hyper-params -----------------------------
B = 2                 # batch
IMG = 16              # input image H == W
PATCH = 4             # backbone downsample factor (patch-embed "conv")
NUM_CHANNELS = 8      # backbone.num_channels
D_MODEL = 32          # transformer.d_model (hidden_dim)
NHEADS = 4
DH = D_MODEL // NHEADS
DIM_FF = 64
NUM_QUERIES = 8
NUM_ENC = 1
NUM_DEC = 1

LN_EPS = 1e-5
NEG_INF = -1e9
ATTN_SCALE = 1.0 / math.sqrt(DH)

ENC_NW = 8            # refs per encoder layer: attn_w, attn_b, ln1, w1, b1, w2, b2, ln2
DEC_NW = 11           # refs per decoder layer: sa_w, sa_b, ln1, ca_w, ca_b, ln2, w1, b1, w2, b2, ln3

# TODO(synk): the real DETR backbone is a ResNet; its internals are not part of
# this module, so it is stubbed with a single patch-embed projection (strided
# conv expressed as an im2col matmul, folded into input_proj) + the standard
# sine position embedding.  Dropout layers are identity (eval mode).
# TODO(synk): at real DETR scale (D=256, FF=2048, 6+6 layers) store weights in
# bf16 and/or stream layers; at this toy size f32-in-VMEM is fine on all chips.


# ============================= in-kernel helpers ===============================

def _layer_norm(x, g, b):
    """PyTorch LayerNorm semantics (biased variance) over the last dim."""
    mu = jnp.mean(x, axis=-1, keepdims=True)
    var = jnp.mean(jnp.square(x - mu), axis=-1, keepdims=True)
    return (x - mu) * jax.lax.rsqrt(var + LN_EPS) * g + b


def _softmax(s):
    s = s - jnp.max(s, axis=-1, keepdims=True)
    e = jnp.exp(s)
    return e * pl.reciprocal(jnp.sum(e, axis=-1, keepdims=True), approx=True)


def _mha(q_in, k_in, v_in, bias, w_ref, b_ref):
    """Multi-head attention with batch folded into rows.

    q_in:(Mq,D) k_in,v_in:(Mk,D); bias:(Mq,Mk) additive mask (key padding +
    cross-batch block-diagonal exclusion).
    w_ref: (4, D, D) stacked [Wq*scale, Wk, Wv, Wo]; b_ref: (4, 1, D).
    Full-width QKV/O projections; per-head work only for the score/softmax/PV
    block on 8-lane slices; single fused output-projection dot.
    """
    q = jnp.dot(q_in, w_ref[0], preferred_element_type=jnp.float32) + b_ref[0]
    k = jnp.dot(k_in, w_ref[1], preferred_element_type=jnp.float32) + b_ref[1]
    v = jnp.dot(v_in, w_ref[2], preferred_element_type=jnp.float32) + b_ref[2]
    ctx = []
    for h in range(NHEADS):                          # static unroll, tiny blocks
        lo, hi = h * DH, (h + 1) * DH
        s = jax.lax.dot_general(q[:, lo:hi], k[:, lo:hi],
                                (((1,), (1,)), ((), ())),
                                preferred_element_type=jnp.float32)   # (Mq, Mk)
        p = _softmax(s + bias)
        ctx.append(jnp.dot(p, v[:, lo:hi], preferred_element_type=jnp.float32))
    ctx = jnp.concatenate(ctx, axis=-1)              # (Mq, D)
    return jnp.dot(ctx, w_ref[3], preferred_element_type=jnp.float32) + b_ref[3]


# ================================ Pallas kernel ================================

def _make_detr_kernel(num_enc, num_dec):
    def kernel(*refs):
        it = iter(refs)
        patches = next(it)[...]                      # (B*L, Cin*P*P)
        stem_w = next(it)[...]                       # (Cin*P*P, D) folded
        stem_b = next(it)[...]                       # (1, D)
        pos = next(it)[...]                          # (B*L, D)
        qpos = next(it)[...]                         # (B*NQ, D)
        enc_bias = next(it)[...]                     # (B*L, B*L)
        dec_sa_bias = next(it)[...]                  # (B*NQ, B*NQ)
        dec_ca_bias = next(it)[...]                  # (B*NQ, B*L)
        enc_w = [[next(it) for _ in range(ENC_NW)] for _ in range(num_enc)]
        dec_w = [[next(it) for _ in range(DEC_NW)] for _ in range(num_dec)]
        lnf = next(it)                               # (2, 1, D) final decoder norm
        hs_ref = next(it)                            # (num_dec, B*NQ, D)
        mem_ref = next(it)                           # (B*L, D)

        # ---- stem: patch-embed ∘ input_proj folded into a single matmul ----
        x = jnp.dot(patches, stem_w, preferred_element_type=jnp.float32) + stem_b

        # ---- encoder stack (VMEM resident) ----
        for aw, ab, ln1, w1, b1, w2, b2, ln2 in enc_w:
            qk = x + pos                             # q = k = src + pos, v = src
            a = _mha(qk, qk, x, enc_bias, aw, ab)
            x = _layer_norm(x + a, ln1[0], ln1[1])
            h = jnp.maximum(
                jnp.dot(x, w1[...], preferred_element_type=jnp.float32) + b1[...], 0.0)
            f = jnp.dot(h, w2[...], preferred_element_type=jnp.float32) + b2[...]
            x = _layer_norm(x + f, ln2[0], ln2[1])
        mem = x
        mem_ref[...] = mem

        # ---- decoder stack ----
        mem_k = mem + pos
        tgt = jnp.zeros_like(qpos)
        for li, (sw, sb, ln1, cw, cb, ln2, w1, b1, w2, b2, ln3) in enumerate(dec_w):
            # self-attention (cross-batch exclusion only, no key padding)
            q_in = tgt + qpos
            sa = _mha(q_in, q_in, tgt, dec_sa_bias, sw, sb)
            y = _layer_norm(tgt + sa, ln1[0], ln1[1])
            # cross-attention over encoder memory (key padding + cross-batch)
            ca = _mha(y + qpos, mem_k, mem, dec_ca_bias, cw, cb)
            y = _layer_norm(y + ca, ln2[0], ln2[1])
            # FFN
            h = jnp.maximum(
                jnp.dot(y, w1[...], preferred_element_type=jnp.float32) + b1[...], 0.0)
            f = jnp.dot(h, w2[...], preferred_element_type=jnp.float32) + b2[...]
            y = _layer_norm(y + f, ln3[0], ln3[1])
            tgt = y
            hs_ref[li] = _layer_norm(y, lnf[0], lnf[1])   # fused final decoder norm
    return kernel


# ============================== plain-JAX glue =================================

def position_embedding_sine(mask, num_pos_feats):
    temperature = 10000.0
    scale = 2.0 * math.pi
    not_mask = jnp.logical_not(mask).astype(jnp.float32)
    y_embed = jnp.cumsum(not_mask, axis=1)
    x_embed = jnp.cumsum(not_mask, axis=2)
    eps = 1e-6
    y_embed = y_embed / (y_embed[:, -1:, :] + eps) * scale
    x_embed = x_embed / (x_embed[:, :, -1:] + eps) * scale

    dim_t = jnp.arange(num_pos_feats, dtype=jnp.float32)
    dim_t = temperature ** (2.0 * jnp.floor(dim_t / 2.0) / num_pos_feats)

    Bn, H, W = mask.shape
    pos_x = x_embed[:, :, :, None] / dim_t
    pos_y = y_embed[:, :, :, None] / dim_t
    pos_x = jnp.stack(
        (jnp.sin(pos_x[:, :, :, 0::2]), jnp.cos(pos_x[:, :, :, 1::2])), axis=4
    ).reshape(Bn, H, W, -1)
    pos_y = jnp.stack(
        (jnp.sin(pos_y[:, :, :, 0::2]), jnp.cos(pos_y[:, :, :, 1::2])), axis=4
    ).reshape(Bn, H, W, -1)
    pos = jnp.concatenate((pos_y, pos_x), axis=3).transpose(0, 3, 1, 2)
    return pos                                            # (B, 2*num_pos_feats, H, W)


def _im2col(img):
    Bn, C, H, W = img.shape
    Hp, Wp = H // PATCH, W // PATCH
    x = img.reshape(Bn, C, Hp, PATCH, Wp, PATCH)
    x = x.transpose(0, 2, 4, 1, 3, 5).reshape(Bn * Hp * Wp, C * PATCH * PATCH)
    return x, Hp, Wp


def _block_bias(q_batch, k_batch, key_pad=None):
    """Additive attention bias: 0 for same-batch (and non-padded) keys, -1e9 else."""
    ok = q_batch[:, None] == k_batch[None, :]
    if key_pad is not None:
        ok = ok & jnp.logical_not(key_pad)[None, :]
    return jnp.where(ok, 0.0, NEG_INF).astype(jnp.float32)


def _cost_estimate(Bn, L, args, out_elems):
    BL, BQ = Bn * L, Bn * NUM_QUERIES
    mm = lambda m, k, n: 2 * m * k * n
    def attn(mq, mk):
        proj = 2 * mm(mq, D_MODEL, D_MODEL) + 2 * mm(mk, D_MODEL, D_MODEL)
        sc_pv = 2 * NHEADS * mm(mq, DH, mk)
        return proj + sc_pv
    ffn = lambda m: mm(m, D_MODEL, DIM_FF) + mm(m, DIM_FF, D_MODEL)
    flops = mm(BL, 3 * PATCH * PATCH, D_MODEL)
    flops += NUM_ENC * (attn(BL, BL) + ffn(BL))
    flops += NUM_DEC * (attn(BQ, BQ) + attn(BQ, BL) + ffn(BQ))
    trans = NUM_ENC * NHEADS * BL * BL + NUM_DEC * NHEADS * (BQ * BQ + BQ * BL)
    bytes_accessed = sum(int(a.size) * 4 for a in args) + int(out_elems) * 4
    return pl.CostEstimate(flops=int(flops), transcendentals=int(trans),
                           bytes_accessed=int(bytes_accessed))


def detr_forward(img, mask, kparams):
    Bn = img.shape[0]

    patches, Hp, Wp = _im2col(img)                     # (B*L, Cin*P*P)
    L = Hp * Wp

    # downsampled mask (nearest), sine positional embedding, additive biases
    # NOTE: stride subsample == F.interpolate(nearest) here because IMG % PATCH == 0.
    dmask = mask[:, ::PATCH, ::PATCH]                  # (B, Hp, Wp) bool
    pos = position_embedding_sine(dmask, D_MODEL // 2) # (B, D, Hp, Wp)
    pos_t = pos.reshape(Bn, D_MODEL, L).transpose(0, 2, 1).reshape(Bn * L, D_MODEL)

    key_pad = dmask.reshape(Bn * L)
    tok_b = jnp.repeat(jnp.arange(Bn), L)
    qry_b = jnp.repeat(jnp.arange(Bn), NUM_QUERIES)
    enc_bias = _block_bias(tok_b, tok_b, key_pad)      # (B*L, B*L)
    dec_sa_bias = _block_bias(qry_b, qry_b)            # (B*NQ, B*NQ)
    dec_ca_bias = _block_bias(qry_b, tok_b, key_pad)   # (B*NQ, B*L)

    qpos = jnp.tile(kparams["query_embed"], (Bn, 1))   # (B*NQ, D)

    args = [patches, kparams["stem_w"], kparams["stem_b"], pos_t, qpos,
            enc_bias, dec_sa_bias, dec_ca_bias]
    for lw in kparams["enc"]:
        args += lw
    for lw in kparams["dec"]:
        args += lw
    args.append(kparams["dec_norm"])

    num_dec = len(kparams["dec"])
    out_shape = (
        jax.ShapeDtypeStruct((num_dec, Bn * NUM_QUERIES, D_MODEL), jnp.float32),
        jax.ShapeDtypeStruct((Bn * L, D_MODEL), jnp.float32),
    )
    out_elems = num_dec * Bn * NUM_QUERIES * D_MODEL + Bn * L * D_MODEL

    vmem = lambda: pl.BlockSpec(memory_space=pltpu.MemorySpace.VMEM)
    hs, mem = pl.pallas_call(
        _make_detr_kernel(len(kparams["enc"]), num_dec),
        out_shape=out_shape,
        in_specs=[vmem() for _ in args],
        out_specs=(vmem(), vmem()),
        cost_estimate=_cost_estimate(Bn, L, args, out_elems),
    )(*args)

    hs = hs.reshape(num_dec, Bn, NUM_QUERIES, D_MODEL)
    memory = mem.reshape(Bn, L, D_MODEL).transpose(0, 2, 1).reshape(Bn, D_MODEL, Hp, Wp)
    return hs, memory


# ================================ parameter init ===============================

def init_params(key):
    keys = iter(jax.random.split(key, 128))

    def dense(fi, fo):
        return {
            "w": jax.random.normal(next(keys), (fi, fo), jnp.float32) * 0.02,
            "b": jax.random.normal(next(keys), (fo,), jnp.float32) * 0.02,
        }

    def attn_p(d):
        return {"q": dense(d, d), "k": dense(d, d), "v": dense(d, d), "o": dense(d, d)}

    def ln_p(d):
        return {"g": jnp.ones((d,), jnp.float32), "b": jnp.zeros((d,), jnp.float32)}

    def ffn_p(d, dff):
        a, b = dense(d, dff), dense(dff, d)
        return {"w1": a["w"], "b1": a["b"], "w2": b["w"], "b2": b["b"]}

    return {
        "backbone_proj": dense(3 * PATCH * PATCH, NUM_CHANNELS),
        "input_proj": dense(NUM_CHANNELS, D_MODEL),
        "enc": [
            {"self_attn": attn_p(D_MODEL), "norm1": ln_p(D_MODEL),
             "ffn": ffn_p(D_MODEL, DIM_FF), "norm2": ln_p(D_MODEL)}
            for _ in range(NUM_ENC)
        ],
        "dec": [
            {"self_attn": attn_p(D_MODEL), "norm1": ln_p(D_MODEL),
             "cross_attn": attn_p(D_MODEL), "norm2": ln_p(D_MODEL),
             "ffn": ffn_p(D_MODEL, DIM_FF), "norm3": ln_p(D_MODEL)}
            for _ in range(NUM_DEC)
        ],
        "dec_norm": ln_p(D_MODEL),
        "query_embed": jax.random.normal(next(keys), (NUM_QUERIES, D_MODEL), jnp.float32),
    }


def prep_kernel_params(params):
    """Pack raw DETR-style params into the fused single-kernel layout.

    * backbone patch-embed + 1x1 input_proj folded into one (Cin*P*P, D) matmul.
    * attention weights stacked as (4, D, D) [Wq*1/sqrt(Dh), Wk, Wv, Wo] and
      biases as (4, 1, D) so each attention block is 2 kernel operands.
    * LayerNorm gamma/beta stacked as (2, 1, D).
    """
    def pack_attn(ap):
        w = jnp.stack([ap["q"]["w"] * ATTN_SCALE, ap["k"]["w"],
                       ap["v"]["w"], ap["o"]["w"]], axis=0)               # (4, D, D)
        b = jnp.stack([ap["q"]["b"].reshape(1, -1) * ATTN_SCALE,
                       ap["k"]["b"].reshape(1, -1),
                       ap["v"]["b"].reshape(1, -1),
                       ap["o"]["b"].reshape(1, -1)], axis=0)              # (4, 1, D)
        return [w, b]

    def pack_ln(lp):
        return jnp.stack([lp["g"].reshape(1, -1), lp["b"].reshape(1, -1)], axis=0)

    def pack_ffn(fp):
        return [fp["w1"], fp["b1"].reshape(1, -1), fp["w2"], fp["b2"].reshape(1, -1)]

    enc = [pack_attn(lp["self_attn"]) + [pack_ln(lp["norm1"])]
           + pack_ffn(lp["ffn"]) + [pack_ln(lp["norm2"])]
           for lp in params["enc"]]

    dec = [pack_attn(lp["self_attn"]) + [pack_ln(lp["norm1"])]
           + pack_attn(lp["cross_attn"]) + [pack_ln(lp["norm2"])]
           + pack_ffn(lp["ffn"]) + [pack_ln(lp["norm3"])]
           for lp in params["dec"]]

    # fold backbone patch-embed + input_proj (no nonlinearity in between)
    w1 = params["backbone_proj"]["w"]
    b1 = params["backbone_proj"]["b"]
    w2 = params["input_proj"]["w"]
    b2 = params["input_proj"]["b"]
    stem_w = w1 @ w2                                   # (Cin*P*P, D)
    stem_b = (b1 @ w2 + b2).reshape(1, -1)             # (1, D)

    return {
        "stem_w": stem_w, "stem_b": stem_b,
        "enc": enc, "dec": dec,
        "dec_norm": pack_ln(params["dec_norm"]),
        "query_embed": params["query_embed"],
    }


# ===================================== main ====================================

if __name__ == "__main__":
    key = jax.random.PRNGKey(0)
    k_img, k_param = jax.random.split(key)

    img = jax.random.normal(k_img, (B, 3, IMG, IMG), jnp.float32)
    # padding mask: True on padded pixels (image 0 fully valid, image 1 padded to 12x12)
    hh = jnp.arange(IMG)[None, :, None]
    ww = jnp.arange(IMG)[None, None, :]
    valid = jnp.array([IMG, 12])[:, None, None]
    mask = (hh >= valid) | (ww >= valid)                   # (B, IMG, IMG) bool

    params = init_params(k_param)
    kparams = prep_kernel_params(params)

    fwd = jax.jit(functools.partial(detr_forward, kparams=kparams))
    hs, memory = fwd(img, mask)
    jax.block_until_ready((hs, memory))

    assert hs.shape == (NUM_DEC, B, NUM_QUERIES, D_MODEL)
    assert memory.shape == (B, D_MODEL, IMG // PATCH, IMG // PATCH)
    assert bool(jnp.all(jnp.isfinite(hs))) and bool(jnp.all(jnp.isfinite(memory)))
    print("KERNEL_OK")
</pallas_src>

<mosaic_0001>
module attributes {stable_mosaic.version = 11 : i64} {
  func.func @kernel(%arg0: memref<32x48xf32, #tpu.memory_space<vmem>>, %arg1: memref<48x32xf32, #tpu.memory_space<vmem>>, %arg2: memref<1x32xf32, #tpu.memory_space<vmem>>, %arg3: memref<32x32xf32, #tpu.memory_space<vmem>>, %arg4: memref<16x32xf32, #tpu.memory_space<vmem>>, %arg5: memref<32x32xf32, #tpu.memory_space<vmem>>, %arg6: memref<16x16xf32, #tpu.memory_space<vmem>>, %arg7: memref<16x32xf32, #tpu.memory_space<vmem>>, %arg8: memref<4x32x32xf32, #tpu.memory_space<vmem>>, %arg9: memref<4x1x32xf32, #tpu.memory_space<vmem>>, %arg10: memref<2x1x32xf32, #tpu.memory_space<vmem>>, %arg11: memref<32x64xf32, #tpu.memory_space<vmem>>, %arg12: memref<1x64xf32, #tpu.memory_space<vmem>>, %arg13: memref<64x32xf32, #tpu.memory_space<vmem>>, %arg14: memref<1x32xf32, #tpu.memory_space<vmem>>, %arg15: memref<2x1x32xf32, #tpu.memory_space<vmem>>, %arg16: memref<4x32x32xf32, #tpu.memory_space<vmem>>, %arg17: memref<4x1x32xf32, #tpu.memory_space<vmem>>, %arg18: memref<2x1x32xf32, #tpu.memory_space<vmem>>, %arg19: memref<4x32x32xf32, #tpu.memory_space<vmem>>, %arg20: memref<4x1x32xf32, #tpu.memory_space<vmem>>, %arg21: memref<2x1x32xf32, #tpu.memory_space<vmem>>, %arg22: memref<32x64xf32, #tpu.memory_space<vmem>>, %arg23: memref<1x64xf32, #tpu.memory_space<vmem>>, %arg24: memref<64x32xf32, #tpu.memory_space<vmem>>, %arg25: memref<1x32xf32, #tpu.memory_space<vmem>>, %arg26: memref<2x1x32xf32, #tpu.memory_space<vmem>>, %arg27: memref<2x1x32xf32, #tpu.memory_space<vmem>>, %arg28: memref<1x16x32xf32, #tpu.memory_space<vmem>>, %arg29: memref<32x32xf32, #tpu.memory_space<vmem>>) attributes {dimension_semantics = [], scalar_prefetch = 0 : i64, scratch_operands = 0 : i64, tpu.core_type = #tpu.core_type<tc>} {
    %c0 = arith.constant 0 : index
    %c0_0 = arith.constant 0 : index
    %0 = vector.load %arg0[%c0, %c0_0] : memref<32x48xf32, #tpu.memory_space<vmem>>, vector<32x48xf32>
    %c0_1 = arith.constant 0 : index
    %c0_2 = arith.constant 0 : index
    %1 = vector.load %arg1[%c0_1, %c0_2] : memref<48x32xf32, #tpu.memory_space<vmem>>, vector<48x32xf32>
    %c0_3 = arith.constant 0 : index
    %c0_4 = arith.constant 0 : index
    %2 = vector.load %arg2[%c0_3, %c0_4] : memref<1x32xf32, #tpu.memory_space<vmem>>, vector<1x32xf32>
    %c0_5 = arith.constant 0 : index
    %c0_6 = arith.constant 0 : index
    %3 = vector.load %arg3[%c0_5, %c0_6] : memref<32x32xf32, #tpu.memory_space<vmem>>, vector<32x32xf32>
    %c0_7 = arith.constant 0 : index
    %c0_8 = arith.constant 0 : index
    %4 = vector.load %arg4[%c0_7, %c0_8] : memref<16x32xf32, #tpu.memory_space<vmem>>, vector<16x32xf32>
    %c0_9 = arith.constant 0 : index
    %c0_10 = arith.constant 0 : index
    %5 = vector.load %arg5[%c0_9, %c0_10] : memref<32x32xf32, #tpu.memory_space<vmem>>, vector<32x32xf32>
    %c0_11 = arith.constant 0 : index
    %c0_12 = arith.constant 0 : index
    %6 = vector.load %arg6[%c0_11, %c0_12] : memref<16x16xf32, #tpu.memory_space<vmem>>, vector<16x16xf32>
    %c0_13 = arith.constant 0 : index
    %c0_14 = arith.constant 0 : index
    %7 = vector.load %arg7[%c0_13, %c0_14] : memref<16x32xf32, #tpu.memory_space<vmem>>, vector<16x32xf32>
    %cst = arith.constant dense<0.000000e+00> : vector<32x32xf32>
    %8 = tpu.matmul %0, %1, %cst {dimension_numbers = #tpu.dot_dimension_numbers<[1], [0], [0], [1], [0, 0, 1, 1], [], []>} : vector<32x48xf32>, vector<48x32xf32>, vector<32x32xf32> -> vector<32x32xf32>
    %9 = vector.broadcast %2 : vector<1x32xf32> to vector<32x32xf32>
    %10 = arith.addf %8, %9 : vector<32x32xf32>
    %11 = arith.addf %10, %3 : vector<32x32xf32>
    %c0_15 = arith.constant 0 : index
    %c0_16 = arith.constant 0 : index
    %c0_17 = arith.constant 0 : index
    %12 = vector.load %arg8[%c0_15, %c0_16, %c0_17] : memref<4x32x32xf32, #tpu.memory_space<vmem>>, vector<1x32x32xf32>
    %13 = vector.shape_cast %12 : vector<1x32x32xf32> to vector<32x32xf32>
    %cst_18 = arith.constant dense<0.000000e+00> : vector<32x32xf32>
    %14 = tpu.matmul %11, %13, %cst_18 {dimension_numbers = #tpu.dot_dimension_numbers<[1], [0], [0], [1], [0, 0, 1, 1], [], []>} : vector<32x32xf32>, vector<32x32xf32>, vector<32x32xf32> -> vector<32x32xf32>
    %c0_19 = arith.constant 0 : index
    %c0_20 = arith.constant 0 : index
    %c0_21 = arith.constant 0 : index
    %15 = vector.load %arg9[%c0_19, %c0_20, %c0_21] : memref<4x1x32xf32, #tpu.memory_space<vmem>>, vector<1x1x32xf32>
    %16 = vector.shape_cast %15 : vector<1x1x32xf32> to vector<1x32xf32>
    %17 = vector.broadcast %16 : vector<1x32xf32> to vector<32x32xf32>
    %18 = arith.addf %14, %17 : vector<32x32xf32>
    %c1 = arith.constant 1 : index
    %c0_22 = arith.constant 0 : index
    %c0_23 = arith.constant 0 : index
    %19 = vector.load %arg8[%c1, %c0_22, %c0_23] : memref<4x32x32xf32, #tpu.memory_space<vmem>>, vector<1x32x32xf32>
    %20 = vector.shape_cast %19 : vector<1x32x32xf32> to vector<32x32xf32>
    %cst_24 = arith.constant dense<0.000000e+00> : vector<32x32xf32>
    %21 = tpu.matmul %11, %20, %cst_24 {dimension_numbers = #tpu.dot_dimension_numbers<[1], [0], [0], [1], [0, 0, 1, 1], [], []>} : vector<32x32xf32>, vector<32x32xf32>, vector<32x32xf32> -> vector<32x32xf32>
    %c1_25 = arith.constant 1 : index
    %c0_26 = arith.constant 0 : index
    %c0_27 = arith.constant 0 : index
    %22 = vector.load %arg9[%c1_25, %c0_26, %c0_27] : memref<4x1x32xf32, #tpu.memory_space<vmem>>, vector<1x1x32xf32>
    %23 = vector.shape_cast %22 : vector<1x1x32xf32> to vector<1x32xf32>
    %24 = vector.broadcast %23 : vector<1x32xf32> to vector<32x32xf32>
    %25 = arith.addf %21, %24 : vector<32x32xf32>
    %c2 = arith.constant 2 : index
    %c0_28 = arith.constant 0 : index
    %c0_29 = arith.constant 0 : index
    %26 = vector.load %arg8[%c2, %c0_28, %c0_29] : memref<4x32x32xf32, #tpu.memory_space<vmem>>, vector<1x32x32xf32>
    %27 = vector.shape_cast %26 : vector<1x32x32xf32> to vector<32x32xf32>
    %cst_30 = arith.constant dense<0.000000e+00> : vector<32x32xf32>
    %28 = tpu.matmul %10, %27, %cst_30 {dimension_numbers = #tpu.dot_dimension_numbers<[1], [0], [0], [1], [0, 0, 1, 1], [], []>} : vector<32x32xf32>, vector<32x32xf32>, vector<32x32xf32> -> vector<32x32xf32>
    %c2_31 = arith.constant 2 : index
    %c0_32 = arith.constant 0 : index
    %c0_33 = arith.constant 0 : index
    %29 = vector.load %arg9[%c2_31, %c0_32, %c0_33] : memref<4x1x32xf32, #tpu.memory_space<vmem>>, vector<1x1x32xf32>
    %30 = vector.shape_cast %29 : vector<1x1x32xf32> to vector<1x32xf32>
    %31 = vector.broadcast %30 : vector<1x32xf32> to vector<32x32xf32>
    %32 = arith.addf %28, %31 : vector<32x32xf32>
    %33 = vector.extract_strided_slice %18 {offsets = [0, 0], sizes = [32, 8], strides = [1, 1]} : vector<32x32xf32> to vector<32x8xf32>
    %34 = vector.extract_strided_slice %25 {offsets = [0, 0], sizes = [32, 8], strides = [1, 1]} : vector<32x32xf32> to vector<32x8xf32>
    %cst_34 = arith.constant dense<0.000000e+00> : vector<32x32xf32>
    %35 = tpu.matmul %33, %34, %cst_34 {dimension_numbers = #tpu.dot_dimension_numbers<[1], [1], [0], [0], [0, 0, 1, 0], [], []>} : vector<32x8xf32>, vector<32x8xf32>, vector<32x32xf32> -> vector<32x32xf32>
    %36 = arith.addf %35, %5 : vector<32x32xf32>
    %cst_35 = arith.constant dense<0xFF800000> : vector<32xf32>
    %37 = vector.multi_reduction <maximumf>, %36, %cst_35 [1] : vector<32x32xf32> to vector<32xf32>
    %38 = vector.shape_cast %37 : vector<32xf32> to vector<32x1xf32>
    %39 = vector.broadcast %38 : vector<32x1xf32> to vector<32x32xf32>
    %40 = arith.subf %36, %39 : vector<32x32xf32>
    %41 = math.exp %40 : vector<32x32xf32>
    %cst_36 = arith.constant dense<0.000000e+00> : vector<32xf32>
    %42 = vector.multi_reduction <add>, %41, %cst_36 [1] : vector<32x32xf32> to vector<32xf32>
    %43 = vector.shape_cast %42 : vector<32xf32> to vector<32x1xf32>
    %44 = tpu.reciprocal %43 {approx = true} : vector<32x1xf32> -> vector<32x1xf32>
    %45 = vector.broadcast %44 : vector<32x1xf32> to vector<32x32xf32>
    %46 = arith.mulf %41, %45 : vector<32x32xf32>
    %47 = vector.extract_strided_slice %32 {offsets = [0, 0], sizes = [32, 8], strides = [1, 1]} : vector<32x32xf32> to vector<32x8xf32>
    %cst_37 = arith.constant dense<0.000000e+00> : vector<32x8xf32>
    %48 = tpu.matmul %46, %47, %cst_37 {dimension_numbers = #tpu.dot_dimension_numbers<[1], [0], [0], [1], [0, 0, 1, 1], [], []>} : vector<32x32xf32>, vector<32x8xf32>, vector<32x8xf32> -> vector<32x8xf32>
    %49 = vector.extract_strided_slice %18 {offsets = [0, 8], sizes = [32, 8], strides = [1, 1]} : vector<32x32xf32> to vector<32x8xf32>
    %50 = vector.extract_strided_slice %25 {offsets = [0, 8], sizes = [32, 8], strides = [1, 1]} : vector<32x32xf32> to vector<32x8xf32>
    %cst_38 = arith.constant dense<0.000000e+00> : vector<32x32xf32>
    %51 = tpu.matmul %49, %50, %cst_38 {dimension_numbers = #tpu.dot_dimension_numbers<[1], [1], [0], [0], [0, 0, 1, 0], [], []>} : vector<32x8xf32>, vector<32x8xf32>, vector<32x32xf32> -> vector<32x32xf32>
    %52 = arith.addf %51, %5 : vector<32x32xf32>
    %cst_39 = arith.constant dense<0xFF800000> : vector<32xf32>
    %53 = vector.multi_reduction <maximumf>, %52, %cst_39 [1] : vector<32x32xf32> to vector<32xf32>
    %54 = vector.shape_cast %53 : vector<32xf32> to vector<32x1xf32>
    %55 = vector.broadcast %54 : vector<32x1xf32> to vector<32x32xf32>
    %56 = arith.subf %52, %55 : vector<32x32xf32>
    %57 = math.exp %56 : vector<32x32xf32>
    %cst_40 = arith.constant dense<0.000000e+00> : vector<32xf32>
    %58 = vector.multi_reduction <add>, %57, %cst_40 [1] : vector<32x32xf32> to vector<32xf32>
    %59 = vector.shape_cast %58 : vector<32xf32> to vector<32x1xf32>
    %60 = tpu.reciprocal %59 {approx = true} : vector<32x1xf32> -> vector<32x1xf32>
    %61 = vector.broadcast %60 : vector<32x1xf32> to vector<32x32xf32>
    %62 = arith.mulf %57, %61 : vector<32x32xf32>
    %63 = vector.extract_strided_slice %32 {offsets = [0, 8], sizes = [32, 8], strides = [1, 1]} : vector<32x32xf32> to vector<32x8xf32>
    %cst_41 = arith.constant dense<0.000000e+00> : vector<32x8xf32>
    %64 = tpu.matmul %62, %63, %cst_41 {dimension_numbers = #tpu.dot_dimension_numbers<[1], [0], [0], [1], [0, 0, 1, 1], [], []>} : vector<32x32xf32>, vector<32x8xf32>, vector<32x8xf32> -> vector<32x8xf32>
    %65 = vector.extract_strided_slice %18 {offsets = [0, 16], sizes = [32, 8], strides = [1, 1]} : vector<32x32xf32> to vector<32x8xf32>
    %66 = vector.extract_strided_slice %25 {offsets = [0, 16], sizes = [32, 8], strides = [1, 1]} : vector<32x32xf32> to vector<32x8xf32>
    %cst_42 = arith.constant dense<0.000000e+00> : vector<32x32xf32>
    %67 = tpu.matmul %65, %66, %cst_42 {dimension_numbers = #tpu.dot_dimension_numbers<[1], [1], [0], [0], [0, 0, 1, 0], [], []>} : vector<32x8xf32>, vector<32x8xf32>, vector<32x32xf32> -> vector<32x32xf32>
    %68 = arith.addf %67, %5 : vector<32x32xf32>
    %cst_43 = arith.constant dense<0xFF800000> : vector<32xf32>
    %69 = vector.multi_reduction <maximumf>, %68, %cst_43 [1] : vector<32x32xf32> to vector<32xf32>
    %70 = vector.shape_cast %69 : vector<32xf32> to vector<32x1xf32>
    %71 = vector.broadcast %70 : vector<32x1xf32> to vector<32x32xf32>
    %72 = arith.subf %68, %71 : vector<32x32xf32>
    %73 = math.exp %72 : vector<32x32xf32>
    %cst_44 = arith.constant dense<0.000000e+00> : vector<32xf32>
    %74 = vector.multi_reduction <add>, %73, %cst_44 [1] : vector<32x32xf32> to vector<32xf32>
    %75 = vector.shape_cast %74 : vector<32xf32> to vector<32x1xf32>
    %76 = tpu.reciprocal %75 {approx = true} : vector<32x1xf32> -> vector<32x1xf32>
    %77 = vector.broadcast %76 : vector<32x1xf32> to vector<32x32xf32>
    %78 = arith.mulf %73, %77 : vector<32x32xf32>
    %79 = vector.extract_strided_slice %32 {offsets = [0, 16], sizes = [32, 8], strides = [1, 1]} : vector<32x32xf32> to vector<32x8xf32>
    %cst_45 = arith.constant dense<0.000000e+00> : vector<32x8xf32>
    %80 = tpu.matmul %78, %79, %cst_45 {dimension_numbers = #tpu.dot_dimension_numbers<[1], [0], [0], [1], [0, 0, 1, 1], [], []>} : vector<32x32xf32>, vector<32x8xf32>, vector<32x8xf32> -> vector<32x8xf32>
    %81 = vector.extract_strided_slice %18 {offsets = [0, 24], sizes = [32, 8], strides = [1, 1]} : vector<32x32xf32> to vector<32x8xf32>
    %82 = vector.extract_strided_slice %25 {offsets = [0, 24], sizes = [32, 8], strides = [1, 1]} : vector<32x32xf32> to vector<32x8xf32>
    %cst_46 = arith.constant dense<0.000000e+00> : vector<32x32xf32>
    %83 = tpu.matmul %81, %82, %cst_46 {dimension_numbers = #tpu.dot_dimension_numbers<[1], [1], [0], [0], [0, 0, 1, 0], [], []>} : vector<32x8xf32>, vector<32x8xf32>, vector<32x32xf32> -> vector<32x32xf32>
    %84 = arith.addf %83, %5 : vector<32x32xf32>
    %cst_47 = arith.constant dense<0xFF800000> : vector<32xf32>
    %85 = vector.multi_reduction <maximumf>, %84, %cst_47 [1] : vector<32x32xf32> to vector<32xf32>
    %86 = vector.shape_cast %85 : vector<32xf32> to vector<32x1xf32>
    %87 = vector.broadcast %86 : vector<32x1xf32> to vector<32x32xf32>
    %88 = arith.subf %84, %87 : vector<32x32xf32>
    %89 = math.exp %88 : vector<32x32xf32>
    %cst_48 = arith.constant dense<0.000000e+00> : vector<32xf32>
    %90 = vector.multi_reduction <add>, %89, %cst_48 [1] : vector<32x32xf32> to vector<32xf32>
    %91 = vector.shape_cast %90 : vector<32xf32> to vector<32x1xf32>
    %92 = tpu.reciprocal %91 {approx = true} : vector<32x1xf32> -> vector<32x1xf32>
    %93 = vector.broadcast %92 : vector<32x1xf32> to vector<32x32xf32>
    %94 = arith.mulf %89, %93 : vector<32x32xf32>
    %95 = vector.extract_strided_slice %32 {offsets = [0, 24], sizes = [32, 8], strides = [1, 1]} : vector<32x32xf32> to vector<32x8xf32>
    %cst_49 = arith.constant dense<0.000000e+00> : vector<32x8xf32>
    %96 = tpu.matmul %94, %95, %cst_49 {dimension_numbers = #tpu.dot_dimension_numbers<[1], [0], [0], [1], [0, 0, 1, 1], [], []>} : vector<32x32xf32>, vector<32x8xf32>, vector<32x8xf32> -> vector<32x8xf32>
    %97 = tpu.concatenate %48, %64, %80, %96 in 1 : vector<32x8xf32>, vector<32x8xf32>, vector<32x8xf32>, vector<32x8xf32> -> vector<32x32xf32>
    %c3 = arith.constant 3 : index
    %c0_50 = arith.constant 0 : index
    %c0_51 = arith.constant 0 : index
    %98 = vector.load %arg8[%c3, %c0_50, %c0_51] : memref<4x32x32xf32, #tpu.memory_space<vmem>>, vector<1x32x32xf32>
    %99 = vector.shape_cast %98 : vector<1x32x32xf32> to vector<32x32xf32>
    %cst_52 = arith.constant dense<0.000000e+00> : vector<32x32xf32>
    %100 = tpu.matmul %97, %99, %cst_52 {dimension_numbers = #tpu.dot_dimension_numbers<[1], [0], [0], [1], [0, 0, 1, 1], [], []>} : vector<32x32xf32>, vector<32x32xf32>, vector<32x32xf32> -> vector<32x32xf32>
    %c3_53 = arith.constant 3 : index
    %c0_54 = arith.constant 0 : index
    %c0_55 = arith.constant 0 : index
    %101 = vector.load %arg9[%c3_53, %c0_54, %c0_55] : memref<4x1x32xf32, #tpu.memory_space<vmem>>, vector<1x1x32xf32>
    %102 = vector.shape_cast %101 : vector<1x1x32xf32> to vector<1x32xf32>
    %103 = vector.broadcast %102 : vector<1x32xf32> to vector<32x32xf32>
    %104 = arith.addf %100, %103 : vector<32x32xf32>
    %105 = arith.addf %10, %104 : vector<32x32xf32>
    %c0_56 = arith.constant 0 : index
    %c0_57 = arith.constant 0 : index
    %c0_58 = arith.constant 0 : index
    %106 = vector.load %arg10[%c0_56, %c0_57, %c0_58] : memref<2x1x32xf32, #tpu.memory_space<vmem>>, vector<1x1x32xf32>
    %107 = vector.shape_cast %106 : vector<1x1x32xf32> to vector<1x32xf32>
    %c1_59 = arith.constant 1 : index
    %c0_60 = arith.constant 0 : index
    %c0_61 = arith.constant 0 : index
    %108 = vector.load %arg10[%c1_59, %c0_60, %c0_61] : memref<2x1x32xf32, #tpu.memory_space<vmem>>, vector<1x1x32xf32>
    %109 = vector.shape_cast %108 : vector<1x1x32xf32> to vector<1x32xf32>
    %cst_62 = arith.constant dense<0.000000e+00> : vector<32xf32>
    %110 = vector.multi_reduction <add>, %105, %cst_62 [1] : vector<32x32xf32> to vector<32xf32>
    %111 = vector.shape_cast %110 : vector<32xf32> to vector<32x1xf32>
    %cst_63 = arith.constant 3.200000e+01 : f32
    %112 = vector.broadcast %cst_63 : f32 to vector<32x1xf32>
    %113 = arith.divf %111, %112 : vector<32x1xf32>
    %114 = vector.broadcast %113 : vector<32x1xf32> to vector<32x32xf32>
    %115 = arith.subf %105, %114 : vector<32x32xf32>
    %116 = arith.mulf %115, %115 : vector<32x32xf32>
    %cst_64 = arith.constant dense<0.000000e+00> : vector<32xf32>
    %117 = vector.multi_reduction <add>, %116, %cst_64 [1] : vector<32x32xf32> to vector<32xf32>
    %118 = vector.shape_cast %117 : vector<32xf32> to vector<32x1xf32>
    %cst_65 = arith.constant 3.200000e+01 : f32
    %119 = vector.broadcast %cst_65 : f32 to vector<32x1xf32>
    %120 = arith.divf %118, %119 : vector<32x1xf32>
    %121 = vector.broadcast %113 : vector<32x1xf32> to vector<32x32xf32>
    %122 = arith.subf %105, %121 : vector<32x32xf32>
    %cst_66 = arith.constant 9.99999974E-6 : f32
    %123 = vector.broadcast %cst_66 : f32 to vector<32x1xf32>
    %124 = arith.addf %120, %123 : vector<32x1xf32>
    %125 = math.rsqrt %124 : vector<32x1xf32>
    %126 = vector.broadcast %125 : vector<32x1xf32> to vector<32x32xf32>
    %127 = arith.mulf %122, %126 : vector<32x32xf32>
    %128 = vector.broadcast %107 : vector<1x32xf32> to vector<32x32xf32>
    %129 = arith.mulf %127, %128 : vector<32x32xf32>
    %130 = vector.broadcast %109 : vector<1x32xf32> to vector<32x32xf32>
    %131 = arith.addf %129, %130 : vector<32x32xf32>
    %c0_67 = arith.constant 0 : index
    %c0_68 = arith.constant 0 : index
    %132 = vector.load %arg11[%c0_67, %c0_68] : memref<32x64xf32, #tpu.memory_space<vmem>>, vector<32x64xf32>
    %cst_69 = arith.constant dense<0.000000e+00> : vector<32x64xf32>
    %133 = tpu.matmul %131, %132, %cst_69 {dimension_numbers = #tpu.dot_dimension_numbers<[1], [0], [0], [1], [0, 0, 1, 1], [], []>} : vector<32x32xf32>, vector<32x64xf32>, vector<32x64xf32> -> vector<32x64xf32>
    %c0_70 = arith.constant 0 : index
    %c0_71 = arith.constant 0 : index
    %134 = vector.load %arg12[%c0_70, %c0_71] : memref<1x64xf32, #tpu.memory_space<vmem>>, vector<1x64xf32>
    %135 = vector.broadcast %134 : vector<1x64xf32> to vector<32x64xf32>
    %136 = arith.addf %133, %135 : vector<32x64xf32>
    %cst_72 = arith.constant 0.000000e+00 : f32
    %137 = vector.broadcast %cst_72 : f32 to vector<32x64xf32>
    %138 = arith.maximumf %136, %137 : vector<32x64xf32>
    %c0_73 = arith.constant 0 : index
    %c0_74 = arith.constant 0 : index
    %139 = vector.load %arg13[%c0_73, %c0_74] : memref<64x32xf32, #tpu.memory_space<vmem>>, vector<64x32xf32>
    %cst_75 = arith.constant dense<0.000000e+00> : vector<32x32xf32>
    %140 = tpu.matmul %138, %139, %cst_75 {dimension_numbers = #tpu.dot_dimension_numbers<[1], [0], [0], [1], [0, 0, 1, 1], [], []>} : vector<32x64xf32>, vector<64x32xf32>, vector<32x32xf32> -> vector<32x32xf32>
    %c0_76 = arith.constant 0 : index
    %c0_77 = arith.constant 0 : index
    %141 = vector.load %arg14[%c0_76, %c0_77] : memref<1x32xf32, #tpu.memory_space<vmem>>, vector<1x32xf32>
    %142 = vector.broadcast %141 : vector<1x32xf32> to vector<32x32xf32>
    %143 = arith.addf %140, %142 : vector<32x32xf32>
    %144 = arith.addf %131, %143 : vector<32x32xf32>
    %c0_78 = arith.constant 0 : index
    %c0_79 = arith.constant 0 : index
    %c0_80 = arith.constant 0 : index
    %145 = vector.load %arg15[%c0_78, %c0_79, %c0_80] : memref<2x1x32xf32, #tpu.memory_space<vmem>>, vector<1x1x32xf32>
    %146 = vector.shape_cast %145 : vector<1x1x32xf32> to vector<1x32xf32>
    %c1_81 = arith.constant 1 : index
    %c0_82 = arith.constant 0 : index
    %c0_83 = arith.constant 0 : index
    %147 = vector.load %arg15[%c1_81, %c0_82, %c0_83] : memref<2x1x32xf32, #tpu.memory_space<vmem>>, vector<1x1x32xf32>
    %148 = vector.shape_cast %147 : vector<1x1x32xf32> to vector<1x32xf32>
    %cst_84 = arith.constant dense<0.000000e+00> : vector<32xf32>
    %149 = vector.multi_reduction <add>, %144, %cst_84 [1] : vector<32x32xf32> to vector<32xf32>
    %150 = vector.shape_cast %149 : vector<32xf32> to vector<32x1xf32>
    %cst_85 = arith.constant 3.200000e+01 : f32
    %151 = vector.broadcast %cst_85 : f32 to vector<32x1xf32>
    %152 = arith.divf %150, %151 : vector<32x1xf32>
    %153 = vector.broadcast %152 : vector<32x1xf32> to vector<32x32xf32>
    %154 = arith.subf %144, %153 : vector<32x32xf32>
    %155 = arith.mulf %154, %154 : vector<32x32xf32>
    %cst_86 = arith.constant dense<0.000000e+00> : vector<32xf32>
    %156 = vector.multi_reduction <add>, %155, %cst_86 [1] : vector<32x32xf32> to vector<32xf32>
    %157 = vector.shape_cast %156 : vector<32xf32> to vector<32x1xf32>
    %cst_87 = arith.constant 3.200000e+01 : f32
    %158 = vector.broadcast %cst_87 : f32 to vector<32x1xf32>
    %159 = arith.divf %157, %158 : vector<32x1xf32>
    %160 = vector.broadcast %152 : vector<32x1xf32> to vector<32x32xf32>
    %161 = arith.subf %144, %160 : vector<32x32xf32>
    %cst_88 = arith.constant 9.99999974E-6 : f32
    %162 = vector.broadcast %cst_88 : f32 to vector<32x1xf32>
    %163 = arith.addf %159, %162 : vector<32x1xf32>
    %164 = math.rsqrt %163 : vector<32x1xf32>
    %165 = vector.broadcast %164 : vector<32x1xf32> to vector<32x32xf32>
    %166 = arith.mulf %161, %165 : vector<32x32xf32>
    %167 = vector.broadcast %146 : vector<1x32xf32> to vector<32x32xf32>
    %168 = arith.mulf %166, %167 : vector<32x32xf32>
    %169 = vector.broadcast %148 : vector<1x32xf32> to vector<32x32xf32>
    %170 = arith.addf %168, %169 : vector<32x32xf32>
    %c0_89 = arith.constant 0 : index
    %c0_90 = arith.constant 0 : index
    %171 = vector.load %arg29[%c0_89, %c0_90] : memref<32x32xf32, #tpu.memory_space<vmem>>, vector<32x32xf32>
    tpu.vector_store %arg29[%c0_89, %c0_90], %170 {strides = array<i32>} : memref<32x32xf32, #tpu.memory_space<vmem>>, vector<32x32xf32>,
    %172 = arith.addf %170, %3 : vector<32x32xf32>
    %cst_91 = arith.constant 0.000000e+00 : f32
    %173 = vector.broadcast %cst_91 : f32 to vector<16x32xf32>
    %174 = arith.addf %173, %4 : vector<16x32xf32>
    %c0_92 = arith.constant 0 : index
    %c0_93 = arith.constant 0 : index
    %c0_94 = arith.constant 0 : index
    %175 = vector.load %arg16[%c0_92, %c0_93, %c0_94] : memref<4x32x32xf32, #tpu.memory_space<vmem>>, vector<1x32x32xf32>
    %176 = vector.shape_cast %175 : vector<1x32x32xf32> to vector<32x32xf32>
    %cst_95 = arith.constant dense<0.000000e+00> : vector<16x32xf32>
    %177 = tpu.matmul %174, %176, %cst_95 {dimension_numbers = #tpu.dot_dimension_numbers<[1], [0], [0], [1], [0, 0, 1, 1], [], []>} : vector<16x32xf32>, vector<32x32xf32>, vector<16x32xf32> -> vector<16x32xf32>
    %c0_96 = arith.constant 0 : index
    %c0_97 = arith.constant 0 : index
    %c0_98 = arith.constant 0 : index
    %178 = vector.load %arg17[%c0_96, %c0_97, %c0_98] : memref<4x1x32xf32, #tpu.memory_space<vmem>>, vector<1x1x32xf32>
    %179 = vector.shape_cast %178 : vector<1x1x32xf32> to vector<1x32xf32>
    %180 = vector.broadcast %179 : vector<1x32xf32> to vector<16x32xf32>
    %181 = arith.addf %177, %180 : vector<16x32xf32>
    %c1_99 = arith.constant 1 : index
    %c0_100 = arith.constant 0 : index
    %c0_101 = arith.constant 0 : index
    %182 = vector.load %arg16[%c1_99, %c0_100, %c0_101] : memref<4x32x32xf32, #tpu.memory_space<vmem>>, vector<1x32x32xf32>
    %183 = vector.shape_cast %182 : vector<1x32x32xf32> to vector<32x32xf32>
    %cst_102 = arith.constant dense<0.000000e+00> : vector<16x32xf32>
    %184 = tpu.matmul %174, %183, %cst_102 {dimension_numbers = #tpu.dot_dimension_numbers<[1], [0], [0], [1], [0, 0, 1, 1], [], []>} : vector<16x32xf32>, vector<32x32xf32>, vector<16x32xf32> -> vector<16x32xf32>
    %c1_103 = arith.constant 1 : index
    %c0_104 = arith.constant 0 : index
    %c0_105 = arith.constant 0 : index
    %185 = vector.load %arg17[%c1_103, %c0_104, %c0_105] : memref<4x1x32xf32, #tpu.memory_space<vmem>>, vector<1x1x32xf32>
    %186 = vector.shape_cast %185 : vector<1x1x32xf32> to vector<1x32xf32>
    %187 = vector.broadcast %186 : vector<1x32xf32> to vector<16x32xf32>
    %188 = arith.addf %184, %187 : vector<16x32xf32>
    %c2_106 = arith.constant 2 : index
    %c0_107 = arith.constant 0 : index
    %c0_108 = arith.constant 0 : index
    %189 = vector.load %arg16[%c2_106, %c0_107, %c0_108] : memref<4x32x32xf32, #tpu.memory_space<vmem>>, vector<1x32x32xf32>
    %190 = vector.shape_cast %189 : vector<1x32x32xf32> to vector<32x32xf32>
    %cst_109 = arith.constant dense<0.000000e+00> : vector<16x32xf32>
    %191 = tpu.matmul %173, %190, %cst_109 {dimension_numbers = #tpu.dot_dimension_numbers<[1], [0], [0], [1], [0, 0, 1, 1], [], []>} : vector<16x32xf32>, vector<32x32xf32>, vector<16x32xf32> -> vector<16x32xf32>
    %c2_110 = arith.constant 2 : index
    %c0_111 = arith.constant 0 : index
    %c0_112 = arith.constant 0 : index
    %192 = vector.load %arg17[%c2_110, %c0_111, %c0_112] : memref<4x1x32xf32, #tpu.memory_space<vmem>>, vector<1x1x32xf32>
    %193 = vector.shape_cast %192 : vector<1x1x32xf32> to vector<1x32xf32>
    %194 = vector.broadcast %193 : vector<1x32xf32> to vector<16x32xf32>
    %195 = arith.addf %191, %194 : vector<16x32xf32>
    %196 = vector.extract_strided_slice %181 {offsets = [0, 0], sizes = [16, 8], strides = [1, 1]} : vector<16x32xf32> to vector<16x8xf32>
    %197 = vector.extract_strided_slice %188 {offsets = [0, 0], sizes = [16, 8], strides = [1, 1]} : vector<16x32xf32> to vector<16x8xf32>
    %cst_113 = arith.constant dense<0.000000e+00> : vector<16x16xf32>
    %198 = tpu.matmul %196, %197, %cst_113 {dimension_numbers = #tpu.dot_dimension_numbers<[1], [1], [0], [0], [0, 0, 1, 0], [], []>} : vector<16x8xf32>, vector<16x8xf32>, vector<16x16xf32> -> vector<16x16xf32>
    %199 = arith.addf %198, %6 : vector<16x16xf32>
    %cst_114 = arith.constant dense<0xFF800000> : vector<16xf32>
    %200 = vector.multi_reduction <maximumf>, %199, %cst_114 [1] : vector<16x16xf32> to vector<16xf32>
    %201 = vector.shape_cast %200 : vector<16xf32> to vector<16x1xf32>
    %202 = vector.broadcast %201 : vector<16x1xf32> to vector<16x16xf32>
    %203 = arith.subf %199, %202 : vector<16x16xf32>
    %204 = math.exp %203 : vector<16x16xf32>
    %cst_115 = arith.constant dense<0.000000e+00> : vector<16xf32>
    %205 = vector.multi_reduction <add>, %204, %cst_115 [1] : vector<16x16xf32> to vector<16xf32>
    %206 = vector.shape_cast %205 : vector<16xf32> to vector<16x1xf32>
    %207 = tpu.reciprocal %206 {approx = true} : vector<16x1xf32> -> vector<16x1xf32>
    %208 = vector.broadcast %207 : vector<16x1xf32> to vector<16x16xf32>
    %209 = arith.mulf %204, %208 : vector<16x16xf32>
    %210 = vector.extract_strided_slice %195 {offsets = [0, 0], sizes = [16, 8], strides = [1, 1]} : vector<16x32xf32> to vector<16x8xf32>
    %cst_116 = arith.constant dense<0.000000e+00> : vector<16x8xf32>
    %211 = tpu.matmul %209, %210, %cst_116 {dimension_numbers = #tpu.dot_dimension_numbers<[1], [0], [0], [1], [0, 0, 1, 1], [], []>} : vector<16x16xf32>, vector<16x8xf32>, vector<16x8xf32> -> vector<16x8xf32>
    %212 = vector.extract_strided_slice %181 {offsets = [0, 8], sizes = [16, 8], strides = [1, 1]} : vector<16x32xf32> to vector<16x8xf32>
    %213 = vector.extract_strided_slice %188 {offsets = [0, 8], sizes = [16, 8], strides = [1, 1]} : vector<16x32xf32> to vector<16x8xf32>
    %cst_117 = arith.constant dense<0.000000e+00> : vector<16x16xf32>
    %214 = tpu.matmul %212, %213, %cst_117 {dimension_numbers = #tpu.dot_dimension_numbers<[1], [1], [0], [0], [0, 0, 1, 0], [], []>} : vector<16x8xf32>, vector<16x8xf32>, vector<16x16xf32> -> vector<16x16xf32>
    %215 = arith.addf %214, %6 : vector<16x16xf32>
    %cst_118 = arith.constant dense<0xFF800000> : vector<16xf32>
    %216 = vector.multi_reduction <maximumf>, %215, %cst_118 [1] : vector<16x16xf32> to vector<16xf32>
    %217 = vector.shape_cast %216 : vector<16xf32> to vector<16x1xf32>
    %218 = vector.broadcast %217 : vector<16x1xf32> to vector<16x16xf32>
    %219 = arith.subf %215, %218 : vector<16x16xf32>
    %220 = math.exp %219 : vector<16x16xf32>
    %cst_119 = arith.constant dense<0.000000e+00> : vector<16xf32>
    %221 = vector.multi_reduction <add>, %220, %cst_119 [1] : vector<16x16xf32> to vector<16xf32>
    %222 = vector.shape_cast %221 : vector<16xf32> to vector<16x1xf32>
    %223 = tpu.reciprocal %222 {approx = true} : vector<16x1xf32> -> vector<16x1xf32>
    %224 = vector.broadcast %223 : vector<16x1xf32> to vector<16x16xf32>
    %225 = arith.mulf %220, %224 : vector<16x16xf32>
    %226 = vector.extract_strided_slice %195 {offsets = [0, 8], sizes = [16, 8], strides = [1, 1]} : vector<16x32xf32> to vector<16x8xf32>
    %cst_120 = arith.constant dense<0.000000e+00> : vector<16x8xf32>
    %227 = tpu.matmul %225, %226, %cst_120 {dimension_numbers = #tpu.dot_dimension_numbers<[1], [0], [0], [1], [0, 0, 1, 1], [], []>} : vector<16x16xf32>, vector<16x8xf32>, vector<16x8xf32> -> vector<16x8xf32>
    %228 = vector.extract_strided_slice %181 {offsets = [0, 16], sizes = [16, 8], strides = [1, 1]} : vector<16x32xf32> to vector<16x8xf32>
    %229 = vector.extract_strided_slice %188 {offsets = [0, 16], sizes = [16, 8], strides = [1, 1]} : vector<16x32xf32> to vector<16x8xf32>
    %cst_121 = arith.constant dense<0.000000e+00> : vector<16x16xf32>
    %230 = tpu.matmul %228, %229, %cst_121 {dimension_numbers = #tpu.dot_dimension_numbers<[1], [1], [0], [0], [0, 0, 1, 0], [], []>} : vector<16x8xf32>, vector<16x8xf32>, vector<16x16xf32> -> vector<16x16xf32>
    %231 = arith.addf %230, %6 : vector<16x16xf32>
    %cst_122 = arith.constant dense<0xFF800000> : vector<16xf32>
    %232 = vector.multi_reduction <maximumf>, %231, %cst_122 [1] : vector<16x16xf32> to vector<16xf32>
    %233 = vector.shape_cast %232 : vector<16xf32> to vector<16x1xf32>
    %234 = vector.broadcast %233 : vector<16x1xf32> to vector<16x16xf32>
    %235 = arith.subf %231, %234 : vector<16x16xf32>
    %236 = math.exp %235 : vector<16x16xf32>
    %cst_123 = arith.constant dense<0.000000e+00> : vector<16xf32>
    %237 = vector.multi_reduction <add>, %236, %cst_123 [1] : vector<16x16xf32> to vector<16xf32>
    %238 = vector.shape_cast %237 : vector<16xf32> to vector<16x1xf32>
    %239 = tpu.reciprocal %238 {approx = true} : vector<16x1xf32> -> vector<16x1xf32>
    %240 = vector.broadcast %239 : vector<16x1xf32> to vector<16x16xf32>
    %241 = arith.mulf %236, %240 : vector<16x16xf32>
    %242 = vector.extract_strided_slice %195 {offsets = [0, 16], sizes = [16, 8], strides = [1, 1]} : vector<16x32xf32> to vector<16x8xf32>
    %cst_124 = arith.constant dense<0.000000e+00> : vector<16x8xf32>
    %243 = tpu.matmul %241, %242, %cst_124 {dimension_numbers = #tpu.dot_dimension_numbers<[1], [0], [0], [1], [0, 0, 1, 1], [], []>} : vector<16x16xf32>, vector<16x8xf32>, vector<16x8xf32> -> vector<16x8xf32>
    %244 = vector.extract_strided_slice %181 {offsets = [0, 24], sizes = [16, 8], strides = [1, 1]} : vector<16x32xf32> to vector<16x8xf32>
    %245 = vector.extract_strided_slice %188 {offsets = [0, 24], sizes = [16, 8], strides = [1, 1]} : vector<16x32xf32> to vector<16x8xf32>
    %cst_125 = arith.constant dense<0.000000e+00> : vector<16x16xf32>
    %246 = tpu.matmul %244, %245, %cst_125 {dimension_numbers = #tpu.dot_dimension_numbers<[1], [1], [0], [0], [0, 0, 1, 0], [], []>} : vector<16x8xf32>, vector<16x8xf32>, vector<16x16xf32> -> vector<16x16xf32>
    %247 = arith.addf %246, %6 : vector<16x16xf32>
    %cst_126 = arith.constant dense<0xFF800000> : vector<16xf32>
    %248 = vector.multi_reduction <maximumf>, %247, %cst_126 [1] : vector<16x16xf32> to vector<16xf32>
    %249 = vector.shape_cast %248 : vector<16xf32> to vector<16x1xf32>
    %250 = vector.broadcast %249 : vector<16x1xf32> to vector<16x16xf32>
    %251 = arith.subf %247, %250 : vector<16x16xf32>
    %252 = math.exp %251 : vector<16x16xf32>
    %cst_127 = arith.constant dense<0.000000e+00> : vector<16xf32>
    %253 = vector.multi_reduction <add>, %252, %cst_127 [1] : vector<16x16xf32> to vector<16xf32>
    %254 = vector.shape_cast %253 : vector<16xf32> to vector<16x1xf32>
    %255 = tpu.reciprocal %254 {approx = true} : vector<16x1xf32> -> vector<16x1xf32>
    %256 = vector.broadcast %255 : vector<16x1xf32> to vector<16x16xf32>
    %257 = arith.mulf %252, %256 : vector<16x16xf32>
    %258 = vector.extract_strided_slice %195 {offsets = [0, 24], sizes = [16, 8], strides = [1, 1]} : vector<16x32xf32> to vector<16x8xf32>
    %cst_128 = arith.constant dense<0.000000e+00> : vector<16x8xf32>
    %259 = tpu.matmul %257, %258, %cst_128 {dimension_numbers = #tpu.dot_dimension_numbers<[1], [0], [0], [1], [0, 0, 1, 1], [], []>} : vector<16x16xf32>, vector<16x8xf32>, vector<16x8xf32> -> vector<16x8xf32>
    %260 = tpu.concatenate %211, %227, %243, %259 in 1 : vector<16x8xf32>, vector<16x8xf32>, vector<16x8xf32>, vector<16x8xf32> -> vector<16x32xf32>
    %c3_129 = arith.constant 3 : index
    %c0_130 = arith.constant 0 : index
    %c0_131 = arith.constant 0 : index
    %261 = vector.load %arg16[%c3_129, %c0_130, %c0_131] : memref<4x32x32xf32, #tpu.memory_space<vmem>>, vector<1x32x32xf32>
    %262 = vector.shape_cast %261 : vector<1x32x32xf32> to vector<32x32xf32>
    %cst_132 = arith.constant dense<0.000000e+00> : vector<16x32xf32>
    %263 = tpu.matmul %260, %262, %cst_132 {dimension_numbers = #tpu.dot_dimension_numbers<[1], [0], [0], [1], [0, 0, 1, 1], [], []>} : vector<16x32xf32>, vector<32x32xf32>, vector<16x32xf32> -> vector<16x32xf32>
    %c3_133 = arith.constant 3 : index
    %c0_134 = arith.constant 0 : index
    %c0_135 = arith.constant 0 : index
    %264 = vector.load %arg17[%c3_133, %c0_134, %c0_135] : memref<4x1x32xf32, #tpu.memory_space<vmem>>, vector<1x1x32xf32>
    %265 = vector.shape_cast %264 : vector<1x1x32xf32> to vector<1x32xf32>
    %266 = vector.broadcast %265 : vector<1x32xf32> to vector<16x32xf32>
    %267 = arith.addf %263, %266 : vector<16x32xf32>
    %268 = arith.addf %173, %267 : vector<16x32xf32>
    %c0_136 = arith.constant 0 : index
    %c0_137 = arith.constant 0 : index
    %c0_138 = arith.constant 0 : index
    %269 = vector.load %arg18[%c0_136, %c0_137, %c0_138] : memref<2x1x32xf32, #tpu.memory_space<vmem>>, vector<1x1x32xf32>
    %270 = vector.shape_cast %269 : vector<1x1x32xf32> to vector<1x32xf32>
    %c1_139 = arith.constant 1 : index
    %c0_140 = arith.constant 0 : index
    %c0_141 = arith.constant 0 : index
    %271 = vector.load %arg18[%c1_139, %c0_140, %c0_141] : memref<2x1x32xf32, #tpu.memory_space<vmem>>, vector<1x1x32xf32>
    %272 = vector.shape_cast %271 : vector<1x1x32xf32> to vector<1x32xf32>
    %cst_142 = arith.constant dense<0.000000e+00> : vector<16xf32>
    %273 = vector.multi_reduction <add>, %268, %cst_142 [1] : vector<16x32xf32> to vector<16xf32>
    %274 = vector.shape_cast %273 : vector<16xf32> to vector<16x1xf32>
    %cst_143 = arith.constant 3.200000e+01 : f32
    %275 = vector.broadcast %cst_143 : f32 to vector<16x1xf32>
    %276 = arith.divf %274, %275 : vector<16x1xf32>
    %277 = vector.broadcast %276 : vector<16x1xf32> to vector<16x32xf32>
    %278 = arith.subf %268, %277 : vector<16x32xf32>
    %279 = arith.mulf %278, %278 : vector<16x32xf32>
    %cst_144 = arith.constant dense<0.000000e+00> : vector<16xf32>
    %280 = vector.multi_reduction <add>, %279, %cst_144 [1] : vector<16x32xf32> to vector<16xf32>
    %281 = vector.shape_cast %280 : vector<16xf32> to vector<16x1xf32>
    %cst_145 = arith.constant 3.200000e+01 : f32
    %282 = vector.broadcast %cst_145 : f32 to vector<16x1xf32>
    %283 = arith.divf %281, %282 : vector<16x1xf32>
    %284 = vector.broadcast %276 : vector<16x1xf32> to vector<16x32xf32>
    %285 = arith.subf %268, %284 : vector<16x32xf32>
    %cst_146 = arith.constant 9.99999974E-6 : f32
    %286 = vector.broadcast %cst_146 : f32 to vector<16x1xf32>
    %287 = arith.addf %283, %286 : vector<16x1xf32>
    %288 = math.rsqrt %287 : vector<16x1xf32>
    %289 = vector.broadcast %288 : vector<16x1xf32> to vector<16x32xf32>
    %290 = arith.mulf %285, %289 : vector<16x32xf32>
    %291 = vector.broadcast %270 : vector<1x32xf32> to vector<16x32xf32>
    %292 = arith.mulf %290, %291 : vector<16x32xf32>
    %293 = vector.broadcast %272 : vector<1x32xf32> to vector<16x32xf32>
    %294 = arith.addf %292, %293 : vector<16x32xf32>
    %295 = arith.addf %294, %4 : vector<16x32xf32>
    %c0_147 = arith.constant 0 : index
    %c0_148 = arith.constant 0 : index
    %c0_149 = arith.constant 0 : index
    %296 = vector.load %arg19[%c0_147, %c0_148, %c0_149] : memref<4x32x32xf32, #tpu.memory_space<vmem>>, vector<1x32x32xf32>
    %297 = vector.shape_cast %296 : vector<1x32x32xf32> to vector<32x32xf32>
    %cst_150 = arith.constant dense<0.000000e+00> : vector<16x32xf32>
    %298 = tpu.matmul %295, %297, %cst_150 {dimension_numbers = #tpu.dot_dimension_numbers<[1], [0], [0], [1], [0, 0, 1, 1], [], []>} : vector<16x32xf32>, vector<32x32xf32>, vector<16x32xf32> -> vector<16x32xf32>
    %c0_151 = arith.constant 0 : index
    %c0_152 = arith.constant 0 : index
    %c0_153 = arith.constant 0 : index
    %299 = vector.load %arg20[%c0_151, %c0_152, %c0_153] : memref<4x1x32xf32, #tpu.memory_space<vmem>>, vector<1x1x32xf32>
    %300 = vector.shape_cast %299 : vector<1x1x32xf32> to vector<1x32xf32>
    %301 = vector.broadcast %300 : vector<1x32xf32> to vector<16x32xf32>
    %302 = arith.addf %298, %301 : vector<16x32xf32>
    %c1_154 = arith.constant 1 : index
    %c0_155 = arith.constant 0 : index
    %c0_156 = arith.constant 0 : index
    %303 = vector.load %arg19[%c1_154, %c0_155, %c0_156] : memref<4x32x32xf32, #tpu.memory_space<vmem>>, vector<1x32x32xf32>
    %304 = vector.shape_cast %303 : vector<1x32x32xf32> to vector<32x32xf32>
    %cst_157 = arith.constant dense<0.000000e+00> : vector<32x32xf32>
    %305 = tpu.matmul %172, %304, %cst_157 {dimension_numbers = #tpu.dot_dimension_numbers<[1], [0], [0], [1], [0, 0, 1, 1], [], []>} : vector<32x32xf32>, vector<32x32xf32>, vector<32x32xf32> -> vector<32x32xf32>
    %c1_158 = arith.constant 1 : index
    %c0_159 = arith.constant 0 : index
    %c0_160 = arith.constant 0 : index
    %306 = vector.load %arg20[%c1_158, %c0_159, %c0_160] : memref<4x1x32xf32, #tpu.memory_space<vmem>>, vector<1x1x32xf32>
    %307 = vector.shape_cast %306 : vector<1x1x32xf32> to vector<1x32xf32>
    %308 = vector.broadcast %307 : vector<1x32xf32> to vector<32x32xf32>
    %309 = arith.addf %305, %308 : vector<32x32xf32>
    %c2_161 = arith.constant 2 : index
    %c0_162 = arith.constant 0 : index
    %c0_163 = arith.constant 0 : index
    %310 = vector.load %arg19[%c2_161, %c0_162, %c0_163] : memref<4x32x32xf32, #tpu.memory_space<vmem>>, vector<1x32x32xf32>
    %311 = vector.shape_cast %310 : vector<1x32x32xf32> to vector<32x32xf32>
    %cst_164 = arith.constant dense<0.000000e+00> : vector<32x32xf32>
    %312 = tpu.matmul %170, %311, %cst_164 {dimension_numbers = #tpu.dot_dimension_numbers<[1], [0], [0], [1], [0, 0, 1, 1], [], []>} : vector<32x32xf32>, vector<32x32xf32>, vector<32x32xf32> -> vector<32x32xf32>
    %c2_165 = arith.constant 2 : index
    %c0_166 = arith.constant 0 : index
    %c0_167 = arith.constant 0 : index
    %313 = vector.load %arg20[%c2_165, %c0_166, %c0_167] : memref<4x1x32xf32, #tpu.memory_space<vmem>>, vector<1x1x32xf32>
    %314 = vector.shape_cast %313 : vector<1x1x32xf32> to vector<1x32xf32>
    %315 = vector.broadcast %314 : vector<1x32xf32> to vector<32x32xf32>
    %316 = arith.addf %312, %315 : vector<32x32xf32>
    %317 = vector.extract_strided_slice %302 {offsets = [0, 0], sizes = [16, 8], strides = [1, 1]} : vector<16x32xf32> to vector<16x8xf32>
    %318 = vector.extract_strided_slice %309 {offsets = [0, 0], sizes = [32, 8], strides = [1, 1]} : vector<32x32xf32> to vector<32x8xf32>
    %cst_168 = arith.constant dense<0.000000e+00> : vector<16x32xf32>
    %319 = tpu.matmul %317, %318, %cst_168 {dimension_numbers = #tpu.dot_dimension_numbers<[1], [1], [0], [0], [0, 0, 1, 0], [], []>} : vector<16x8xf32>, vector<32x8xf32>, vector<16x32xf32> -> vector<16x32xf32>
    %320 = arith.addf %319, %7 : vector<16x32xf32>
    %cst_169 = arith.constant dense<0xFF800000> : vector<16xf32>
    %321 = vector.multi_reduction <maximumf>, %320, %cst_169 [1] : vector<16x32xf32> to vector<16xf32>
    %322 = vector.shape_cast %321 : vector<16xf32> to vector<16x1xf32>
    %323 = vector.broadcast %322 : vector<16x1xf32> to vector<16x32xf32>
    %324 = arith.subf %320, %323 : vector<16x32xf32>
    %325 = math.exp %324 : vector<16x32xf32>
    %cst_170 = arith.constant dense<0.000000e+00> : vector<16xf32>
    %326 = vector.multi_reduction <add>, %325, %cst_170 [1] : vector<16x32xf32> to vector<16xf32>
    %327 = vector.shape_cast %326 : vector<16xf32> to vector<16x1xf32>
    %328 = tpu.reciprocal %327 {approx = true} : vector<16x1xf32> -> vector<16x1xf32>
    %329 = vector.broadcast %328 : vector<16x1xf32> to vector<16x32xf32>
    %330 = arith.mulf %325, %329 : vector<16x32xf32>
    %331 = vector.extract_strided_slice %316 {offsets = [0, 0], sizes = [32, 8], strides = [1, 1]} : vector<32x32xf32> to vector<32x8xf32>
    %cst_171 = arith.constant dense<0.000000e+00> : vector<16x8xf32>
    %332 = tpu.matmul %330, %331, %cst_171 {dimension_numbers = #tpu.dot_dimension_numbers<[1], [0], [0], [1], [0, 0, 1, 1], [], []>} : vector<16x32xf32>, vector<32x8xf32>, vector<16x8xf32> -> vector<16x8xf32>
    %333 = vector.extract_strided_slice %302 {offsets = [0, 8], sizes = [16, 8], strides = [1, 1]} : vector<16x32xf32> to vector<16x8xf32>
    %334 = vector.extract_strided_slice %309 {offsets = [0, 8], sizes = [32, 8], strides = [1, 1]} : vector<32x32xf32> to vector<32x8xf32>
    %cst_172 = arith.constant dense<0.000000e+00> : vector<16x32xf32>
    %335 = tpu.matmul %333, %334, %cst_172 {dimension_numbers = #tpu.dot_dimension_numbers<[1], [1], [0], [0], [0, 0, 1, 0], [], []>} : vector<16x8xf32>, vector<32x8xf32>, vector<16x32xf32> -> vector<16x32xf32>
    %336 = arith.addf %335, %7 : vector<16x32xf32>
    %cst_173 = arith.constant dense<0xFF800000> : vector<16xf32>
    %337 = vector.multi_reduction <maximumf>, %336, %cst_173 [1] : vector<16x32xf32> to vector<16xf32>
    %338 = vector.shape_cast %337 : vector<16xf32> to vector<16x1xf32>
    %339 = vector.broadcast %338 : vector<16x1xf32> to vector<16x32xf32>
    %340 = arith.subf %336, %339 : vector<16x32xf32>
    %341 = math.exp %340 : vector<16x32xf32>
    %cst_174 = arith.constant dense<0.000000e+00> : vector<16xf32>
    %342 = vector.multi_reduction <add>, %341, %cst_174 [1] : vector<16x32xf32> to vector<16xf32>
    %343 = vector.shape_cast %342 : vector<16xf32> to vector<16x1xf32>
    %344 = tpu.reciprocal %343 {approx = true} : vector<16x1xf32> -> vector<16x1xf32>
    %345 = vector.broadcast %344 : vector<16x1xf32> to vector<16x32xf32>
    %346 = arith.mulf %341, %345 : vector<16x32xf32>
    %347 = vector.extract_strided_slice %316 {offsets = [0, 8], sizes = [32, 8], strides = [1, 1]} : vector<32x32xf32> to vector<32x8xf32>
    %cst_175 = arith.constant dense<0.000000e+00> : vector<16x8xf32>
    %348 = tpu.matmul %346, %347, %cst_175 {dimension_numbers = #tpu.dot_dimension_numbers<[1], [0], [0], [1], [0, 0, 1, 1], [], []>} : vector<16x32xf32>, vector<32x8xf32>, vector<16x8xf32> -> vector<16x8xf32>
    %349 = vector.extract_strided_slice %302 {offsets = [0, 16], sizes = [16, 8], strides = [1, 1]} : vector<16x32xf32> to vector<16x8xf32>
    %350 = vector.extract_strided_slice %309 {offsets = [0, 16], sizes = [32, 8], strides = [1, 1]} : vector<32x32xf32> to vector<32x8xf32>
    %cst_176 = arith.constant dense<0.000000e+00> : vector<16x32xf32>
    %351 = tpu.matmul %349, %350, %cst_176 {dimension_numbers = #tpu.dot_dimension_numbers<[1], [1], [0], [0], [0, 0, 1, 0], [], []>} : vector<16x8xf32>, vector<32x8xf32>, vector<16x32xf32> -> vector<16x32xf32>
    %352 = arith.addf %351, %7 : vector<16x32xf32>
    %cst_177 = arith.constant dense<0xFF800000> : vector<16xf32>
    %353 = vector.multi_reduction <maximumf>, %352, %cst_177 [1] : vector<16x32xf32> to vector<16xf32>
    %354 = vector.shape_cast %353 : vector<16xf32> to vector<16x1xf32>
    %355 = vector.broadcast %354 : vector<16x1xf32> to vector<16x32xf32>
    %356 = arith.subf %352, %355 : vector<16x32xf32>
    %357 = math.exp %356 : vector<16x32xf32>
    %cst_178 = arith.constant dense<0.000000e+00> : vector<16xf32>
    %358 = vector.multi_reduction <add>, %357, %cst_178 [1] : vector<16x32xf32> to vector<16xf32>
    %359 = vector.shape_cast %358 : vector<16xf32> to vector<16x1xf32>
    %360 = tpu.reciprocal %359 {approx = true} : vector<16x1xf32> -> vector<16x1xf32>
    %361 = vector.broadcast %360 : vector<16x1xf32> to vector<16x32xf32>
    %362 = arith.mulf %357, %361 : vector<16x32xf32>
    %363 = vector.extract_strided_slice %316 {offsets = [0, 16], sizes = [32, 8], strides = [1, 1]} : vector<32x32xf32> to vector<32x8xf32>
    %cst_179 = arith.constant dense<0.000000e+00> : vector<16x8xf32>
    %364 = tpu.matmul %362, %363, %cst_179 {dimension_numbers = #tpu.dot_dimension_numbers<[1], [0], [0], [1], [0, 0, 1, 1], [], []>} : vector<16x32xf32>, vector<32x8xf32>, vector<16x8xf32> -> vector<16x8xf32>
    %365 = vector.extract_strided_slice %302 {offsets = [0, 24], sizes = [16, 8], strides = [1, 1]} : vector<16x32xf32> to vector<16x8xf32>
    %366 = vector.extract_strided_slice %309 {offsets = [0, 24], sizes = [32, 8], strides = [1, 1]} : vector<32x32xf32> to vector<32x8xf32>
    %cst_180 = arith.constant dense<0.000000e+00> : vector<16x32xf32>
    %367 = tpu.matmul %365, %366, %cst_180 {dimension_numbers = #tpu.dot_dimension_numbers<[1], [1], [0], [0], [0, 0, 1, 0], [], []>} : vector<16x8xf32>, vector<32x8xf32>, vector<16x32xf32> -> vector<16x32xf32>
    %368 = arith.addf %367, %7 : vector<16x32xf32>
    %cst_181 = arith.constant dense<0xFF800000> : vector<16xf32>
    %369 = vector.multi_reduction <maximumf>, %368, %cst_181 [1] : vector<16x32xf32> to vector<16xf32>
    %370 = vector.shape_cast %369 : vector<16xf32> to vector<16x1xf32>
    %371 = vector.broadcast %370 : vector<16x1xf32> to vector<16x32xf32>
    %372 = arith.subf %368, %371 : vector<16x32xf32>
    %373 = math.exp %372 : vector<16x32xf32>
    %cst_182 = arith.constant dense<0.000000e+00> : vector<16xf32>
    %374 = vector.multi_reduction <add>, %373, %cst_182 [1] : vector<16x32xf32> to vector<16xf32>
    %375 = vector.shape_cast %374 : vector<16xf32> to vector<16x1xf32>
    %376 = tpu.reciprocal %375 {approx = true} : vector<16x1xf32> -> vector<16x1xf32>
    %377 = vector.broadcast %376 : vector<16x1xf32> to vector<16x32xf32>
    %378 = arith.mulf %373, %377 : vector<16x32xf32>
    %379 = vector.extract_strided_slice %316 {offsets = [0, 24], sizes = [32, 8], strides = [1, 1]} : vector<32x32xf32> to vector<32x8xf32>
    %cst_183 = arith.constant dense<0.000000e+00> : vector<16x8xf32>
    %380 = tpu.matmul %378, %379, %cst_183 {dimension_numbers = #tpu.dot_dimension_numbers<[1], [0], [0], [1], [0, 0, 1, 1], [], []>} : vector<16x32xf32>, vector<32x8xf32>, vector<16x8xf32> -> vector<16x8xf32>
    %381 = tpu.concatenate %332, %348, %364, %380 in 1 : vector<16x8xf32>, vector<16x8xf32>, vector<16x8xf32>, vector<16x8xf32> -> vector<16x32xf32>
    %c3_184 = arith.constant 3 : index
    %c0_185 = arith.constant 0 : index
    %c0_186 = arith.constant 0 : index
    %382 = vector.load %arg19[%c3_184, %c0_185, %c0_186] : memref<4x32x32xf32, #tpu.memory_space<vmem>>, vector<1x32x32xf32>
    %383 = vector.shape_cast %382 : vector<1x32x32xf32> to vector<32x32xf32>
    %cst_187 = arith.constant dense<0.000000e+00> : vector<16x32xf32>
    %384 = tpu.matmul %381, %383, %cst_187 {dimension_numbers = #tpu.dot_dimension_numbers<[1], [0], [0], [1], [0, 0, 1, 1], [], []>} : vector<16x32xf32>, vector<32x32xf32>, vector<16x32xf32> -> vector<16x32xf32>
    %c3_188 = arith.constant 3 : index
    %c0_189 = arith.constant 0 : index
    %c0_190 = arith.constant 0 : index
    %385 = vector.load %arg20[%c3_188, %c0_189, %c0_190] : memref<4x1x32xf32, #tpu.memory_space<vmem>>, vector<1x1x32xf32>
    %386 = vector.shape_cast %385 : vector<1x1x32xf32> to vector<1x32xf32>
    %387 = vector.broadcast %386 : vector<1x32xf32> to vector<16x32xf32>
    %388 = arith.addf %384, %387 : vector<16x32xf32>
    %389 = arith.addf %294, %388 : vector<16x32xf32>
    %c0_191 = arith.constant 0 : index
    %c0_192 = arith.constant 0 : index
    %c0_193 = arith.constant 0 : index
    %390 = vector.load %arg21[%c0_191, %c0_192, %c0_193] : memref<2x1x32xf32, #tpu.memory_space<vmem>>, vector<1x1x32xf32>
    %391 = vector.shape_cast %390 : vector<1x1x32xf32> to vector<1x32xf32>
    %c1_194 = arith.constant 1 : index
    %c0_195 = arith.constant 0 : index
    %c0_196 = arith.constant 0 : index
    %392 = vector.load %arg21[%c1_194, %c0_195, %c0_196] : memref<2x1x32xf32, #tpu.memory_space<vmem>>, vector<1x1x32xf32>
    %393 = vector.shape_cast %392 : vector<1x1x32xf32> to vector<1x32xf32>
    %cst_197 = arith.constant dense<0.000000e+00> : vector<16xf32>
    %394 = vector.multi_reduction <add>, %389, %cst_197 [1] : vector<16x32xf32> to vector<16xf32>
    %395 = vector.shape_cast %394 : vector<16xf32> to vector<16x1xf32>
    %cst_198 = arith.constant 3.200000e+01 : f32
    %396 = vector.broadcast %cst_198 : f32 to vector<16x1xf32>
    %397 = arith.divf %395, %396 : vector<16x1xf32>
    %398 = vector.broadcast %397 : vector<16x1xf32> to vector<16x32xf32>
    %399 = arith.subf %389, %398 : vector<16x32xf32>
    %400 = arith.mulf %399, %399 : vector<16x32xf32>
    %cst_199 = arith.constant dense<0.000000e+00> : vector<16xf32>
    %401 = vector.multi_reduction <add>, %400, %cst_199 [1] : vector<16x32xf32> to vector<16xf32>
    %402 = vector.shape_cast %401 : vector<16xf32> to vector<16x1xf32>
    %cst_200 = arith.constant 3.200000e+01 : f32
    %403 = vector.broadcast %cst_200 : f32 to vector<16x1xf32>
    %404 = arith.divf %402, %403 : vector<16x1xf32>
    %405 = vector.broadcast %397 : vector<16x1xf32> to vector<16x32xf32>
    %406 = arith.subf %389, %405 : vector<16x32xf32>
    %cst_201 = arith.constant 9.99999974E-6 : f32
    %407 = vector.broadcast %cst_201 : f32 to vector<16x1xf32>
    %408 = arith.addf %404, %407 : vector<16x1xf32>
    %409 = math.rsqrt %408 : vector<16x1xf32>
    %410 = vector.broadcast %409 : vector<16x1xf32> to vector<16x32xf32>
    %411 = arith.mulf %406, %410 : vector<16x32xf32>
    %412 = vector.broadcast %391 : vector<1x32xf32> to vector<16x32xf32>
    %413 = arith.mulf %411, %412 : vector<16x32xf32>
    %414 = vector.broadcast %393 : vector<1x32xf32> to vector<16x32xf32>
    %415 = arith.addf %413, %414 : vector<16x32xf32>
    %c0_202 = arith.constant 0 : index
    %c0_203 = arith.constant 0 : index
    %416 = vector.load %arg22[%c0_202, %c0_203] : memref<32x64xf32, #tpu.memory_space<vmem>>, vector<32x64xf32>
    %cst_204 = arith.constant dense<0.000000e+00> : vector<16x64xf32>
    %417 = tpu.matmul %415, %416, %cst_204 {dimension_numbers = #tpu.dot_dimension_numbers<[1], [0], [0], [1], [0, 0, 1, 1], [], []>} : vector<16x32xf32>, vector<32x64xf32>, vector<16x64xf32> -> vector<16x64xf32>
    %c0_205 = arith.constant 0 : index
    %c0_206 = arith.constant 0 : index
    %418 = vector.load %arg23[%c0_205, %c0_206] : memref<1x64xf32, #tpu.memory_space<vmem>>, vector<1x64xf32>
    %419 = vector.broadcast %418 : vector<1x64xf32> to vector<16x64xf32>
    %420 = arith.addf %417, %419 : vector<16x64xf32>
    %cst_207 = arith.constant 0.000000e+00 : f32
    %421 = vector.broadcast %cst_207 : f32 to vector<16x64xf32>
    %422 = arith.maximumf %420, %421 : vector<16x64xf32>
    %c0_208 = arith.constant 0 : index
    %c0_209 = arith.constant 0 : index
    %423 = vector.load %arg24[%c0_208, %c0_209] : memref<64x32xf32, #tpu.memory_space<vmem>>, vector<64x32xf32>
    %cst_210 = arith.constant dense<0.000000e+00> : vector<16x32xf32>
    %424 = tpu.matmul %422, %423, %cst_210 {dimension_numbers = #tpu.dot_dimension_numbers<[1], [0], [0], [1], [0, 0, 1, 1], [], []>} : vector<16x64xf32>, vector<64x32xf32>, vector<16x32xf32> -> vector<16x32xf32>
    %c0_211 = arith.constant 0 : index
    %c0_212 = arith.constant 0 : index
    %425 = vector.load %arg25[%c0_211, %c0_212] : memref<1x32xf32, #tpu.memory_space<vmem>>, vector<1x32xf32>
    %426 = vector.broadcast %425 : vector<1x32xf32> to vector<16x32xf32>
    %427 = arith.addf %424, %426 : vector<16x32xf32>
    %428 = arith.addf %415, %427 : vector<16x32xf32>
    %c0_213 = arith.constant 0 : index
    %c0_214 = arith.constant 0 : index
    %c0_215 = arith.constant 0 : index
    %429 = vector.load %arg26[%c0_213, %c0_214, %c0_215] : memref<2x1x32xf32, #tpu.memory_space<vmem>>, vector<1x1x32xf32>
    %430 = vector.shape_cast %429 : vector<1x1x32xf32> to vector<1x32xf32>
    %c1_216 = arith.constant 1 : index
    %c0_217 = arith.constant 0 : index
    %c0_218 = arith.constant 0 : index
    %431 = vector.load %arg26[%c1_216, %c0_217, %c0_218] : memref<2x1x32xf32, #tpu.memory_space<vmem>>, vector<1x1x32xf32>
    %432 = vector.shape_cast %431 : vector<1x1x32xf32> to vector<1x32xf32>
    %cst_219 = arith.constant dense<0.000000e+00> : vector<16xf32>
    %433 = vector.multi_reduction <add>, %428, %cst_219 [1] : vector<16x32xf32> to vector<16xf32>
    %434 = vector.shape_cast %433 : vector<16xf32> to vector<16x1xf32>
    %cst_220 = arith.constant 3.200000e+01 : f32
    %435 = vector.broadcast %cst_220 : f32 to vector<16x1xf32>
    %436 = arith.divf %434, %435 : vector<16x1xf32>
    %437 = vector.broadcast %436 : vector<16x1xf32> to vector<16x32xf32>
    %438 = arith.subf %428, %437 : vector<16x32xf32>
    %439 = arith.mulf %438, %438 : vector<16x32xf32>
    %cst_221 = arith.constant dense<0.000000e+00> : vector<16xf32>
    %440 = vector.multi_reduction <add>, %439, %cst_221 [1] : vector<16x32xf32> to vector<16xf32>
    %441 = vector.shape_cast %440 : vector<16xf32> to vector<16x1xf32>
    %cst_222 = arith.constant 3.200000e+01 : f32
    %442 = vector.broadcast %cst_222 : f32 to vector<16x1xf32>
    %443 = arith.divf %441, %442 : vector<16x1xf32>
    %444 = vector.broadcast %436 : vector<16x1xf32> to vector<16x32xf32>
    %445 = arith.subf %428, %444 : vector<16x32xf32>
    %cst_223 = arith.constant 9.99999974E-6 : f32
    %446 = vector.broadcast %cst_223 : f32 to vector<16x1xf32>
    %447 = arith.addf %443, %446 : vector<16x1xf32>
    %448 = math.rsqrt %447 : vector<16x1xf32>
    %449 = vector.broadcast %448 : vector<16x1xf32> to vector<16x32xf32>
    %450 = arith.mulf %445, %449 : vector<16x32xf32>
    %451 = vector.broadcast %430 : vector<1x32xf32> to vector<16x32xf32>
    %452 = arith.mulf %450, %451 : vector<16x32xf32>
    %453 = vector.broadcast %432 : vector<1x32xf32> to vector<16x32xf32>
    %454 = arith.addf %452, %453 : vector<16x32xf32>
    %c0_224 = arith.constant 0 : index
    %c0_225 = arith.constant 0 : index
    %c0_226 = arith.constant 0 : index
    %455 = vector.load %arg27[%c0_224, %c0_225, %c0_226] : memref<2x1x32xf32, #tpu.memory_space<vmem>>, vector<1x1x32xf32>
    %456 = vector.shape_cast %455 : vector<1x1x32xf32> to vector<1x32xf32>
    %c1_227 = arith.constant 1 : index
    %c0_228 = arith.constant 0 : index
    %c0_229 = arith.constant 0 : index
    %457 = vector.load %arg27[%c1_227, %c0_228, %c0_229] : memref<2x1x32xf32, #tpu.memory_space<vmem>>, vector<1x1x32xf32>
    %458 = vector.shape_cast %457 : vector<1x1x32xf32> to vector<1x32xf32>
    %cst_230 = arith.constant dense<0.000000e+00> : vector<16xf32>
    %459 = vector.multi_reduction <add>, %454, %cst_230 [1] : vector<16x32xf32> to vector<16xf32>
    %460 = vector.shape_cast %459 : vector<16xf32> to vector<16x1xf32>
    %cst_231 = arith.constant 3.200000e+01 : f32
    %461 = vector.broadcast %cst_231 : f32 to vector<16x1xf32>
    %462 = arith.divf %460, %461 : vector<16x1xf32>
    %463 = vector.broadcast %462 : vector<16x1xf32> to vector<16x32xf32>
    %464 = arith.subf %454, %463 : vector<16x32xf32>
    %465 = arith.mulf %464, %464 : vector<16x32xf32>
    %cst_232 = arith.constant dense<0.000000e+00> : vector<16xf32>
    %466 = vector.multi_reduction <add>, %465, %cst_232 [1] : vector<16x32xf32> to vector<16xf32>
    %467 = vector.shape_cast %466 : vector<16xf32> to vector<16x1xf32>
    %cst_233 = arith.constant 3.200000e+01 : f32
    %468 = vector.broadcast %cst_233 : f32 to vector<16x1xf32>
    %469 = arith.divf %467, %468 : vector<16x1xf32>
    %470 = vector.broadcast %462 : vector<16x1xf32> to vector<16x32xf32>
    %471 = arith.subf %454, %470 : vector<16x32xf32>
    %cst_234 = arith.constant 9.99999974E-6 : f32
    %472 = vector.broadcast %cst_234 : f32 to vector<16x1xf32>
    %473 = arith.addf %469, %472 : vector<16x1xf32>
    %474 = math.rsqrt %473 : vector<16x1xf32>
    %475 = vector.broadcast %474 : vector<16x1xf32> to vector<16x32xf32>
    %476 = arith.mulf %471, %475 : vector<16x32xf32>
    %477 = vector.broadcast %456 : vector<1x32xf32> to vector<16x32xf32>
    %478 = arith.mulf %476, %477 : vector<16x32xf32>
    %479 = vector.broadcast %458 : vector<1x32xf32> to vector<16x32xf32>
    %480 = arith.addf %478, %479 : vector<16x32xf32>
    %c0_235 = arith.constant 0 : index
    %c0_236 = arith.constant 0 : index
    %c0_237 = arith.constant 0 : index
    %481 = vector.load %arg28[%c0_235, %c0_236, %c0_237] : memref<1x16x32xf32, #tpu.memory_space<vmem>>, vector<1x16x32xf32>
    %482 = vector.shape_cast %481 : vector<1x16x32xf32> to vector<16x32xf32>
    %483 = vector.shape_cast %480 : vector<16x32xf32> to vector<1x16x32xf32>
    tpu.vector_store %arg28[%c0_235, %c0_236, %c0_237], %483 {strides = array<i32>} : memref<1x16x32xf32, #tpu.memory_space<vmem>>, vector<1x16x32xf32>,
    return
  }
}

</mosaic_0001>

<llo_original>
// kernel: eq.22
$region0: #{eq.22}
  %s0 = inlined_call_operand.vmem [shape: s32[2,16], index: 0, kind: input, shape index: {}]
  %s1 = inlined_call_operand.vmem [shape: s32[32], index: 1, kind: output, shape index: {}]
  $region1: #{eq.22} parent=0
    #allocation0 [shape = 'u8[4096]{0}', space=vmem, size = 0x1000, scoped, tag = 'scoped mem for output reshape']
    #allocation1 [shape = 'u8[4096]{0}', space=vmem, size = 0x1000, scoped, tag = 'scoped mem for input reshape']
    %s3 = sshllo.u32 0, 2
    %v4 = vld [vmem:[%s0] sm:%s3]
    %5 = vst [vmem:[#allocation1] sm:%s3] %v4
    %v6 = vld [vmem:[#allocation1] sm:$0x1]
    %vm7 = vcmask 130048
    %8 = vst.msk [vmem:[#allocation0] sm:$0x1] %vm7, %v6
    %s9 = scalar_lea.vmem [#allocation1], 1
    %v10 = vld [vmem:[%s9] sm:$0x1]
    %11 = vrot.lane.b32.xlu0 %v10, 16
    %v12 = vpop.permute.xlu0 %11
    %vm13 = vcmask 261248
    %14 = vst.msk [vmem:[#allocation0] sm:$0x1] %vm13, %v12
    %s16 = sshllo.u32 0, 1
    %v18 = vld [vmem:[#allocation0] sm:%s16]
    %s19 = sshllo.u32 0, 1
    %20 = vst [vmem:[%s1] sm:%s19] %v18

// kernel: eq.29
$region0: #{eq.29}
  %s0 = inlined_call_operand.vmem [shape: s32[2,8], index: 0, kind: input, shape index: {}]
  %s1 = inlined_call_operand.vmem [shape: s32[16], index: 1, kind: output, shape index: {}]
  $region1: #{eq.29} parent=0
    #allocation0 [shape = 'u8[4096]{0}', space=vmem, size = 0x1000, scoped, tag = 'scoped mem for output reshape']
    #allocation1 [shape = 'u8[4096]{0}', space=vmem, size = 0x1000, scoped, tag = 'scoped mem for input reshape']
    %s3 = sshllo.u32 0, 2
    %v4 = vld [vmem:[%s0] sm:%s3]
    %5 = vst [vmem:[#allocation1] sm:%s3] %v4
    %v6 = vld [vmem:[#allocation1] sm:$0x1]
    %vm7 = vcmask 64512
    %8 = vst.msk [vmem:[#allocation0] sm:$0x1] %vm7, %v6
    %s9 = scalar_lea.vmem [#allocation1], 1
    %v10 = vld [vmem:[%s9] sm:$0x1]
    %11 = vrot.lane.b32.xlu0 %v10, 8
    %v12 = vpop.permute.xlu0 %11
    %vm13 = vcmask 130112
    %14 = vst.msk [vmem:[#allocation0] sm:$0x1] %vm13, %v12
    %s16 = sshllo.u32 0, 1
    %v18 = vld [vmem:[#allocation0] sm:%s16]
    %s19 = sshllo.u32 0, 1
    %20 = vst [vmem:[%s1] sm:%s19] %v18

// kernel: detr_forward.1
$region0: #{detr_forward.1}
  #allocation0 [shape = 'u32[]', space=smem, size = 0x4, offset = 0x4, fixed_abs, tag = 'smem constant byte address 0x4 - core index']
  #allocation1 [shape = 'u32[144,128]{1,0:T(1,128)}', space=vmem, size = 0x12000, scoped, tag = 'internal scratch']
  %s0 = inlined_call_operand.smem [shape: u32[30], index: -1, kind: input, shape index: {}]
  %s1 = sld [smem:[%s0]]
  %s2 = scalar_lea.smem %s0, 1
  %s3 = sld [smem:[%s2]]
  %s4 = scalar_lea.smem %s0, 2
  %s5 = sld [smem:[%s4]]
  %s6 = scalar_lea.smem %s0, 3
  %s7 = sld [smem:[%s6]]
  %s8 = scalar_lea.smem %s0, 4
  %s9 = sld [smem:[%s8]]
  %s10 = scalar_lea.smem %s0, 5
  %s11 = sld [smem:[%s10]]
  %s12 = scalar_lea.smem %s0, 6
  %s13 = sld [smem:[%s12]]
  %s14 = scalar_lea.smem %s0, 7
  %s15 = sld [smem:[%s14]]
  %s16 = scalar_lea.smem %s0, 8
  %s17 = sld [smem:[%s16]]
  %s18 = scalar_lea.smem %s0, 9
  %s19 = sld [smem:[%s18]]
  %s20 = scalar_lea.smem %s0, 10
  %s21 = sld [smem:[%s20]]
  %s22 = scalar_lea.smem %s0, 11
  %s23 = sld [smem:[%s22]]
  %s24 = scalar_lea.smem %s0, 12
  %s25 = sld [smem:[%s24]]
  %s26 = scalar_lea.smem %s0, 13
  %s27 = sld [smem:[%s26]]
  %s28 = scalar_lea.smem %s0, 14
  %s29 = sld [smem:[%s28]]
  %s30 = scalar_lea.smem %s0, 15
  %s31 = sld [smem:[%s30]]
  %s32 = scalar_lea.smem %s0, 16
  %s33 = sld [smem:[%s32]]
  %s34 = scalar_lea.smem %s0, 17
  %s35 = sld [smem:[%s34]]
  %s36 = scalar_lea.smem %s0, 18
  %s37 = sld [smem:[%s36]]
  %s38 = scalar_lea.smem %s0, 19
  %s39 = sld [smem:[%s38]]
  %s40 = scalar_lea.smem %s0, 20
  %s41 = sld [smem:[%s40]]
  %s42 = scalar_lea.smem %s0, 21
  %s43 = sld [smem:[%s42]]
  %s44 = scalar_lea.smem %s0, 22
  %s45 = sld [smem:[%s44]]
  %s46 = scalar_lea.smem %s0, 23
  %s47 = sld [smem:[%s46]]
  %s48 = scalar_lea.smem %s0, 24
  %s49 = sld [smem:[%s48]]
  %s50 = scalar_lea.smem %s0, 25
  %s51 = sld [smem:[%s50]]
  %s52 = scalar_lea.smem %s0, 26
  %s53 = sld [smem:[%s52]]
  %s54 = scalar_lea.smem %s0, 27
  %s55 = sld [smem:[%s54]]
  %s56 = scalar_lea.smem %s0, 28
  %s57 = sld [smem:[%s56]]
  %s58 = scalar_lea.smem %s0, 29
  %s59 = sld [smem:[%s58]]
  %60 = xla_tuple %s57, %s59
  %s61 = sld [smem:[#allocation0]]
  $region130: #{detr_forward.1} parent=0
    _
  %s63 = ssub.s32 1, %s61
  %s64 = scalar_select 0, %s63, %s61
  $region1: #{detr_forward.1} parent=0
    #allocation2 [shape = 'u8[8192]{0}', space=vmem, size = 0x2000, scoped, tag = 'output window, operand 0, single buffered']
    #allocation3 [shape = 's32[1]{0}', space=sflag, size = 0x4, scoped, tag = 'scoped memory for detr_forward.1']
    #allocation4 [shape = 'u8[16384]{0}', space=vmem, size = 0x4000, scoped, tag = 'output window, operand 1, single buffered']
    #allocation5 [shape = 's32[1]{0}', space=sflag, size = 0x4, scoped, tag = 'scoped memory for detr_forward.1']
    %65 = vsyncpa [#allocation3], 0
    %66 = vsyncpa [#allocation5], 0
    // Predicated region
    $region2: #{detr_forward.1} parent=1 // pred_check
      _
    $region3: #{detr_forward.1} parent=1 // pred_check_branch
      %68 = sbr.rel (0) target = $region5
    $region4: #{detr_forward.1} parent=1 // pred_region
      _
    $region5: #{detr_forward.1} parent=1 // pred_fallthru
      _
    // Predicated region
    $region6: #{detr_forward.1} parent=1 // pred_check
      _
    $region7: #{detr_forward.1} parent=1 // pred_check_branch
      %70 = sbr.rel (0) target = $region9
    $region8: #{detr_forward.1} parent=1 // pred_region
      _
    $region9: #{detr_forward.1} parent=1 // pred_fallthru
      _
    // Predicated region
    $region10: #{detr_forward.1} parent=1 // pred_check
      _
    $region11: #{detr_forward.1} parent=1 // pred_check_branch
      %72 = sbr.rel (0) target = $region13
    $region12: #{detr_forward.1} parent=1 // pred_region
      _
    $region13: #{detr_forward.1} parent=1 // pred_fallthru
      _
    // Predicated region
    $region14: #{detr_forward.1} parent=1 // pred_check
      _
    $region15: #{detr_forward.1} parent=1 // pred_check_branch
      %74 = sbr.rel (0) target = $region17
    $region16: #{detr_forward.1} parent=1 // pred_region
      _
    $region17: #{detr_forward.1} parent=1 // pred_fallthru
      _
    // Predicated region
    $region18: #{detr_forward.1} parent=1 // pred_check
      _
    $region19: #{detr_forward.1} parent=1 // pred_check_branch
      %76 = sbr.rel (0) target = $region21
    $region20: #{detr_forward.1} parent=1 // pred_region
      _
    $region21: #{detr_forward.1} parent=1 // pred_fallthru
      _
    // Predicated region
    $region22: #{detr_forward.1} parent=1 // pred_check
      _
    $region23: #{detr_forward.1} parent=1 // pred_check_branch
      %78 = sbr.rel (0) target = $region25
    $region24: #{detr_forward.1} parent=1 // pred_region
      _
    $region25: #{detr_forward.1} parent=1 // pred_fallthru
      _
    // Predicated region
    $region26: #{detr_forward.1} parent=1 // pred_check
      _
    $region27: #{detr_forward.1} parent=1 // pred_check_branch
      %80 = sbr.rel (0) target = $region29
    $region28: #{detr_forward.1} parent=1 // pred_region
      _
    $region29: #{detr_forward.1} parent=1 // pred_fallthru
      _
    // Predicated region
    $region30: #{detr_forward.1} parent=1 // pred_check
      _
    $region31: #{detr_forward.1} parent=1 // pred_check_branch
      %82 = sbr.rel (0) target = $region33
    $region32: #{detr_forward.1} parent=1 // pred_region
      _
    $region33: #{detr_forward.1} parent=1 // pred_fallthru
      _
    // Predicated region
    $region34: #{detr_forward.1} parent=1 // pred_check
      _
    $region35: #{detr_forward.1} parent=1 // pred_check_branch
      %84 = sbr.rel (0) target = $region37
    $region36: #{detr_forward.1} parent=1 // pred_region
      _
    $region37: #{detr_forward.1} parent=1 // pred_fallthru
      _
    // Predicated region
    $region38: #{detr_forward.1} parent=1 // pred_check
      _
    $region39: #{detr_forward.1} parent=1 // pred_check_branch
      %86 = sbr.rel (0) target = $region41
    $region40: #{detr_forward.1} parent=1 // pred_region
      _
    $region41: #{detr_forward.1} parent=1 // pred_fallthru
      _
    // Predicated region
    $region42: #{detr_forward.1} parent=1 // pred_check
      _
    $region43: #{detr_forward.1} parent=1 // pred_check_branch
      %88 = sbr.rel (0) target = $region45
    $region44: #{detr_forward.1} parent=1 // pred_region
      _
    $region45: #{detr_forward.1} parent=1 // pred_fallthru
      _
    // Predicated region
    $region46: #{detr_forward.1} parent=1 // pred_check
      _
    $region47: #{detr_forward.1} parent=1 // pred_check_branch
      %90 = sbr.rel (0) target = $region49
    $region48: #{detr_forward.1} parent=1 // pred_region
      _
    $region49: #{detr_forward.1} parent=1 // pred_fallthru
      _
    // Predicated region
    $region50: #{detr_forward.1} parent=1 // pred_check
      _
    $region51: #{detr_forward.1} parent=1 // pred_check_branch
      %92 = sbr.rel (0) target = $region53
    $region52: #{detr_forward.1} parent=1 // pred_region
      _
    $region53: #{detr_forward.1} parent=1 // pred_fallthru
      _
    // Predicated region
    $region54: #{detr_forward.1} parent=1 // pred_check
      _
    $region55: #{detr_forward.1} parent=1 // pred_check_branch
      %94 = sbr.rel (0) target = $region57
    $region56: #{detr_forward.1} parent=1 // pred_region
      _
    $region57: #{detr_forward.1} parent=1 // pred_fallthru
      _
    // Predicated region
    $region58: #{detr_forward.1} parent=1 // pred_check
      _
    $region59: #{detr_forward.1} parent=1 // pred_check_branch
      %96 = sbr.rel (0) target = $region61
    $region60: #{detr_forward.1} parent=1 // pred_region
      _
    $region61: #{detr_forward.1} parent=1 // pred_fallthru
      _
    // Predicated region
    $region62: #{detr_forward.1} parent=1 // pred_check
      _
    $region63: #{detr_forward.1} parent=1 // pred_check_branch
      %98 = sbr.rel (0) target = $region65
    $region64: #{detr_forward.1} parent=1 // pred_region
      _
    $region65: #{detr_forward.1} parent=1 // pred_fallthru
      _
    // Predicated region
    $region66: #{detr_forward.1} parent=1 // pred_check
      _
    $region67: #{detr_forward.1} parent=1 // pred_check_branch
      %100 = sbr.rel (0) target = $region69
    $region68: #{detr_forward.1} parent=1 // pred_region
      _
    $region69: #{detr_forward.1} parent=1 // pred_fallthru
      _
    // Predicated region
    $region70: #{detr_forward.1} parent=1 // pred_check
      _
    $region71: #{detr_forward.1} parent=1 // pred_check_branch
      %102 = sbr.rel (0) target = $region73
    $region72: #{detr_forward.1} parent=1 // pred_region
      _
    $region73: #{detr_forward.1} parent=1 // pred_fallthru
      _
    // Predicated region
    $region74: #{detr_forward.1} parent=1 // pred_check
      _
    $region75: #{detr_forward.1} parent=1 // pred_check_branch
      %104 = sbr.rel (0) target = $region77
    $region76: #{detr_forward.1} parent=1 // pred_region
      _
    $region77: #{detr_forward.1} parent=1 // pred_fallthru
      _
    // Predicated region
    $region78: #{detr_forward.1} parent=1 // pred_check
      _
    $region79: #{detr_forward.1} parent=1 // pred_check_branch
      %106 = sbr.rel (0) target = $region81
    $region80: #{detr_forward.1} parent=1 // pred_region
      _
    $region81: #{detr_forward.1} parent=1 // pred_fallthru
      _
    // Predicated region
    $region82: #{detr_forward.1} parent=1 // pred_check
      _
    $region83: #{detr_forward.1} parent=1 // pred_check_branch
      %108 = sbr.rel (0) target = $region85
    $region84: #{detr_forward.1} parent=1 // pred_region
      _
    $region85: #{detr_forward.1} parent=1 // pred_fallthru
      _
    // Predicated region
    $region86: #{detr_forward.1} parent=1 // pred_check
      _
    $region87: #{detr_forward.1} parent=1 // pred_check_branch
      %110 = sbr.rel (0) target = $region89
    $region88: #{detr_forward.1} parent=1 // pred_region
      _
    $region89: #{detr_forward.1} parent=1 // pred_fallthru
      _
    // Predicated region
    $region90: #{detr_forward.1} parent=1 // pred_check
      _
    $region91: #{detr_forward.1} parent=1 // pred_check_branch
      %112 = sbr.rel (0) target = $region93
    $region92: #{detr_forward.1} parent=1 // pred_region
      _
    $region93: #{detr_forward.1} parent=1 // pred_fallthru
      _
    // Predicated region
    $region94: #{detr_forward.1} parent=1 // pred_check
      _
    $region95: #{detr_forward.1} parent=1 // pred_check_branch
      %114 = sbr.rel (0) target = $region97
    $region96: #{detr_forward.1} parent=1 // pred_region
      _
    $region97: #{detr_forward.1} parent=1 // pred_fallthru
      _
    // Predicated region
    $region98: #{detr_forward.1} parent=1 // pred_check
      _
    $region99: #{detr_forward.1} parent=1 // pred_check_branch
      %116 = sbr.rel (0) target = $region101
    $region100: #{detr_forward.1} parent=1 // pred_region
      _
    $region101: #{detr_forward.1} parent=1 // pred_fallthru
      _
    // Predicated region
    $region102: #{detr_forward.1} parent=1 // pred_check
      _
    $region103: #{detr_forward.1} parent=1 // pred_check_branch
      %118 = sbr.rel (0) target = $region105
    $region104: #{detr_forward.1} parent=1 // pred_region
      _
    $region105: #{detr_forward.1} parent=1 // pred_fallthru
      _
    // Predicated region
    $region106: #{detr_forward.1} parent=1 // pred_check
      _
    $region107: #{detr_forward.1} parent=1 // pred_check_branch
      %120 = sbr.rel (0) target = $region109
    $region108: #{detr_forward.1} parent=1 // pred_region
      _
    $region109: #{detr_forward.1} parent=1 // pred_fallthru
      _
    // Predicated region
    $region110: #{detr_forward.1} parent=1 // pred_check
      _
    $region111: #{detr_forward.1} parent=1 // pred_check_branch
      %122 = sbr.rel (0) target = $region113
    $region112: #{detr_forward.1} parent=1 // pred_region
      _
    $region113: #{detr_forward.1} parent=1 // pred_fallthru
      _
    %v123 = vld [vmem:[%s1] sm:$0xff]
    %v124 = vld [vmem:[%s1 + $0x8] sm:$0xff]
    %v125 = vld [vmem:[%s1 + $0x10] sm:$0xff]
    %v126 = vld [vmem:[%s1 + $0x18] sm:$0xff]
    %v127 = vld [vmem:[%s3] sm:$0xff]
    %v128 = vld [vmem:[%s3 + $0x8] sm:$0xff]
    %v129 = vld [vmem:[%s3 + $0x10] sm:$0xff]
    %v130 = vld [vmem:[%s3 + $0x18] sm:$0xff]
    %v131 = vld [vmem:[%s3 + $0x20] sm:$0xff]
    %v132 = vld [vmem:[%s3 + $0x28] sm:$0xff]
    %v133 = vld [vmem:[%s5] sm:$0x1]
    %v134 = vld [vmem:[%s7] sm:$0xff]
    %v135 = vld [vmem:[%s7 + $0x8] sm:$0xff]
    %v136 = vld [vmem:[%s7 + $0x10] sm:$0xff]
    %v137 = vld [vmem:[%s7 + $0x18] sm:$0xff]
    %v138 = vld [vmem:[%s9] sm:$0xff]
    %v139 = vld [vmem:[%s9 + $0x8] sm:$0xff]
    %v140 = vld [vmem:[%s11] sm:$0xff]
    %v141 = vld [vmem:[%s11 + $0x8] sm:$0xff]
    %v142 = vld [vmem:[%s11 + $0x10] sm:$0xff]
    %v143 = vld [vmem:[%s11 + $0x18] sm:$0xff]
    %v144 = vld [vmem:[%s13] sm:$0xff]
    %v145 = vld [vmem:[%s13 + $0x8] sm:$0xff]
    %v146 = vld [vmem:[%s15] sm:$0xff]
    %v147 = vld [vmem:[%s15 + $0x8] sm:$0xff]
    %v149 = vlaneseq
    %v150 = vshrl.u32 %v149, 7
    %v151 = vsub.s32 0, %v150
    %v152 = vrot.slane %v133, %v151
    %vm154 = vcmask 392192
    %v156 = vsel %vm154, %v123, 0
    %v159 = vsel %vm154, %v124, 0
    %v162 = vsel %vm154, %v125, 0
    %v165 = vsel %vm154, %v126, 0
    %167 = vmatprep.subr.mxu0 0.0
    %168 = vmatpush1.msra.mxu0 %v127
    %169 = vmatprep.subr.mxu0 0.0
    %170 = vmatpush1.msra.mxu0 %v128
    %171 = vmatprep.subr.mxu0 0.0
    %172 = vmatpush1.msra.mxu0 %v129
    %173 = vmatprep.subr.mxu0 0.0
    %174 = vmatpush1.msra.mxu0 %v130
    %175 = vmatprep.subr.mxu0 0.0
    %176 = vmatpush1.msra.mxu0 %v131
    %177 = vmatprep.subr.mxu0 0.0
    %178 = vmatpush1.msra.mxu0 %v132
    %179 = vmatprep.subr.mxu0 0.0
    %180 = vmatpush1.msra.mxu0 0.0
    %181 = vmatprep.subr.mxu0 0.0
    %182 = vmatpush1.msra.mxu0 0.0
    %183 = vmatprep.subr.mxu0 0.0
    %184 = vmatpush1.msra.mxu0 0.0
    %185 = vmatprep.subr.mxu0 0.0
    %186 = vmatpush1.msra.mxu0 0.0
    %187 = vmatprep.subr.mxu0 0.0
    %188 = vmatpush1.msra.mxu0 0.0
    %189 = vmatprep.subr.mxu0 0.0
    %190 = vmatpush1.msra.mxu0 0.0
    %191 = vmatprep.subr.mxu0 0.0
    %192 = vmatpush1.msra.mxu0 0.0
    %193 = vmatprep.subr.mxu0 0.0
    %194 = vmatpush1.msra.mxu0 0.0
    %195 = vmatprep.subr.mxu0 0.0
    %196 = vmatpush1.msra.mxu0 0.0
    %197 = vmatprep.subr.mxu0 0.0
    %198 = vmatpush1.msra.mxu0 0.0
    %199 = vmatprep.subr.mxu0 0.0
    %200 = vmatpush1.msra.mxu0 0.0
    %201 = vmatprep.subr.mxu0 0.0
    %202 = vmatpush1.msra.mxu0 0.0
    %203 = vmatprep.subr.mxu0 0.0
    %204 = vmatpush1.msra.mxu0 0.0
    %205 = vmatprep.subr.mxu0 0.0
    %206 = vmatpush1.msra.mxu0 0.0
    %207 = vmatprep.subr.mxu0 0.0
    %208 = vmatpush1.msra.mxu0 0.0
    %209 = vmatprep.subr.mxu0 0.0
    %210 = vmatpush1.msra.mxu0 0.0
    %211 = vmatprep.subr.mxu0 0.0
    %212 = vmatpush1.msra.mxu0 0.0
    %213 = vmatprep.subr.mxu0 0.0
    %214 = vmatpush1.msra.mxu0 0.0
    %215 = vmatprep.subr.mxu0 0.0
    %216 = vmatpush1.msra.mxu0 0.0
    %217 = vmatprep.subr.mxu0 0.0
    %218 = vmatpush1.msra.mxu0 0.0
    %219 = vmatprep.subr.mxu0 0.0
    %220 = vmatpush1.msra.mxu0 0.0
    %221 = vmatprep.subr.mxu0 0.0
    %222 = vmatpush1.msra.mxu0 0.0
    %223 = vmatprep.subr.mxu0 0.0
    %224 = vmatpush1.msra.mxu0 0.0
    %225 = vmatprep.subr.mxu0 0.0
    %226 = vmatpush1.msra.mxu0 0.0
    %227 = vmatprep.subr.mxu0 0.0
    %228 = vmatpush1.msra.mxu0 0.0
    %229 = vmatprep.subr.mxu0 0.0
    %230 = vmatpush1.msra.mxu0 0.0
    %231 = vmatprep.mubr.f32.mxu0 0.0
    %232 = vmatmul.mubr.f32.gmra.mrb[0].mxu0 %v156
    %v233 = vpop.f32.mrb[0].mxu0
    %v234 = vadd.f32 %v152, %v233
    %v235 = vpop.f32.mrb[0].mxu0
    %236 = vmatprep.mubr.f32.mxu0 0.0
    %237 = vmatmul.mubr.f32.gmra.mrb[0].mxu0 %v159
    %v238 = vpop.f32.mrb[0].mxu0
    %v239 = vadd.f32 %v152, %v238
    %v240 = vpop.f32.mrb[0].mxu0
    %241 = vmatprep.mubr.f32.mxu0 0.0
    %242 = vmatmul.mubr.f32.gmra.mrb[0].mxu0 %v162
    %v243 = vpop.f32.mrb[0].mxu0
    %v244 = vadd.f32 %v152, %v243
    %v245 = vpop.f32.mrb[0].mxu0
    %246 = vmatprep.mubr.f32.mxu0 0.0
    %247 = vmatmul.mubr.f32.gmra.mrb[0].mxu0 %v165
    %v248 = vpop.f32.mrb[0].mxu0
    %v249 = vadd.f32 %v152, %v248
    %v250 = vpop.f32.mrb[0].mxu0
    %251 = vdwg.mxu0
    %v252 = vadd.f32 %v234, %v134
    %v253 = vadd.f32 %v239, %v135
    %v254 = vadd.f32 %v244, %v136
    %v255 = vadd.f32 %v249, %v137
    %v256 = vld [vmem:[%s17] sm:$0xff]
    %v257 = vld [vmem:[%s17 + $0x8] sm:$0xff]
    %v258 = vld [vmem:[%s17 + $0x10] sm:$0xff]
    %v259 = vld [vmem:[%s17 + $0x18] sm:$0xff]
    %v260 = vld [vmem:[%s19] sm:$0x1]
    %v262 = vlaneseq
    %v263 = vshrl.u32 %v262, 7
    %v264 = vsub.s32 0, %v263
    %v265 = vrot.slane %v260, %v264
    %vm267 = vcmask 261120
    %v269 = vsel %vm267, %v252, 0
    %v272 = vsel %vm267, %v253, 0
    %v275 = vsel %vm267, %v254, 0
    %v278 = vsel %vm267, %v255, 0
    %280 = vmatprep.subr.mxu0 0.0
    %281 = vmatpush1.msra.mxu0 %v256
    %282 = vmatprep.subr.mxu0 0.0
    %283 = vmatpush1.msra.mxu0 %v257
    %284 = vmatprep.subr.mxu0 0.0
    %285 = vmatpush1.msra.mxu0 %v258
    %286 = vmatprep.subr.mxu0 0.0
    %287 = vmatpush1.msra.mxu0 %v259
    %288 = vmatprep.subr.mxu0 0.0
    %289 = vmatpush1.msra.mxu0 0.0
    %290 = vmatprep.subr.mxu0 0.0
    %291 = vmatpush1.msra.mxu0 0.0
    %292 = vmatprep.subr.mxu0 0.0
    %293 = vmatpush1.msra.mxu0 0.0
    %294 = vmatprep.subr.mxu0 0.0
    %295 = vmatpush1.msra.mxu0 0.0
    %296 = vmatprep.subr.mxu0 0.0
    %297 = vmatpush1.msra.mxu0 0.0
    %298 = vmatprep.subr.mxu0 0.0
    %299 = vmatpush1.msra.mxu0 0.0
    %300 = vmatprep.subr.mxu0 0.0
    %301 = vmatpush1.msra.mxu0 0.0
    %302 = vmatprep.subr.mxu0 0.0
    %303 = vmatpush1.msra.mxu0 0.0
    %304 = vmatprep.subr.mxu0 0.0
    %305 = vmatpush1.msra.mxu0 0.0
    %306 = vmatprep.subr.mxu0 0.0
    %307 = vmatpush1.msra.mxu0 0.0
    %308 = vmatprep.subr.mxu0 0.0
    %309 = vmatpush1.msra.mxu0 0.0
    %310 = vmatprep.subr.mxu0 0.0
    %311 = vmatpush1.msra.mxu0 0.0
    %312 = vmatprep.subr.mxu0 0.0
    %313 = vmatpush1.msra.mxu0 0.0
    %314 = vmatprep.subr.mxu0 0.0
    %315 = vmatpush1.msra.mxu0 0.0
    %316 = vmatprep.subr.mxu0 0.0
    %317 = vmatpush1.msra.mxu0 0.0
    %318 = vmatprep.subr.mxu0 0.0
    %319 = vmatpush1.msra.mxu0 0.0
    %320 = vmatprep.subr.mxu0 0.0
    %321 = vmatpush1.msra.mxu0 0.0
    %322 = vmatprep.subr.mxu0 0.0
    %323 = vmatpush1.msra.mxu0 0.0
    %324 = vmatprep.subr.mxu0 0.0
    %325 = vmatpush1.msra.mxu0 0.0
    %326 = vmatprep.subr.mxu0 0.0
    %327 = vmatpush1.msra.mxu0 0.0
    %328 = vmatprep.subr.mxu0 0.0
    %329 = vmatpush1.msra.mxu0 0.0
    %330 = vmatprep.subr.mxu0 0.0
    %331 = vmatpush1.msra.mxu0 0.0
    %332 = vmatprep.subr.mxu0 0.0
    %333 = vmatpush1.msra.mxu0 0.0
    %334 = vmatprep.subr.mxu0 0.0
    %335 = vmatpush1.msra.mxu0 0.0
    %336 = vmatprep.subr.mxu0 0.0
    %337 = vmatpush1.msra.mxu0 0.0
    %338 = vmatprep.subr.mxu0 0.0
    %339 = vmatpush1.msra.mxu0 0.0
    %340 = vmatprep.subr.mxu0 0.0
    %341 = vmatpush1.msra.mxu0 0.0
    %342 = vmatprep.subr.mxu0 0.0
    %343 = vmatpush1.msra.mxu0 0.0
    %344 = vmatprep.mubr.f32.mxu0 0.0
    %345 = vmatmul.mubr.f32.gmra.mrb[0].mxu0 %v269
    %v346 = vpop.f32.mrb[0].mxu0
    %v347 = vadd.f32 %v265, %v346
    %v348 = vpop.f32.mrb[0].mxu0
    %349 = vmatprep.mubr.f32.mxu0 0.0
    %350 = vmatmul.mubr.f32.gmra.mrb[0].mxu0 %v272
    %v351 = vpop.f32.mrb[0].mxu0
    %v352 = vadd.f32 %v265, %v351
    %v353 = vpop.f32.mrb[0].mxu0
    %354 = vmatprep.mubr.f32.mxu0 0.0
    %355 = vmatmul.mubr.f32.gmra.mrb[0].mxu0 %v275
    %v356 = vpop.f32.mrb[0].mxu0
    %v357 = vadd.f32 %v265, %v356
    %v358 = vpop.f32.mrb[0].mxu0
    %359 = vmatprep.mubr.f32.mxu0 0.0
    %360 = vmatmul.mubr.f32.gmra.mrb[0].mxu0 %v278
    %v361 = vpop.f32.mrb[0].mxu0
    %v362 = vadd.f32 %v265, %v361
    %v363 = vpop.f32.mrb[0].mxu0
    %364 = vdwg.mxu0
    %s365 = scalar_lea.vmem %s17, 32
    %v366 = vld [vmem:[%s365] sm:$0xff]
    %v367 = vld [vmem:[%s365 + $0x8] sm:$0xff]
    %v368 = vld [vmem:[%s365 + $0x10] sm:$0xff]
    %v369 = vld [vmem:[%s365 + $0x18] sm:$0xff]
    %s370 = scalar_lea.vmem %s19, 1
    %v371 = vld [vmem:[%s370] sm:$0x1]
    %v373 = vlaneseq
    %v374 = vshrl.u32 %v373, 7
    %v375 = vsub.s32 0, %v374
    %v376 = vrot.slane %v371, %v375
    %378 = vmatprep.subr.mxu0 0.0
    %379 = vmatpush1.msra.mxu0 %v366
    %380 = vmatprep.subr.mxu0 0.0
    %381 = vmatpush1.msra.mxu0 %v367
    %382 = vmatprep.subr.mxu0 0.0
    %383 = vmatpush1.msra.mxu0 %v368
    %384 = vmatprep.subr.mxu0 0.0
    %385 = vmatpush1.msra.mxu0 %v369
    %386 = vmatprep.subr.mxu0 0.0
    %387 = vmatpush1.msra.mxu0 0.0
    %388 = vmatprep.subr.mxu0 0.0
    %389 = vmatpush1.msra.mxu0 0.0
    %390 = vmatprep.subr.mxu0 0.0
    %391 = vmatpush1.msra.mxu0 0.0
    %392 = vmatprep.subr.mxu0 0.0
    %393 = vmatpush1.msra.mxu0 0.0
    %394 = vmatprep.subr.mxu0 0.0
    %395 = vmatpush1.msra.mxu0 0.0
    %396 = vmatprep.subr.mxu0 0.0
    %397 = vmatpush1.msra.mxu0 0.0
    %398 = vmatprep.subr.mxu0 0.0
    %399 = vmatpush1.msra.mxu0 0.0
    %400 = vmatprep.subr.mxu0 0.0
    %401 = vmatpush1.msra.mxu0 0.0
    %402 = vmatprep.subr.mxu0 0.0
    %403 = vmatpush1.msra.mxu0 0.0
    %404 = vmatprep.subr.mxu0 0.0
    %405 = vmatpush1.msra.mxu0 0.0
    %406 = vmatprep.subr.mxu0 0.0
    %407 = vmatpush1.msra.mxu0 0.0
    %408 = vmatprep.subr.mxu0 0.0
    %409 = vmatpush1.msra.mxu0 0.0
    %410 = vmatprep.subr.mxu0 0.0
    %411 = vmatpush1.msra.mxu0 0.0
    %412 = vmatprep.subr.mxu0 0.0
    %413 = vmatpush1.msra.mxu0 0.0
    %414 = vmatprep.subr.mxu0 0.0
    %415 = vmatpush1.msra.mxu0 0.0
    %416 = vmatprep.subr.mxu0 0.0
    %417 = vmatpush1.msra.mxu0 0.0
    %418 = vmatprep.subr.mxu0 0.0
    %419 = vmatpush1.msra.mxu0 0.0
    %420 = vmatprep.subr.mxu0 0.0
    %421 = vmatpush1.msra.mxu0 0.0
    %422 = vmatprep.subr.mxu0 0.0
    %423 = vmatpush1.msra.mxu0 0.0
    %424 = vmatprep.subr.mxu0 0.0
    %425 = vmatpush1.msra.mxu0 0.0
    %426 = vmatprep.subr.mxu0 0.0
    %427 = vmatpush1.msra.mxu0 0.0
    %428 = vmatprep.subr.mxu0 0.0
    %429 = vmatpush1.msra.mxu0 0.0
    %430 = vmatprep.subr.mxu0 0.0
    %431 = vmatpush1.msra.mxu0 0.0
    %432 = vmatprep.subr.mxu0 0.0
    %433 = vmatpush1.msra.mxu0 0.0
    %434 = vmatprep.subr.mxu0 0.0
    %435 = vmatpush1.msra.mxu0 0.0
    %436 = vmatprep.subr.mxu0 0.0
    %437 = vmatpush1.msra.mxu0 0.0
    %438 = vmatprep.subr.mxu0 0.0
    %439 = vmatpush1.msra.mxu0 0.0
    %440 = vmatprep.subr.mxu0 0.0
    %441 = vmatpush1.msra.mxu0 0.0
    %442 = vmatprep.mubr.f32.mxu0 0.0
    %443 = vmatmul.mubr.f32.gmra.mrb[0].mxu0 %v269
    %v444 = vpop.f32.mrb[0].mxu0
    %v445 = vadd.f32 %v376, %v444
    %v446 = vpop.f32.mrb[0].mxu0
    %447 = vmatprep.mubr.f32.mxu0 0.0
    %448 = vmatmul.mubr.f32.gmra.mrb[0].mxu0 %v272
    %v449 = vpop.f32.mrb[0].mxu0
    %v450 = vadd.f32 %v376, %v449
    %v451 = vpop.f32.mrb[0].mxu0
    %452 = vmatprep.mubr.f32.mxu0 0.0
    %453 = vmatmul.mubr.f32.gmra.mrb[0].mxu0 %v275
    %v454 = vpop.f32.mrb[0].mxu0
    %v455 = vadd.f32 %v376, %v454
    %v456 = vpop.f32.mrb[0].mxu0
    %457 = vmatprep.mubr.f32.mxu0 0.0
    %458 = vmatmul.mubr.f32.gmra.mrb[0].mxu0 %v278
    %v459 = vpop.f32.mrb[0].mxu0
    %v460 = vadd.f32 %v376, %v459
    %v461 = vpop.f32.mrb[0].mxu0
    %462 = vdwg.mxu0
    %s463 = scalar_lea.vmem %s17, 64
    %v464 = vld [vmem:[%s463] sm:$0xff]
    %v465 = vld [vmem:[%s463 + $0x8] sm:$0xff]
    %v466 = vld [vmem:[%s463 + $0x10] sm:$0xff]
    %v467 = vld [vmem:[%s463 + $0x18] sm:$0xff]
    %s468 = scalar_lea.vmem %s19, 2
    %v469 = vld [vmem:[%s468] sm:$0x1]
    %v471 = vlaneseq
    %v472 = vshrl.u32 %v471, 7
    %v473 = vsub.s32 0, %v472
    %v474 = vrot.slane %v469, %v473
    %v477 = vsel %vm267, %v234, 0
    %v480 = vsel %vm267, %v239, 0
    %v483 = vsel %vm267, %v244, 0
    %v486 = vsel %vm267, %v249, 0
    %488 = vmatprep.subr.mxu0 0.0
    %489 = vmatpush1.msra.mxu0 %v464
    %490 = vmatprep.subr.mxu0 0.0
    %491 = vmatpush1.msra.mxu0 %v465
    %492 = vmatprep.subr.mxu0 0.0
    %493 = vmatpush1.msra.mxu0 %v466
    %494 = vmatprep.subr.mxu0 0.0
    %495 = vmatpush1.msra.mxu0 %v467
    %496 = vmatprep.subr.mxu0 0.0
    %497 = vmatpush1.msra.mxu0 0.0
    %498 = vmatprep.subr.mxu0 0.0
    %499 = vmatpush1.msra.mxu0 0.0
    %500 = vmatprep.subr.mxu0 0.0
    %501 = vmatpush1.msra.mxu0 0.0
    %502 = vmatprep.subr.mxu0 0.0
    %503 = vmatpush1.msra.mxu0 0.0
    %504 = vmatprep.subr.mxu0 0.0
    %505 = vmatpush1.msra.mxu0 0.0
    %506 = vmatprep.subr.mxu0 0.0
    %507 = vmatpush1.msra.mxu0 0.0
    %508 = vmatprep.subr.mxu0 0.0
    %509 = vmatpush1.msra.mxu0 0.0
    %510 = vmatprep.subr.mxu0 0.0
    %511 = vmatpush1.msra.mxu0 0.0
    %512 = vmatprep.subr.mxu0 0.0
    %513 = vmatpush1.msra.mxu0 0.0
    %514 = vmatprep.subr.mxu0 0.0
    %515 = vmatpush1.msra.mxu0 0.0
    %516 = vmatprep.subr.mxu0 0.0
    %517 = vmatpush1.msra.mxu0 0.0
    %518 = vmatprep.subr.mxu0 0.0
    %519 = vmatpush1.msra.mxu0 0.0
    %520 = vmatprep.subr.mxu0 0.0
    %521 = vmatpush1.msra.mxu0 0.0
    %522 = vmatprep.subr.mxu0 0.0
    %523 = vmatpush1.msra.mxu0 0.0
    %524 = vmatprep.subr.mxu0 0.0
    %525 = vmatpush1.msra.mxu0 0.0
    %526 = vmatprep.subr.mxu0 0.0
    %527 = vmatpush1.msra.mxu0 0.0
    %528 = vmatprep.subr.mxu0 0.0
    %529 = vmatpush1.msra.mxu0 0.0
    %530 = vmatprep.subr.mxu0 0.0
    %531 = vmatpush1.msra.mxu0 0.0
    %532 = vmatprep.subr.mxu0 0.0
    %533 = vmatpush1.msra.mxu0 0.0
    %534 = vmatprep.subr.mxu0 0.0
    %535 = vmatpush1.msra.mxu0 0.0
    %536 = vmatprep.subr.mxu0 0.0
    %537 = vmatpush1.msra.mxu0 0.0
    %538 = vmatprep.subr.mxu0 0.0
    %539 = vmatpush1.msra.mxu0 0.0
    %540 = vmatprep.subr.mxu0 0.0
    %541 = vmatpush1.msra.mxu0 0.0
    %542 = vmatprep.subr.mxu0 0.0
    %543 = vmatpush1.msra.mxu0 0.0
    %544 = vmatprep.subr.mxu0 0.0
    %545 = vmatpush1.msra.mxu0 0.0
    %546 = vmatprep.subr.mxu0 0.0
    %547 = vmatpush1.msra.mxu0 0.0
    %548 = vmatprep.subr.mxu0 0.0
    %549 = vmatpush1.msra.mxu0 0.0
    %550 = vmatprep.subr.mxu0 0.0
    %551 = vmatpush1.msra.mxu0 0.0
    %552 = vmatprep.mubr.f32.mxu0 0.0
    %553 = vmatmul.mubr.f32.gmra.mrb[0].mxu0 %v477
    %v554 = vpop.f32.mrb[0].mxu0
    %v555 = vadd.f32 %v474, %v554
    %v556 = vpop.f32.mrb[0].mxu0
    %557 = vmatprep.mubr.f32.mxu0 0.0
    %558 = vmatmul.mubr.f32.gmra.mrb[0].mxu0 %v480
    %v559 = vpop.f32.mrb[0].mxu0
    %v560 = vadd.f32 %v474, %v559
    %v561 = vpop.f32.mrb[0].mxu0
    %562 = vmatprep.mubr.f32.mxu0 0.0
    %563 = vmatmul.mubr.f32.gmra.mrb[0].mxu0 %v483
    %v564 = vpop.f32.mrb[0].mxu0
    %v565 = vadd.f32 %v474, %v564
    %v566 = vpop.f32.mrb[0].mxu0
    %567 = vmatprep.mubr.f32.mxu0 0.0
    %568 = vmatmul.mubr.f32.gmra.mrb[0].mxu0 %v486
    %v569 = vpop.f32.mrb[0].mxu0
    %v570 = vadd.f32 %v474, %v569
    %v571 = vpop.f32.mrb[0].mxu0
    %572 = vdwg.mxu0
    %vm573 = vcmask 64512
    %v575 = vsel %vm573, %v347, 0
    %v578 = vsel %vm573, %v352, 0
    %v581 = vsel %vm573, %v357, 0
    %v584 = vsel %vm573, %v362, 0
    %v587 = vsel %vm573, %v445, 0
    %v590 = vsel %vm573, %v450, 0
    %v593 = vsel %vm573, %v455, 0
    %v596 = vsel %vm573, %v460, 0
    %598 = vmatprep.subr.mxu0 0.0
    %599 = vmatpush1.xpose.msra.mxu0 %v587
    %600 = vmatprep.subr.mxu0 0.0
    %601 = vmatpush1.xpose.msra.mxu0 %v590
    %602 = vmatprep.subr.mxu0 0.0
    %603 = vmatpush1.xpose.msra.mxu0 %v593
    %604 = vmatprep.subr.mxu0 0.0
    %605 = vmatpush1.xpose.msra.mxu0 %v596
    %606 = vmatprep.subr.mxu0 0.0
    %607 = vmatpush1.xpose.msra.mxu0 0.0
    %608 = vmatprep.subr.mxu0 0.0
    %609 = vmatpush1.xpose.msra.mxu0 0.0
    %610 = vmatprep.subr.mxu0 0.0
    %611 = vmatpush1.xpose.msra.mxu0 0.0
    %612 = vmatprep.subr.mxu0 0.0
    %613 = vmatpush1.xpose.msra.mxu0 0.0
    %614 = vmatprep.subr.mxu0 0.0
    %615 = vmatpush1.xpose.msra.mxu0 0.0
    %616 = vmatprep.subr.mxu0 0.0
    %617 = vmatpush1.xpose.msra.mxu0 0.0
    %618 = vmatprep.subr.mxu0 0.0
    %619 = vmatpush1.xpose.msra.mxu0 0.0
    %620 = vmatprep.subr.mxu0 0.0
    %621 = vmatpush1.xpose.msra.mxu0 0.0
    %622 = vmatprep.subr.mxu0 0.0
    %623 = vmatpush1.xpose.msra.mxu0 0.0
    %624 = vmatprep.subr.mxu0 0.0
    %625 = vmatpush1.xpose.msra.mxu0 0.0
    %626 = vmatprep.subr.mxu0 0.0
    %627 = vmatpush1.xpose.msra.mxu0 0.0
    %628 = vmatprep.subr.mxu0 0.0
    %629 = vmatpush1.xpose.msra.mxu0 0.0
    %630 = vmatprep.subr.mxu0 0.0
    %631 = vmatpush1.xpose.msra.mxu0 0.0
    %632 = vmatprep.subr.mxu0 0.0
    %633 = vmatpush1.xpose.msra.mxu0 0.0
    %634 = vmatprep.subr.mxu0 0.0
    %635 = vmatpush1.xpose.msra.mxu0 0.0
    %636 = vmatprep.subr.mxu0 0.0
    %637 = vmatpush1.xpose.msra.mxu0 0.0
    %638 = vmatprep.subr.mxu0 0.0
    %639 = vmatpush1.xpose.msra.mxu0 0.0
    %640 = vmatprep.subr.mxu0 0.0
    %641 = vmatpush1.xpose.msra.mxu0 0.0
    %642 = vmatprep.subr.mxu0 0.0
    %643 = vmatpush1.xpose.msra.mxu0 0.0
    %644 = vmatprep.subr.mxu0 0.0
    %645 = vmatpush1.xpose.msra.mxu0 0.0
    %646 = vmatprep.subr.mxu0 0.0
    %647 = vmatpush1.xpose.msra.mxu0 0.0
    %648 = vmatprep.subr.mxu0 0.0
    %649 = vmatpush1.xpose.msra.mxu0 0.0
    %650 = vmatprep.subr.mxu0 0.0
    %651 = vmatpush1.xpose.msra.mxu0 0.0
    %652 = vmatprep.subr.mxu0 0.0
    %653 = vmatpush1.xpose.msra.mxu0 0.0
    %654 = vmatprep.subr.mxu0 0.0
    %655 = vmatpush1.xpose.msra.mxu0 0.0
    %656 = vmatprep.subr.mxu0 0.0
    %657 = vmatpush1.xpose.msra.mxu0 0.0
    %658 = vmatprep.subr.mxu0 0.0
    %659 = vmatpush1.xpose.msra.mxu0 0.0
    %660 = vmatprep.subr.mxu0 0.0
    %661 = vmatpush1.xpose.msra.mxu0 0.0
    %662 = vmatprep.mubr.f32.mxu0 0.0
    %663 = vmatmul.mubr.f32.gmra.mrb[0].mxu0 %v575
    %v664 = vpop.f32.mrb[0].mxu0
    %v665 = vadd.f32 %v140, %v664
    %v666 = vpop.f32.mrb[0].mxu0
    %667 = vmatprep.mubr.f32.mxu0 0.0
    %668 = vmatmul.mubr.f32.gmra.mrb[0].mxu0 %v578
    %v669 = vpop.f32.mrb[0].mxu0
    %v670 = vadd.f32 %v141, %v669
    %v671 = vpop.f32.mrb[0].mxu0
    %672 = vmatprep.mubr.f32.mxu0 0.0
    %673 = vmatmul.mubr.f32.gmra.mrb[0].mxu0 %v581
    %v674 = vpop.f32.mrb[0].mxu0
    %v675 = vadd.f32 %v142, %v674
    %v676 = vpop.f32.mrb[0].mxu0
    %677 = vmatprep.mubr.f32.mxu0 0.0
    %678 = vmatmul.mubr.f32.gmra.mrb[0].mxu0 %v584
    %v679 = vpop.f32.mrb[0].mxu0
    %v680 = vadd.f32 %v143, %v679
    %v681 = vpop.f32.mrb[0].mxu0
    %682 = vdwg.mxu0
    %v683 = vsel %vm267, %v665, -inf
    %684 = vmax.xlane.f32.xlu0 %v683
    %v685 = vpop.xlane.xlu0 %684
    %v686 = vsel %vm267, %v670, -inf
    %687 = vmax.xlane.f32.xlu0 %v686
    %v688 = vpop.xlane.xlu0 %687
    %v689 = vsel %vm267, %v675, -inf
    %690 = vmax.xlane.f32.xlu0 %v689
    %v691 = vpop.xlane.xlu0 %690
    %v692 = vsel %vm267, %v680, -inf
    %693 = vmax.xlane.f32.xlu0 %v692
    %v694 = vpop.xlane.xlu0 %693
    %v695 = vsub.f32 %v665, %v685
    %v696 = vsub.f32 %v670, %v688
    %v697 = vsub.f32 %v675, %v691
    %v698 = vsub.f32 %v680, %v694
    %v699 = vmul.f32 %v695, 1.442695
    %v700 = vpow.pop %v699
    %v701 = vmul.f32 %v696, 1.442695
    %v702 = vpow.pop %v701
    %v703 = vmul.f32 %v697, 1.442695
    %v704 = vpow.pop %v703
    %v705 = vmul.f32 %v698, 1.442695
    %v706 = vpow.pop %v705
    %v707 = vsel %vm267, %v700, 0.0
    %708 = vadd.xlane.f32.xlu0 %v707
    %v709 = vpop.xlane.xlu0 %708
    %v710 = vsel %vm267, %v702, 0.0
    %711 = vadd.xlane.f32.xlu0 %v710
    %v712 = vpop.xlane.xlu0 %711
    %v713 = vsel %vm267, %v704, 0.0
    %714 = vadd.xlane.f32.xlu0 %v713
    %v715 = vpop.xlane.xlu0 %714
    %v716 = vsel %vm267, %v706, 0.0
    %717 = vadd.xlane.f32.xlu0 %v716
    %v718 = vpop.xlane.xlu0 %717
    %v719 = vrcp.pop %v709
    %v720 = vrcp.pop %v712
    %v721 = vrcp.pop %v715
    %v722 = vrcp.pop %v718
    %v723 = vmul.f32 %v700, %v719
    %v724 = vmul.f32 %v702, %v720
    %v725 = vmul.f32 %v704, %v721
    %v726 = vmul.f32 %v706, %v722
    %v728 = vsel %vm267, %v723, 0
    %v731 = vsel %vm267, %v724, 0
    %v734 = vsel %vm267, %v725, 0
    %v737 = vsel %vm267, %v726, 0
    %739 = vmatprep.subr.mxu0 0.0
    %740 = vmatpush1.msra.mxu0 %v555
    %741 = vmatprep.subr.mxu0 0.0
    %742 = vmatpush1.msra.mxu0 %v560
    %743 = vmatprep.subr.mxu0 0.0
    %744 = vmatpush1.msra.mxu0 %v565
    %745 = vmatprep.subr.mxu0 0.0
    %746 = vmatpush1.msra.mxu0 %v570
    %747 = vmatprep.subr.mxu0 0.0
    %748 = vmatpush1.msra.mxu0 0.0
    %749 = vmatprep.subr.mxu0 0.0
    %750 = vmatpush1.msra.mxu0 0.0
    %751 = vmatprep.subr.mxu0 0.0
    %752 = vmatpush1.msra.mxu0 0.0
    %753 = vmatprep.subr.mxu0 0.0
    %754 = vmatpush1.msra.mxu0 0.0
    %755 = vmatprep.subr.mxu0 0.0
    %756 = vmatpush1.msra.mxu0 0.0
    %757 = vmatprep.subr.mxu0 0.0
    %758 = vmatpush1.msra.mxu0 0.0
    %759 = vmatprep.subr.mxu0 0.0
    %760 = vmatpush1.msra.mxu0 0.0
    %761 = vmatprep.subr.mxu0 0.0
    %762 = vmatpush1.msra.mxu0 0.0
    %763 = vmatprep.subr.mxu0 0.0
    %764 = vmatpush1.msra.mxu0 0.0
    %765 = vmatprep.subr.mxu0 0.0
    %766 = vmatpush1.msra.mxu0 0.0
    %767 = vmatprep.subr.mxu0 0.0
    %768 = vmatpush1.msra.mxu0 0.0
    %769 = vmatprep.subr.mxu0 0.0
    %770 = vmatpush1.msra.mxu0 0.0
    %771 = vmatprep.subr.mxu0 0.0
    %772 = vmatpush1.msra.mxu0 0.0
    %773 = vmatprep.subr.mxu0 0.0
    %774 = vmatpush1.msra.mxu0 0.0
    %775 = vmatprep.subr.mxu0 0.0
    %776 = vmatpush1.msra.mxu0 0.0
    %777 = vmatprep.subr.mxu0 0.0
    %778 = vmatpush1.msra.mxu0 0.0
    %779 = vmatprep.subr.mxu0 0.0
    %780 = vmatpush1.msra.mxu0 0.0
    %781 = vmatprep.subr.mxu0 0.0
    %782 = vmatpush1.msra.mxu0 0.0
    %783 = vmatprep.subr.mxu0 0.0
    %784 = vmatpush1.msra.mxu0 0.0
    %785 = vmatprep.subr.mxu0 0.0
    %786 = vmatpush1.msra.mxu0 0.0
    %787 = vmatprep.subr.mxu0 0.0
    %788 = vmatpush1.msra.mxu0 0.0
    %789 = vmatprep.subr.mxu0 0.0
    %790 = vmatpush1.msra.mxu0 0.0
    %791 = vmatprep.subr.mxu0 0.0
    %792 = vmatpush1.msra.mxu0 0.0
    %793 = vmatprep.subr.mxu0 0.0
    %794 = vmatpush1.msra.mxu0 0.0
    %795 = vmatprep.subr.mxu0 0.0
    %796 = vmatpush1.msra.mxu0 0.0
    %797 = vmatprep.subr.mxu0 0.0
    %798 = vmatpush1.msra.mxu0 0.0
    %799 = vmatprep.subr.mxu0 0.0
    %800 = vmatpush1.msra.mxu0 0.0
    %801 = vmatprep.subr.mxu0 0.0
    %802 = vmatpush1.msra.mxu0 0.0
    %803 = vmatprep.mubr.f32.mxu0 0.0
    %804 = vmatmul.mubr.f32.gmra.mrb[0].mxu0 %v728
    %v805 = vpop.f32.mrb[0].mxu0
    %v806 = vadd.f32 0.0, %v805
    %v807 = vpop.f32.mrb[0].mxu0
    %808 = vmatprep.mubr.f32.mxu0 0.0
    %809 = vmatmul.mubr.f32.gmra.mrb[0].mxu0 %v731
    %v810 = vpop.f32.mrb[0].mxu0
    %v811 = vadd.f32 0.0, %v810
    %v812 = vpop.f32.mrb[0].mxu0
    %813 = vmatprep.mubr.f32.mxu0 0.0
    %814 = vmatmul.mubr.f32.gmra.mrb[0].mxu0 %v734
    %v815 = vpop.f32.mrb[0].mxu0
    %v816 = vadd.f32 0.0, %v815
    %v817 = vpop.f32.mrb[0].mxu0
    %818 = vmatprep.mubr.f32.mxu0 0.0
    %819 = vmatmul.mubr.f32.gmra.mrb[0].mxu0 %v737
    %v820 = vpop.f32.mrb[0].mxu0
    %v821 = vadd.f32 0.0, %v820
    %v822 = vpop.f32.mrb[0].mxu0
    %823 = vdwg.mxu0
    %824 = vrot.lane.b32.xlu0 %v347, 120
    %v825 = vpop.permute.xlu0 %824
    %826 = vrot.lane.b32.xlu0 %v352, 120
    %v827 = vpop.permute.xlu0 %826
    %828 = vrot.lane.b32.xlu0 %v357, 120
    %v829 = vpop.permute.xlu0 %828
    %830 = vrot.lane.b32.xlu0 %v362, 120
    %v831 = vpop.permute.xlu0 %830
    %832 = vrot.lane.b32.xlu0 %v445, 120
    %v833 = vpop.permute.xlu0 %832
    %834 = vrot.lane.b32.xlu0 %v450, 120
    %v835 = vpop.permute.xlu0 %834
    %836 = vrot.lane.b32.xlu0 %v455, 120
    %v837 = vpop.permute.xlu0 %836
    %838 = vrot.lane.b32.xlu0 %v460, 120
    %v839 = vpop.permute.xlu0 %838
    %v840 = vsel %vm573, %v825, 0
    %v842 = vsel %vm573, %v827, 0
    %v844 = vsel %vm573, %v829, 0
    %v846 = vsel %vm573, %v831, 0
    %v848 = vsel %vm573, %v833, 0
    %v850 = vsel %vm573, %v835, 0
    %v852 = vsel %vm573, %v837, 0
    %v854 = vsel %vm573, %v839, 0
    %856 = vmatprep.subr.mxu0 0.0
    %857 = vmatpush1.xpose.msra.mxu0 %v848
    %858 = vmatprep.subr.mxu0 0.0
    %859 = vmatpush1.xpose.msra.mxu0 %v850
    %860 = vmatprep.subr.mxu0 0.0
    %861 = vmatpush1.xpose.msra.mxu0 %v852
    %862 = vmatprep.subr.mxu0 0.0
    %863 = vmatpush1.xpose.msra.mxu0 %v854
    %864 = vmatprep.subr.mxu0 0.0
    %865 = vmatpush1.xpose.msra.mxu0 0.0
    %866 = vmatprep.subr.mxu0 0.0
    %867 = vmatpush1.xpose.msra.mxu0 0.0
    %868 = vmatprep.subr.mxu0 0.0
    %869 = vmatpush1.xpose.msra.mxu0 0.0
    %870 = vmatprep.subr.mxu0 0.0
    %871 = vmatpush1.xpose.msra.mxu0 0.0
    %872 = vmatprep.subr.mxu0 0.0
    %873 = vmatpush1.xpose.msra.mxu0 0.0
    %874 = vmatprep.subr.mxu0 0.0
    %875 = vmatpush1.xpose.msra.mxu0 0.0
    %876 = vmatprep.subr.mxu0 0.0
    %877 = vmatpush1.xpose.msra.mxu0 0.0
    %878 = vmatprep.subr.mxu0 0.0
    %879 = vmatpush1.xpose.msra.mxu0 0.0
    %880 = vmatprep.subr.mxu0 0.0
    %881 = vmatpush1.xpose.msra.mxu0 0.0
    %882 = vmatprep.subr.mxu0 0.0
    %883 = vmatpush1.xpose.msra.mxu0 0.0
    %884 = vmatprep.subr.mxu0 0.0
    %885 = vmatpush1.xpose.msra.mxu0 0.0
    %886 = vmatprep.subr.mxu0 0.0
    %887 = vmatpush1.xpose.msra.mxu0 0.0
    %888 = vmatprep.subr.mxu0 0.0
    %889 = vmatpush1.xpose.msra.mxu0 0.0
    %890 = vmatprep.subr.mxu0 0.0
    %891 = vmatpush1.xpose.msra.mxu0 0.0
    %892 = vmatprep.subr.mxu0 0.0
    %893 = vmatpush1.xpose.msra.mxu0 0.0
    %894 = vmatprep.subr.mxu0 0.0
    %895 = vmatpush1.xpose.msra.mxu0 0.0
    %896 = vmatprep.subr.mxu0 0.0
    %897 = vmatpush1.xpose.msra.mxu0 0.0
    %898 = vmatprep.subr.mxu0 0.0
    %899 = vmatpush1.xpose.msra.mxu0 0.0
    %900 = vmatprep.subr.mxu0 0.0
    %901 = vmatpush1.xpose.msra.mxu0 0.0
    %902 = vmatprep.subr.mxu0 0.0
    %903 = vmatpush1.xpose.msra.mxu0 0.0
    %904 = vmatprep.subr.mxu0 0.0
    %905 = vmatpush1.xpose.msra.mxu0 0.0
    %906 = vmatprep.subr.mxu0 0.0
    %907 = vmatpush1.xpose.msra.mxu0 0.0
    %908 = vmatprep.subr.mxu0 0.0
    %909 = vmatpush1.xpose.msra.mxu0 0.0
    %910 = vmatprep.subr.mxu0 0.0
    %911 = vmatpush1.xpose.msra.mxu0 0.0
    %912 = vmatprep.subr.mxu0 0.0
    %913 = vmatpush1.xpose.msra.mxu0 0.0
    %914 = vmatprep.subr.mxu0 0.0
    %915 = vmatpush1.xpose.msra.mxu0 0.0
    %916 = vmatprep.subr.mxu0 0.0
    %917 = vmatpush1.xpose.msra.mxu0 0.0
    %918 = vmatprep.subr.mxu0 0.0
    %919 = vmatpush1.xpose.msra.mxu0 0.0
    %920 = vmatprep.mubr.f32.mxu0 0.0
    %921 = vmatmul.mubr.f32.gmra.mrb[0].mxu0 %v840
    %v922 = vpop.f32.mrb[0].mxu0
    %v923 = vadd.f32 %v140, %v922
    %v924 = vpop.f32.mrb[0].mxu0
    %925 = vmatprep.mubr.f32.mxu0 0.0
    %926 = vmatmul.mubr.f32.gmra.mrb[0].mxu0 %v842
    %v927 = vpop.f32.mrb[0].mxu0
    %v928 = vadd.f32 %v141, %v927
    %v929 = vpop.f32.mrb[0].mxu0
    %930 = vmatprep.mubr.f32.mxu0 0.0
    %931 = vmatmul.mubr.f32.gmra.mrb[0].mxu0 %v844
    %v932 = vpop.f32.mrb[0].mxu0
    %v933 = vadd.f32 %v142, %v932
    %v934 = vpop.f32.mrb[0].mxu0
    %935 = vmatprep.mubr.f32.mxu0 0.0
    %936 = vmatmul.mubr.f32.gmra.mrb[0].mxu0 %v846
    %v937 = vpop.f32.mrb[0].mxu0
    %v938 = vadd.f32 %v143, %v937
    %v939 = vpop.f32.mrb[0].mxu0
    %940 = vdwg.mxu0
    %v941 = vsel %vm267, %v923, -inf
    %942 = vmax.xlane.f32.xlu0 %v941
    %v943 = vpop.xlane.xlu0 %942
    %v944 = vsel %vm267, %v928, -inf
    %945 = vmax.xlane.f32.xlu0 %v944
    %v946 = vpop.xlane.xlu0 %945
    %v947 = vsel %vm267, %v933, -inf
    %948 = vmax.xlane.f32.xlu0 %v947
    %v949 = vpop.xlane.xlu0 %948
    %v950 = vsel %vm267, %v938, -inf
    %951 = vmax.xlane.f32.xlu0 %v950
    %v952 = vpop.xlane.xlu0 %951
    %v953 = vsub.f32 %v923, %v943
    %v954 = vsub.f32 %v928, %v946
    %v955 = vsub.f32 %v933, %v949
    %v956 = vsub.f32 %v938, %v952
    %v957 = vmul.f32 %v953, 1.442695
    %v958 = vpow.pop %v957
    %v959 = vmul.f32 %v954, 1.442695
    %v960 = vpow.pop %v959
    %v961 = vmul.f32 %v955, 1.442695
    %v962 = vpow.pop %v961
    %v963 = vmul.f32 %v956, 1.442695
    %v964 = vpow.pop %v963
    %v965 = vsel %vm267, %v958, 0.0
    %966 = vadd.xlane.f32.xlu0 %v965
    %v967 = vpop.xlane.xlu0 %966
    %v968 = vsel %vm267, %v960, 0.0
    %969 = vadd.xlane.f32.xlu0 %v968
    %v970 = vpop.xlane.xlu0 %969
    %v971 = vsel %vm267, %v962, 0.0
    %972 = vadd.xlane.f32.xlu0 %v971
    %v973 = vpop.xlane.xlu0 %972
    %v974 = vsel %vm267, %v964, 0.0
    %975 = vadd.xlane.f32.xlu0 %v974
    %v976 = vpop.xlane.xlu0 %975
    %v977 = vrcp.pop %v967
    %v978 = vrcp.pop %v970
    %v979 = vrcp.pop %v973
    %v980 = vrcp.pop %v976
    %v981 = vmul.f32 %v958, %v977
    %v982 = vmul.f32 %v960, %v978
    %v983 = vmul.f32 %v962, %v979
    %v984 = vmul.f32 %v964, %v980
    %989 = vrot.lane.b32.xlu0 %v555, 120
    %v990 = vpop.permute.xlu0 %989
    %991 = vrot.lane.b32.xlu0 %v560, 120
    %v992 = vpop.permute.xlu0 %991
    %993 = vrot.lane.b32.xlu0 %v565, 120
    %v994 = vpop.permute.xlu0 %993
    %995 = vrot.lane.b32.xlu0 %v570, 120
    %v996 = vpop.permute.xlu0 %995
    %v1002 = vsel %vm267, %v981, 0
    %v1005 = vsel %vm267, %v982, 0
    %v1008 = vsel %vm267, %v983, 0
    %v1011 = vsel %vm267, %v984, 0
    %1013 = vmatprep.subr.mxu0 0.0
    %1014 = vmatpush1.msra.mxu0 %v990
    %1015 = vmatprep.subr.mxu0 0.0
    %1016 = vmatpush1.msra.mxu0 %v992
    %1017 = vmatprep.subr.mxu0 0.0
    %1018 = vmatpush1.msra.mxu0 %v994
    %1019 = vmatprep.subr.mxu0 0.0
    %1020 = vmatpush1.msra.mxu0 %v996
    %1021 = vmatprep.subr.mxu0 0.0
    %1022 = vmatpush1.msra.mxu0 0.0
    %1023 = vmatprep.subr.mxu0 0.0
    %1024 = vmatpush1.msra.mxu0 0.0
    %1025 = vmatprep.subr.mxu0 0.0
    %1026 = vmatpush1.msra.mxu0 0.0
    %1027 = vmatprep.subr.mxu0 0.0
    %1028 = vmatpush1.msra.mxu0 0.0
    %1029 = vmatprep.subr.mxu0 0.0
    %1030 = vmatpush1.msra.mxu0 0.0
    %1031 = vmatprep.subr.mxu0 0.0
    %1032 = vmatpush1.msra.mxu0 0.0
    %1033 = vmatprep.subr.mxu0 0.0
    %1034 = vmatpush1.msra.mxu0 0.0
    %1035 = vmatprep.subr.mxu0 0.0
    %1036 = vmatpush1.msra.mxu0 0.0
    %1037 = vmatprep.subr.mxu0 0.0
    %1038 = vmatpush1.msra.mxu0 0.0
    %1039 = vmatprep.subr.mxu0 0.0
    %1040 = vmatpush1.msra.mxu0 0.0
    %1041 = vmatprep.subr.mxu0 0.0
    %1042 = vmatpush1.msra.mxu0 0.0
    %1043 = vmatprep.subr.mxu0 0.0
    %1044 = vmatpush1.msra.mxu0 0.0
    %1045 = vmatprep.subr.mxu0 0.0
    %1046 = vmatpush1.msra.mxu0 0.0
    %1047 = vmatprep.subr.mxu0 0.0
    %1048 = vmatpush1.msra.mxu0 0.0
    %1049 = vmatprep.subr.mxu0 0.0
    %1050 = vmatpush1.msra.mxu0 0.0
    %1051 = vmatprep.subr.mxu0 0.0
    %1052 = vmatpush1.msra.mxu0 0.0
    %1053 = vmatprep.subr.mxu0 0.0
    %1054 = vmatpush1.msra.mxu0 0.0
    %1055 = vmatprep.subr.mxu0 0.0
    %1056 = vmatpush1.msra.mxu0 0.0
    %1057 = vmatprep.subr.mxu0 0.0
    %1058 = vmatpush1.msra.mxu0 0.0
    %1059 = vmatprep.subr.mxu0 0.0
    %1060 = vmatpush1.msra.mxu0 0.0
    %1061 = vmatprep.subr.mxu0 0.0
    %1062 = vmatpush1.msra.mxu0 0.0
    %1063 = vmatprep.subr.mxu0 0.0
    %1064 = vmatpush1.msra.mxu0 0.0
    %1065 = vmatprep.subr.mxu0 0.0
    %1066 = vmatpush1.msra.mxu0 0.0
    %1067 = vmatprep.subr.mxu0 0.0
    %1068 = vmatpush1.msra.mxu0 0.0
    %1069 = vmatprep.subr.mxu0 0.0
    %1070 = vmatpush1.msra.mxu0 0.0
    %1071 = vmatprep.subr.mxu0 0.0
    %1072 = vmatpush1.msra.mxu0 0.0
    %1073 = vmatprep.subr.mxu0 0.0
    %1074 = vmatpush1.msra.mxu0 0.0
    %1075 = vmatprep.subr.mxu0 0.0
    %1076 = vmatpush1.msra.mxu0 0.0
    %1077 = vmatprep.mubr.f32.mxu0 0.0
    %1078 = vmatmul.mubr.f32.gmra.mrb[0].mxu0 %v1002
    %v1079 = vpop.f32.mrb[0].mxu0
    %v1080 = vadd.f32 0.0, %v1079
    %v1081 = vpop.f32.mrb[0].mxu0
    %1082 = vmatprep.mubr.f32.mxu0 0.0
    %1083 = vmatmul.mubr.f32.gmra.mrb[0].mxu0 %v1005
    %v1084 = vpop.f32.mrb[0].mxu0
    %v1085 = vadd.f32 0.0, %v1084
    %v1086 = vpop.f32.mrb[0].mxu0
    %1087 = vmatprep.mubr.f32.mxu0 0.0
    %1088 = vmatmul.mubr.f32.gmra.mrb[0].mxu0 %v1008
    %v1089 = vpop.f32.mrb[0].mxu0
    %v1090 = vadd.f32 0.0, %v1089
    %v1091 = vpop.f32.mrb[0].mxu0
    %1092 = vmatprep.mubr.f32.mxu0 0.0
    %1093 = vmatmul.mubr.f32.gmra.mrb[0].mxu0 %v1011
    %v1094 = vpop.f32.mrb[0].mxu0
    %v1095 = vadd.f32 0.0, %v1094
    %v1096 = vpop.f32.mrb[0].mxu0
    %1097 = vdwg.mxu0
    %1098 = vrot.lane.b32.xlu0 %v347, 112
    %v1099 = vpop.permute.xlu0 %1098
    %1100 = vrot.lane.b32.xlu0 %v352, 112
    %v1101 = vpop.permute.xlu0 %1100
    %1102 = vrot.lane.b32.xlu0 %v357, 112
    %v1103 = vpop.permute.xlu0 %1102
    %1104 = vrot.lane.b32.xlu0 %v362, 112
    %v1105 = vpop.permute.xlu0 %1104
    %1106 = vrot.lane.b32.xlu0 %v445, 112
    %v1107 = vpop.permute.xlu0 %1106
    %1108 = vrot.lane.b32.xlu0 %v450, 112
    %v1109 = vpop.permute.xlu0 %1108
    %1110 = vrot.lane.b32.xlu0 %v455, 112
    %v1111 = vpop.permute.xlu0 %1110
    %1112 = vrot.lane.b32.xlu0 %v460, 112
    %v1113 = vpop.permute.xlu0 %1112
    %v1114 = vsel %vm573, %v1099, 0
    %v1116 = vsel %vm573, %v1101, 0
    %v1118 = vsel %vm573, %v1103, 0
    %v1120 = vsel %vm573, %v1105, 0
    %v1122 = vsel %vm573, %v1107, 0
    %v1124 = vsel %vm573, %v1109, 0
    %v1126 = vsel %vm573, %v1111, 0
    %v1128 = vsel %vm573, %v1113, 0
    %1130 = vmatprep.subr.mxu0 0.0
    %1131 = vmatpush1.xpose.msra.mxu0 %v1122
    %1132 = vmatprep.subr.mxu0 0.0
    %1133 = vmatpush1.xpose.msra.mxu0 %v1124
    %1134 = vmatprep.subr.mxu0 0.0
    %1135 = vmatpush1.xpose.msra.mxu0 %v1126
    %1136 = vmatprep.subr.mxu0 0.0
    %1137 = vmatpush1.xpose.msra.mxu0 %v1128
    %1138 = vmatprep.subr.mxu0 0.0
    %1139 = vmatpush1.xpose.msra.mxu0 0.0
    %1140 = vmatprep.subr.mxu0 0.0
    %1141 = vmatpush1.xpose.msra.mxu0 0.0
    %1142 = vmatprep.subr.mxu0 0.0
    %1143 = vmatpush1.xpose.msra.mxu0 0.0
    %1144 = vmatprep.subr.mxu0 0.0
    %1145 = vmatpush1.xpose.msra.mxu0 0.0
    %1146 = vmatprep.subr.mxu0 0.0
    %1147 = vmatpush1.xpose.msra.mxu0 0.0
    %1148 = vmatprep.subr.mxu0 0.0
    %1149 = vmatpush1.xpose.msra.mxu0 0.0
    %1150 = vmatprep.subr.mxu0 0.0
    %1151 = vmatpush1.xpose.msra.mxu0 0.0
    %1152 = vmatprep.subr.mxu0 0.0
    %1153 = vmatpush1.xpose.msra.mxu0 0.0
    %1154 = vmatprep.subr.mxu0 0.0
    %1155 = vmatpush1.xpose.msra.mxu0 0.0
    %1156 = vmatprep.subr.mxu0 0.0
    %1157 = vmatpush1.xpose.msra.mxu0 0.0
    %1158 = vmatprep.subr.mxu0 0.0
    %1159 = vmatpush1.xpose.msra.mxu0 0.0
    %1160 = vmatprep.subr.mxu0 0.0
    %1161 = vmatpush1.xpose.msra.mxu0 0.0
    %1162 = vmatprep.subr.mxu0 0.0
    %1163 = vmatpush1.xpose.msra.mxu0 0.0
    %1164 = vmatprep.subr.mxu0 0.0
    %1165 = vmatpush1.xpose.msra.mxu0 0.0
    %1166 = vmatprep.subr.mxu0 0.0
    %1167 = vmatpush1.xpose.msra.mxu0 0.0
    %1168 = vmatprep.subr.mxu0 0.0
    %1169 = vmatpush1.xpose.msra.mxu0 0.0
    %1170 = vmatprep.subr.mxu0 0.0
    %1171 = vmatpush1.xpose.msra.mxu0 0.0
    %1172 = vmatprep.subr.mxu0 0.0
    %1173 = vmatpush1.xpose.msra.mxu0 0.0
    %1174 = vmatprep.subr.mxu0 0.0
    %1175 = vmatpush1.xpose.msra.mxu0 0.0
    %1176 = vmatprep.subr.mxu0 0.0
    %1177 = vmatpush1.xpose.msra.mxu0 0.0
    %1178 = vmatprep.subr.mxu0 0.0
    %1179 = vmatpush1.xpose.msra.mxu0 0.0
    %1180 = vmatprep.subr.mxu0 0.0
    %1181 = vmatpush1.xpose.msra.mxu0 0.0
    %1182 = vmatprep.subr.mxu0 0.0
    %1183 = vmatpush1.xpose.msra.mxu0 0.0
    %1184 = vmatprep.subr.mxu0 0.0
    %1185 = vmatpush1.xpose.msra.mxu0 0.0
    %1186 = vmatprep.subr.mxu0 0.0
    %1187 = vmatpush1.xpose.msra.mxu0 0.0
    %1188 = vmatprep.subr.mxu0 0.0
    %1189 = vmatpush1.xpose.msra.mxu0 0.0
    %1190 = vmatprep.subr.mxu0 0.0
    %1191 = vmatpush1.xpose.msra.mxu0 0.0
    %1192 = vmatprep.subr.mxu0 0.0
    %1193 = vmatpush1.xpose.msra.mxu0 0.0
    %1194 = vmatprep.mubr.f32.mxu0 0.0
    %1195 = vmatmul.mubr.f32.gmra.mrb[0].mxu0 %v1114
    %v1196 = vpop.f32.mrb[0].mxu0
    %v1197 = vadd.f32 %v140, %v1196
    %v1198 = vpop.f32.mrb[0].mxu0
    %1199 = vmatprep.mubr.f32.mxu0 0.0
    %1200 = vmatmul.mubr.f32.gmra.mrb[0].mxu0 %v1116
    %v1201 = vpop.f32.mrb[0].mxu0
    %v1202 = vadd.f32 %v141, %v1201
    %v1203 = vpop.f32.mrb[0].mxu0
    %1204 = vmatprep.mubr.f32.mxu0 0.0
    %1205 = vmatmul.mubr.f32.gmra.mrb[0].mxu0 %v1118
    %v1206 = vpop.f32.mrb[0].mxu0
    %v1207 = vadd.f32 %v142, %v1206
    %v1208 = vpop.f32.mrb[0].mxu0
    %1209 = vmatprep.mubr.f32.mxu0 0.0
    %1210 = vmatmul.mubr.f32.gmra.mrb[0].mxu0 %v1120
    %v1211 = vpop.f32.mrb[0].mxu0
    %v1212 = vadd.f32 %v143, %v1211
    %v1213 = vpop.f32.mrb[0].mxu0
    %1214 = vdwg.mxu0
    %v1215 = vsel %vm267, %v1197, -inf
    %1216 = vmax.xlane.f32.xlu0 %v1215
    %v1217 = vpop.xlane.xlu0 %1216
    %v1218 = vsel %vm267, %v1202, -inf
    %1219 = vmax.xlane.f32.xlu0 %v1218
    %v1220 = vpop.xlane.xlu0 %1219
    %v1221 = vsel %vm267, %v1207, -inf
    %1222 = vmax.xlane.f32.xlu0 %v1221
    %v1223 = vpop.xlane.xlu0 %1222
    %v1224 = vsel %vm267, %v1212, -inf
    %1225 = vmax.xlane.f32.xlu0 %v1224
    %v1226 = vpop.xlane.xlu0 %1225
    %v1227 = vsub.f32 %v1197, %v1217
    %v1228 = vsub.f32 %v1202, %v1220
    %v1229 = vsub.f32 %v1207, %v1223
    %v1230 = vsub.f32 %v1212, %v1226
    %v1231 = vmul.f32 %v1227, 1.442695
    %v1232 = vpow.pop %v1231
    %v1233 = vmul.f32 %v1228, 1.442695
    %v1234 = vpow.pop %v1233
    %v1235 = vmul.f32 %v1229, 1.442695
    %v1236 = vpow.pop %v1235
    %v1237 = vmul.f32 %v1230, 1.442695
    %v1238 = vpow.pop %v1237
    %v1239 = vsel %vm267, %v1232, 0.0
    %1240 = vadd.xlane.f32.xlu0 %v1239
    %v1241 = vpop.xlane.xlu0 %1240
    %v1242 = vsel %vm267, %v1234, 0.0
    %1243 = vadd.xlane.f32.xlu0 %v1242
    %v1244 = vpop.xlane.xlu0 %1243
    %v1245 = vsel %vm267, %v1236, 0.0
    %1246 = vadd.xlane.f32.xlu0 %v1245
    %v1247 = vpop.xlane.xlu0 %1246
    %v1248 = vsel %vm267, %v1238, 0.0
    %1249 = vadd.xlane.f32.xlu0 %v1248
    %v1250 = vpop.xlane.xlu0 %1249
    %v1251 = vrcp.pop %v1241
    %v1252 = vrcp.pop %v1244
    %v1253 = vrcp.pop %v1247
    %v1254 = vrcp.pop %v1250
    %v1255 = vmul.f32 %v1232, %v1251
    %v1256 = vmul.f32 %v1234, %v1252
    %v1257 = vmul.f32 %v1236, %v1253
    %v1258 = vmul.f32 %v1238, %v1254
    %1259 = vrot.lane.b32.xlu0 %v555, 112
    %v1260 = vpop.permute.xlu0 %1259
    %1261 = vrot.lane.b32.xlu0 %v560, 112
    %v1262 = vpop.permute.xlu0 %1261
    %1263 = vrot.lane.b32.xlu0 %v565, 112
    %v1264 = vpop.permute.xlu0 %1263
    %1265 = vrot.lane.b32.xlu0 %v570, 112
    %v1266 = vpop.permute.xlu0 %1265
    %v1272 = vsel %vm267, %v1255, 0
    %v1275 = vsel %vm267, %v1256, 0
    %v1278 = vsel %vm267, %v1257, 0
    %v1281 = vsel %vm267, %v1258, 0
    %1283 = vmatprep.subr.mxu0 0.0
    %1284 = vmatpush1.msra.mxu0 %v1260
    %1285 = vmatprep.subr.mxu0 0.0
    %1286 = vmatpush1.msra.mxu0 %v1262
    %1287 = vmatprep.subr.mxu0 0.0
    %1288 = vmatpush1.msra.mxu0 %v1264
    %1289 = vmatprep.subr.mxu0 0.0
    %1290 = vmatpush1.msra.mxu0 %v1266
    %1291 = vmatprep.subr.mxu0 0.0
    %1292 = vmatpush1.msra.mxu0 0.0
    %1293 = vmatprep.subr.mxu0 0.0
    %1294 = vmatpush1.msra.mxu0 0.0
    %1295 = vmatprep.subr.mxu0 0.0
    %1296 = vmatpush1.msra.mxu0 0.0
    %1297 = vmatprep.subr.mxu0 0.0
    %1298 = vmatpush1.msra.mxu0 0.0
    %1299 = vmatprep.subr.mxu0 0.0
    %1300 = vmatpush1.msra.mxu0 0.0
    %1301 = vmatprep.subr.mxu0 0.0
    %1302 = vmatpush1.msra.mxu0 0.0
    %1303 = vmatprep.subr.mxu0 0.0
    %1304 = vmatpush1.msra.mxu0 0.0
    %1305 = vmatprep.subr.mxu0 0.0
    %1306 = vmatpush1.msra.mxu0 0.0
    %1307 = vmatprep.subr.mxu0 0.0
    %1308 = vmatpush1.msra.mxu0 0.0
    %1309 = vmatprep.subr.mxu0 0.0
    %1310 = vmatpush1.msra.mxu0 0.0
    %1311 = vmatprep.subr.mxu0 0.0
    %1312 = vmatpush1.msra.mxu0 0.0
    %1313 = vmatprep.subr.mxu0 0.0
    %1314 = vmatpush1.msra.mxu0 0.0
    %1315 = vmatprep.subr.mxu0 0.0
    %1316 = vmatpush1.msra.mxu0 0.0
    %1317 = vmatprep.subr.mxu0 0.0
    %1318 = vmatpush1.msra.mxu0 0.0
    %1319 = vmatprep.subr.mxu0 0.0
    %1320 = vmatpush1.msra.mxu0 0.0
    %1321 = vmatprep.subr.mxu0 0.0
    %1322 = vmatpush1.msra.mxu0 0.0
    %1323 = vmatprep.subr.mxu0 0.0
    %1324 = vmatpush1.msra.mxu0 0.0
    %1325 = vmatprep.subr.mxu0 0.0
    %1326 = vmatpush1.msra.mxu0 0.0
    %1327 = vmatprep.subr.mxu0 0.0
    %1328 = vmatpush1.msra.mxu0 0.0
    %1329 = vmatprep.subr.mxu0 0.0
    %1330 = vmatpush1.msra.mxu0 0.0
    %1331 = vmatprep.subr.mxu0 0.0
    %1332 = vmatpush1.msra.mxu0 0.0
    %1333 = vmatprep.subr.mxu0 0.0
    %1334 = vmatpush1.msra.mxu0 0.0
    %1335 = vmatprep.subr.mxu0 0.0
    %1336 = vmatpush1.msra.mxu0 0.0
    %1337 = vmatprep.subr.mxu0 0.0
    %1338 = vmatpush1.msra.mxu0 0.0
    %1339 = vmatprep.subr.mxu0 0.0
    %1340 = vmatpush1.msra.mxu0 0.0
    %1341 = vmatprep.subr.mxu0 0.0
    %1342 = vmatpush1.msra.mxu0 0.0
    %1343 = vmatprep.subr.mxu0 0.0
    %1344 = vmatpush1.msra.mxu0 0.0
    %1345 = vmatprep.subr.mxu0 0.0
    %1346 = vmatpush1.msra.mxu0 0.0
    %1347 = vmatprep.mubr.f32.mxu0 0.0
    %1348 = vmatmul.mubr.f32.gmra.mrb[0].mxu0 %v1272
    %v1349 = vpop.f32.mrb[0].mxu0
    %v1350 = vadd.f32 0.0, %v1349
    %v1351 = vpop.f32.mrb[0].mxu0
    %1352 = vmatprep.mubr.f32.mxu0 0.0
    %1353 = vmatmul.mubr.f32.gmra.mrb[0].mxu0 %v1275
    %v1354 = vpop.f32.mrb[0].mxu0
    %v1355 = vadd.f32 0.0, %v1354
    %v1356 = vpop.f32.mrb[0].mxu0
    %1357 = vmatprep.mubr.f32.mxu0 0.0
    %1358 = vmatmul.mubr.f32.gmra.mrb[0].mxu0 %v1278
    %v1359 = vpop.f32.mrb[0].mxu0
    %v1360 = vadd.f32 0.0, %v1359
    %v1361 = vpop.f32.mrb[0].mxu0
    %1362 = vmatprep.mubr.f32.mxu0 0.0
    %1363 = vmatmul.mubr.f32.gmra.mrb[0].mxu0 %v1281
    %v1364 = vpop.f32.mrb[0].mxu0
    %v1365 = vadd.f32 0.0, %v1364
    %v1366 = vpop.f32.mrb[0].mxu0
    %1367 = vdwg.mxu0
    %1368 = vrot.lane.b32.xlu0 %v347, 104
    %v1369 = vpop.permute.xlu0 %1368
    %1370 = vrot.lane.b32.xlu0 %v352, 104
    %v1371 = vpop.permute.xlu0 %1370
    %1372 = vrot.lane.b32.xlu0 %v357, 104
    %v1373 = vpop.permute.xlu0 %1372
    %1374 = vrot.lane.b32.xlu0 %v362, 104
    %v1375 = vpop.permute.xlu0 %1374
    %1376 = vrot.lane.b32.xlu0 %v445, 104
    %v1377 = vpop.permute.xlu0 %1376
    %1378 = vrot.lane.b32.xlu0 %v450, 104
    %v1379 = vpop.permute.xlu0 %1378
    %1380 = vrot.lane.b32.xlu0 %v455, 104
    %v1381 = vpop.permute.xlu0 %1380
    %1382 = vrot.lane.b32.xlu0 %v460, 104
    %v1383 = vpop.permute.xlu0 %1382
    %v1384 = vsel %vm573, %v1369, 0
    %v1386 = vsel %vm573, %v1371, 0
    %v1388 = vsel %vm573, %v1373, 0
    %v1390 = vsel %vm573, %v1375, 0
    %v1392 = vsel %vm573, %v1377, 0
    %v1394 = vsel %vm573, %v1379, 0
    %v1396 = vsel %vm573, %v1381, 0
    %v1398 = vsel %vm573, %v1383, 0
    %1400 = vmatprep.subr.mxu0 0.0
    %1401 = vmatpush1.xpose.msra.mxu0 %v1392
    %1402 = vmatprep.subr.mxu0 0.0
    %1403 = vmatpush1.xpose.msra.mxu0 %v1394
    %1404 = vmatprep.subr.mxu0 0.0
    %1405 = vmatpush1.xpose.msra.mxu0 %v1396
    %1406 = vmatprep.subr.mxu0 0.0
    %1407 = vmatpush1.xpose.msra.mxu0 %v1398
    %1408 = vmatprep.subr.mxu0 0.0
    %1409 = vmatpush1.xpose.msra.mxu0 0.0
    %1410 = vmatprep.subr.mxu0 0.0
    %1411 = vmatpush1.xpose.msra.mxu0 0.0
    %1412 = vmatprep.subr.mxu0 0.0
    %1413 = vmatpush1.xpose.msra.mxu0 0.0
    %1414 = vmatprep.subr.mxu0 0.0
    %1415 = vmatpush1.xpose.msra.mxu0 0.0
    %1416 = vmatprep.subr.mxu0 0.0
    %1417 = vmatpush1.xpose.msra.mxu0 0.0
    %1418 = vmatprep.subr.mxu0 0.0
    %1419 = vmatpush1.xpose.msra.mxu0 0.0
    %1420 = vmatprep.subr.mxu0 0.0
    %1421 = vmatpush1.xpose.msra.mxu0 0.0
    %1422 = vmatprep.subr.mxu0 0.0
    %1423 = vmatpush1.xpose.msra.mxu0 0.0
    %1424 = vmatprep.subr.mxu0 0.0
    %1425 = vmatpush1.xpose.msra.mxu0 0.0
    %1426 = vmatprep.subr.mxu0 0.0
    %1427 = vmatpush1.xpose.msra.mxu0 0.0
    %1428 = vmatprep.subr.mxu0 0.0
    %1429 = vmatpush1.xpose.msra.mxu0 0.0
    %1430 = vmatprep.subr.mxu0 0.0
    %1431 = vmatpush1.xpose.msra.mxu0 0.0
    %1432 = vmatprep.subr.mxu0 0.0
    %1433 = vmatpush1.xpose.msra.mxu0 0.0
    %1434 = vmatprep.subr.mxu0 0.0
    %1435 = vmatpush1.xpose.msra.mxu0 0.0
    %1436 = vmatprep.subr.mxu0 0.0
    %1437 = vmatpush1.xpose.msra.mxu0 0.0
    %1438 = vmatprep.subr.mxu0 0.0
    %1439 = vmatpush1.xpose.msra.mxu0 0.0
    %1440 = vmatprep.subr.mxu0 0.0
    %1441 = vmatpush1.xpose.msra.mxu0 0.0
    %1442 = vmatprep.subr.mxu0 0.0
    %1443 = vmatpush1.xpose.msra.mxu0 0.0
    %1444 = vmatprep.subr.mxu0 0.0
    %1445 = vmatpush1.xpose.msra.mxu0 0.0
    %1446 = vmatprep.subr.mxu0 0.0
    %1447 = vmatpush1.xpose.msra.mxu0 0.0
    %1448 = vmatprep.subr.mxu0 0.0
    %1449 = vmatpush1.xpose.msra.mxu0 0.0
    %1450 = vmatprep.subr.mxu0 0.0
    %1451 = vmatpush1.xpose.msra.mxu0 0.0
    %1452 = vmatprep.subr.mxu0 0.0
    %1453 = vmatpush1.xpose.msra.mxu0 0.0
    %1454 = vmatprep.subr.mxu0 0.0
    %1455 = vmatpush1.xpose.msra.mxu0 0.0
    %1456 = vmatprep.subr.mxu0 0.0
    %1457 = vmatpush1.xpose.msra.mxu0 0.0
    %1458 = vmatprep.subr.mxu0 0.0
    %1459 = vmatpush1.xpose.msra.mxu0 0.0
    %1460 = vmatprep.subr.mxu0 0.0
    %1461 = vmatpush1.xpose.msra.mxu0 0.0
    %1462 = vmatprep.subr.mxu0 0.0
    %1463 = vmatpush1.xpose.msra.mxu0 0.0
    %1464 = vmatprep.mubr.f32.mxu0 0.0
    %1465 = vmatmul.mubr.f32.gmra.mrb[0].mxu0 %v1384
    %v1466 = vpop.f32.mrb[0].mxu0
    %v1467 = vadd.f32 %v140, %v1466
    %v1468 = vpop.f32.mrb[0].mxu0
    %1469 = vmatprep.mubr.f32.mxu0 0.0
    %1470 = vmatmul.mubr.f32.gmra.mrb[0].mxu0 %v1386
    %v1471 = vpop.f32.mrb[0].mxu0
    %v1472 = vadd.f32 %v141, %v1471
    %v1473 = vpop.f32.mrb[0].mxu0
    %1474 = vmatprep.mubr.f32.mxu0 0.0
    %1475 = vmatmul.mubr.f32.gmra.mrb[0].mxu0 %v1388
    %v1476 = vpop.f32.mrb[0].mxu0
    %v1477 = vadd.f32 %v142, %v1476
    %v1478 = vpop.f32.mrb[0].mxu0
    %1479 = vmatprep.mubr.f32.mxu0 0.0
    %1480 = vmatmul.mubr.f32.gmra.mrb[0].mxu0 %v1390
    %v1481 = vpop.f32.mrb[0].mxu0
    %v1482 = vadd.f32 %v143, %v1481
    %v1483 = vpop.f32.mrb[0].mxu0
    %1484 = vdwg.mxu0
    %v1485 = vsel %vm267, %v1467, -inf
    %1486 = vmax.xlane.f32.xlu0 %v1485
    %v1487 = vpop.xlane.xlu0 %1486
    %v1488 = vsel %vm267, %v1472, -inf
    %1489 = vmax.xlane.f32.xlu0 %v1488
    %v1490 = vpop.xlane.xlu0 %1489
    %v1491 = vsel %vm267, %v1477, -inf
    %1492 = vmax.xlane.f32.xlu0 %v1491
    %v1493 = vpop.xlane.xlu0 %1492
    %v1494 = vsel %vm267, %v1482, -inf
    %1495 = vmax.xlane.f32.xlu0 %v1494
    %v1496 = vpop.xlane.xlu0 %1495
    %v1497 = vsub.f32 %v1467, %v1487
    %v1498 = vsub.f32 %v1472, %v1490
    %v1499 = vsub.f32 %v1477, %v1493
    %v1500 = vsub.f32 %v1482, %v1496
    %v1501 = vmul.f32 %v1497, 1.442695
    %v1502 = vpow.pop %v1501
    %v1503 = vmul.f32 %v1498, 1.442695
    %v1504 = vpow.pop %v1503
    %v1505 = vmul.f32 %v1499, 1.442695
    %v1506 = vpow.pop %v1505
    %v1507 = vmul.f32 %v1500, 1.442695
    %v1508 = vpow.pop %v1507
    %v1509 = vsel %vm267, %v1502, 0.0
    %1510 = vadd.xlane.f32.xlu0 %v1509
    %v1511 = vpop.xlane.xlu0 %1510
    %v1512 = vsel %vm267, %v1504, 0.0
    %1513 = vadd.xlane.f32.xlu0 %v1512
    %v1514 = vpop.xlane.xlu0 %1513
    %v1515 = vsel %vm267, %v1506, 0.0
    %1516 = vadd.xlane.f32.xlu0 %v1515
    %v1517 = vpop.xlane.xlu0 %1516
    %v1518 = vsel %vm267, %v1508, 0.0
    %1519 = vadd.xlane.f32.xlu0 %v1518
    %v1520 = vpop.xlane.xlu0 %1519
    %v1521 = vrcp.pop %v1511
    %v1522 = vrcp.pop %v1514
    %v1523 = vrcp.pop %v1517
    %v1524 = vrcp.pop %v1520
    %v1525 = vmul.f32 %v1502, %v1521
    %v1526 = vmul.f32 %v1504, %v1522
    %v1527 = vmul.f32 %v1506, %v1523
    %v1528 = vmul.f32 %v1508, %v1524
    %1529 = vrot.lane.b32.xlu0 %v555, 104
    %v1530 = vpop.permute.xlu0 %1529
    %1531 = vrot.lane.b32.xlu0 %v560, 104
    %v1532 = vpop.permute.xlu0 %1531
    %1533 = vrot.lane.b32.xlu0 %v565, 104
    %v1534 = vpop.permute.xlu0 %1533
    %1535 = vrot.lane.b32.xlu0 %v570, 104
    %v1536 = vpop.permute.xlu0 %1535
    %v1542 = vsel %vm267, %v1525, 0
    %v1545 = vsel %vm267, %v1526, 0
    %v1548 = vsel %vm267, %v1527, 0
    %v1551 = vsel %vm267, %v1528, 0
    %1553 = vmatprep.subr.mxu0 0.0
    %1554 = vmatpush1.msra.mxu0 %v1530
    %1555 = vmatprep.subr.mxu0 0.0
    %1556 = vmatpush1.msra.mxu0 %v1532
    %1557 = vmatprep.subr.mxu0 0.0
    %1558 = vmatpush1.msra.mxu0 %v1534
    %1559 = vmatprep.subr.mxu0 0.0
    %1560 = vmatpush1.msra.mxu0 %v1536
    %1561 = vmatprep.subr.mxu0 0.0
    %1562 = vmatpush1.msra.mxu0 0.0
    %1563 = vmatprep.subr.mxu0 0.0
    %1564 = vmatpush1.msra.mxu0 0.0
    %1565 = vmatprep.subr.mxu0 0.0
    %1566 = vmatpush1.msra.mxu0 0.0
    %1567 = vmatprep.subr.mxu0 0.0
    %1568 = vmatpush1.msra.mxu0 0.0
    %1569 = vmatprep.subr.mxu0 0.0
    %1570 = vmatpush1.msra.mxu0 0.0
    %1571 = vmatprep.subr.mxu0 0.0
    %1572 = vmatpush1.msra.mxu0 0.0
    %1573 = vmatprep.subr.mxu0 0.0
    %1574 = vmatpush1.msra.mxu0 0.0
    %1575 = vmatprep.subr.mxu0 0.0
    %1576 = vmatpush1.msra.mxu0 0.0
    %1577 = vmatprep.subr.mxu0 0.0
    %1578 = vmatpush1.msra.mxu0 0.0
    %1579 = vmatprep.subr.mxu0 0.0
    %1580 = vmatpush1.msra.mxu0 0.0
    %1581 = vmatprep.subr.mxu0 0.0
    %1582 = vmatpush1.msra.mxu0 0.0
    %1583 = vmatprep.subr.mxu0 0.0
    %1584 = vmatpush1.msra.mxu0 0.0
    %1585 = vmatprep.subr.mxu0 0.0
    %1586 = vmatpush1.msra.mxu0 0.0
    %1587 = vmatprep.subr.mxu0 0.0
    %1588 = vmatpush1.msra.mxu0 0.0
    %1589 = vmatprep.subr.mxu0 0.0
    %1590 = vmatpush1.msra.mxu0 0.0
    %1591 = vmatprep.subr.mxu0 0.0
    %1592 = vmatpush1.msra.mxu0 0.0
    %1593 = vmatprep.subr.mxu0 0.0
    %1594 = vmatpush1.msra.mxu0 0.0
    %1595 = vmatprep.subr.mxu0 0.0
    %1596 = vmatpush1.msra.mxu0 0.0
    %1597 = vmatprep.subr.mxu0 0.0
    %1598 = vmatpush1.msra.mxu0 0.0
    %1599 = vmatprep.subr.mxu0 0.0
    %1600 = vmatpush1.msra.mxu0 0.0
    %1601 = vmatprep.subr.mxu0 0.0
    %1602 = vmatpush1.msra.mxu0 0.0
    %1603 = vmatprep.subr.mxu0 0.0
    %1604 = vmatpush1.msra.mxu0 0.0
    %1605 = vmatprep.subr.mxu0 0.0
    %1606 = vmatpush1.msra.mxu0 0.0
    %1607 = vmatprep.subr.mxu0 0.0
    %1608 = vmatpush1.msra.mxu0 0.0
    %1609 = vmatprep.subr.mxu0 0.0
    %1610 = vmatpush1.msra.mxu0 0.0
    %1611 = vmatprep.subr.mxu0 0.0
    %1612 = vmatpush1.msra.mxu0 0.0
    %1613 = vmatprep.subr.mxu0 0.0
    %1614 = vmatpush1.msra.mxu0 0.0
    %1615 = vmatprep.subr.mxu0 0.0
    %1616 = vmatpush1.msra.mxu0 0.0
    %1617 = vmatprep.mubr.f32.mxu0 0.0
    %1618 = vmatmul.mubr.f32.gmra.mrb[0].mxu0 %v1542
    %v1619 = vpop.f32.mrb[0].mxu0
    %v1620 = vadd.f32 0.0, %v1619
    %v1621 = vpop.f32.mrb[0].mxu0
    %1622 = vmatprep.mubr.f32.mxu0 0.0
    %1623 = vmatmul.mubr.f32.gmra.mrb[0].mxu0 %v1545
    %v1624 = vpop.f32.mrb[0].mxu0
    %v1625 = vadd.f32 0.0, %v1624
    %v1626 = vpop.f32.mrb[0].mxu0
    %1627 = vmatprep.mubr.f32.mxu0 0.0
    %1628 = vmatmul.mubr.f32.gmra.mrb[0].mxu0 %v1548
    %v1629 = vpop.f32.mrb[0].mxu0
    %v1630 = vadd.f32 0.0, %v1629
    %v1631 = vpop.f32.mrb[0].mxu0
    %1632 = vmatprep.mubr.f32.mxu0 0.0
    %1633 = vmatmul.mubr.f32.gmra.mrb[0].mxu0 %v1551
    %v1634 = vpop.f32.mrb[0].mxu0
    %v1635 = vadd.f32 0.0, %v1634
    %v1636 = vpop.f32.mrb[0].mxu0
    %1637 = vdwg.mxu0
    %1642 = vrot.lane.b32.xlu0 %v1080, 8
    %v1643 = vpop.permute.xlu0 %1642
    %1644 = vrot.lane.b32.xlu0 %v1085, 8
    %v1645 = vpop.permute.xlu0 %1644
    %1646 = vrot.lane.b32.xlu0 %v1090, 8
    %v1647 = vpop.permute.xlu0 %1646
    %1648 = vrot.lane.b32.xlu0 %v1095, 8
    %v1649 = vpop.permute.xlu0 %1648
    %1658 = vrot.lane.b32.xlu0 %v1350, 16
    %v1659 = vpop.permute.xlu0 %1658
    %1660 = vrot.lane.b32.xlu0 %v1355, 16
    %v1661 = vpop.permute.xlu0 %1660
    %1662 = vrot.lane.b32.xlu0 %v1360, 16
    %v1663 = vpop.permute.xlu0 %1662
    %1664 = vrot.lane.b32.xlu0 %v1365, 16
    %v1665 = vpop.permute.xlu0 %1664
    %1674 = vrot.lane.b32.xlu0 %v1620, 24
    %v1675 = vpop.permute.xlu0 %1674
    %1676 = vrot.lane.b32.xlu0 %v1625, 24
    %v1677 = vpop.permute.xlu0 %1676
    %1678 = vrot.lane.b32.xlu0 %v1630, 24
    %v1679 = vpop.permute.xlu0 %1678
    %1680 = vrot.lane.b32.xlu0 %v1635, 24
    %v1681 = vpop.permute.xlu0 %1680
    %v1686 = vsel %vm573, %v806, %v1643
    %v1687 = vsel %vm573, %v811, %v1645
    %v1688 = vsel %vm573, %v816, %v1647
    %v1689 = vsel %vm573, %v821, %v1649
    %vm1690 = vcmask 130048
    %v1691 = vsel %vm1690, %v1686, %v1659
    %v1692 = vsel %vm1690, %v1687, %v1661
    %v1693 = vsel %vm1690, %v1688, %v1663
    %v1694 = vsel %vm1690, %v1689, %v1665
    %vm1695 = vcmask 195584
    %v1696 = vsel %vm1695, %v1691, %v1675
    %v1697 = vsel %vm1695, %v1692, %v1677
    %v1698 = vsel %vm1695, %v1693, %v1679
    %v1699 = vsel %vm1695, %v1694, %v1681
    %s1700 = scalar_lea.vmem %s17, 96
    %v1701 = vld [vmem:[%s1700] sm:$0xff]
    %v1702 = vld [vmem:[%s1700 + $0x8] sm:$0xff]
    %v1703 = vld [vmem:[%s1700 + $0x10] sm:$0xff]
    %v1704 = vld [vmem:[%s1700 + $0x18] sm:$0xff]
    %s1705 = scalar_lea.vmem %s19, 3
    %v1706 = vld [vmem:[%s1705] sm:$0x1]
    %v1708 = vlaneseq
    %v1709 = vshrl.u32 %v1708, 7
    %v1710 = vsub.s32 0, %v1709
    %v1711 = vrot.slane %v1706, %v1710
    %v1714 = vsel %vm267, %v1696, 0
    %v1717 = vsel %vm267, %v1697, 0
    %v1720 = vsel %vm267, %v1698, 0
    %v1723 = vsel %vm267, %v1699, 0
    %1725 = vmatprep.subr.mxu0 0.0
    %1726 = vmatpush1.msra.mxu0 %v1701
    %1727 = vmatprep.subr.mxu0 0.0
    %1728 = vmatpush1.msra.mxu0 %v1702
    %1729 = vmatprep.subr.mxu0 0.0
    %1730 = vmatpush1.msra.mxu0 %v1703
    %1731 = vmatprep.subr.mxu0 0.0
    %1732 = vmatpush1.msra.mxu0 %v1704
    %1733 = vmatprep.subr.mxu0 0.0
    %1734 = vmatpush1.msra.mxu0 0.0
    %1735 = vmatprep.subr.mxu0 0.0
    %1736 = vmatpush1.msra.mxu0 0.0
    %1737 = vmatprep.subr.mxu0 0.0
    %1738 = vmatpush1.msra.mxu0 0.0
    %1739 = vmatprep.subr.mxu0 0.0
    %1740 = vmatpush1.msra.mxu0 0.0
    %1741 = vmatprep.subr.mxu0 0.0
    %1742 = vmatpush1.msra.mxu0 0.0
    %1743 = vmatprep.subr.mxu0 0.0
    %1744 = vmatpush1.msra.mxu0 0.0
    %1745 = vmatprep.subr.mxu0 0.0
    %1746 = vmatpush1.msra.mxu0 0.0
    %1747 = vmatprep.subr.mxu0 0.0
    %1748 = vmatpush1.msra.mxu0 0.0
    %1749 = vmatprep.subr.mxu0 0.0
    %1750 = vmatpush1.msra.mxu0 0.0
    %1751 = vmatprep.subr.mxu0 0.0
    %1752 = vmatpush1.msra.mxu0 0.0
    %1753 = vmatprep.subr.mxu0 0.0
    %1754 = vmatpush1.msra.mxu0 0.0
    %1755 = vmatprep.subr.mxu0 0.0
    %1756 = vmatpush1.msra.mxu0 0.0
    %1757 = vmatprep.subr.mxu0 0.0
    %1758 = vmatpush1.msra.mxu0 0.0
    %1759 = vmatprep.subr.mxu0 0.0
    %1760 = vmatpush1.msra.mxu0 0.0
    %1761 = vmatprep.subr.mxu0 0.0
    %1762 = vmatpush1.msra.mxu0 0.0
    %1763 = vmatprep.subr.mxu0 0.0
    %1764 = vmatpush1.msra.mxu0 0.0
    %1765 = vmatprep.subr.mxu0 0.0
    %1766 = vmatpush1.msra.mxu0 0.0
    %1767 = vmatprep.subr.mxu0 0.0
    %1768 = vmatpush1.msra.mxu0 0.0
    %1769 = vmatprep.subr.mxu0 0.0
    %1770 = vmatpush1.msra.mxu0 0.0
    %1771 = vmatprep.subr.mxu0 0.0
    %1772 = vmatpush1.msra.mxu0 0.0
    %1773 = vmatprep.subr.mxu0 0.0
    %1774 = vmatpush1.msra.mxu0 0.0
    %1775 = vmatprep.subr.mxu0 0.0
    %1776 = vmatpush1.msra.mxu0 0.0
    %1777 = vmatprep.subr.mxu0 0.0
    %1778 = vmatpush1.msra.mxu0 0.0
    %1779 = vmatprep.subr.mxu0 0.0
    %1780 = vmatpush1.msra.mxu0 0.0
    %1781 = vmatprep.subr.mxu0 0.0
    %1782 = vmatpush1.msra.mxu0 0.0
    %1783 = vmatprep.subr.mxu0 0.0
    %1784 = vmatpush1.msra.mxu0 0.0
    %1785 = vmatprep.subr.mxu0 0.0
    %1786 = vmatpush1.msra.mxu0 0.0
    %1787 = vmatprep.subr.mxu0 0.0
    %1788 = vmatpush1.msra.mxu0 0.0
    %1789 = vmatprep.mubr.f32.mxu0 0.0
    %1790 = vmatmul.mubr.f32.gmra.mrb[0].mxu0 %v1714
    %v1791 = vpop.f32.mrb[0].mxu0
    %v1792 = vadd.f32 %v1711, %v1791
    %v1793 = vpop.f32.mrb[0].mxu0
    %1794 = vmatprep.mubr.f32.mxu0 0.0
    %1795 = vmatmul.mubr.f32.gmra.mrb[0].mxu0 %v1717
    %v1796 = vpop.f32.mrb[0].mxu0
    %v1797 = vadd.f32 %v1711, %v1796
    %v1798 = vpop.f32.mrb[0].mxu0
    %1799 = vmatprep.mubr.f32.mxu0 0.0
    %1800 = vmatmul.mubr.f32.gmra.mrb[0].mxu0 %v1720
    %v1801 = vpop.f32.mrb[0].mxu0
    %v1802 = vadd.f32 %v1711, %v1801
    %v1803 = vpop.f32.mrb[0].mxu0
    %1804 = vmatprep.mubr.f32.mxu0 0.0
    %1805 = vmatmul.mubr.f32.gmra.mrb[0].mxu0 %v1723
    %v1806 = vpop.f32.mrb[0].mxu0
    %v1807 = vadd.f32 %v1711, %v1806
    %v1808 = vpop.f32.mrb[0].mxu0
    %1809 = vdwg.mxu0
    %v1810 = vadd.f32 %v234, %v1792
    %v1811 = vadd.f32 %v239, %v1797
    %v1812 = vadd.f32 %v244, %v1802
    %v1813 = vadd.f32 %v249, %v1807
    %v1814 = vld [vmem:[%s21] sm:$0x1]
    %s1815 = scalar_lea.vmem %s21, 1
    %v1816 = vld [vmem:[%s1815] sm:$0x1]
    %v1817 = vsel %vm267, %v1810, 0.0
    %1818 = vadd.xlane.f32.xlu0 %v1817
    %v1819 = vpop.xlane.xlu0 %1818
    %v1820 = vsel %vm267, %v1811, 0.0
    %1821 = vadd.xlane.f32.xlu0 %v1820
    %v1822 = vpop.xlane.xlu0 %1821
    %v1823 = vsel %vm267, %v1812, 0.0
    %1824 = vadd.xlane.f32.xlu0 %v1823
    %v1825 = vpop.xlane.xlu0 %1824
    %v1826 = vsel %vm267, %v1813, 0.0
    %1827 = vadd.xlane.f32.xlu0 %v1826
    %v1828 = vpop.xlane.xlu0 %1827
    %v1829 = vrcp.pop 32.0
    %v1830 = vmul.f32 %v1819, %v1829
    %v1831 = vmul.f32 %v1822, %v1829
    %v1832 = vmul.f32 %v1825, %v1829
    %v1833 = vmul.f32 %v1828, %v1829
    %v1834 = vsub.f32 %v1810, %v1830
    %v1835 = vsub.f32 %v1811, %v1831
    %v1836 = vsub.f32 %v1812, %v1832
    %v1837 = vsub.f32 %v1813, %v1833
    %v1838 = vmul.f32 %v1834, %v1834
    %v1839 = vmul.f32 %v1835, %v1835
    %v1840 = vmul.f32 %v1836, %v1836
    %v1841 = vmul.f32 %v1837, %v1837
    %v1842 = vsel %vm267, %v1838, 0.0
    %1843 = vadd.xlane.f32.xlu0 %v1842
    %v1844 = vpop.xlane.xlu0 %1843
    %v1845 = vsel %vm267, %v1839, 0.0
    %1846 = vadd.xlane.f32.xlu0 %v1845
    %v1847 = vpop.xlane.xlu0 %1846
    %v1848 = vsel %vm267, %v1840, 0.0
    %1849 = vadd.xlane.f32.xlu0 %v1848
    %v1850 = vpop.xlane.xlu0 %1849
    %v1851 = vsel %vm267, %v1841, 0.0
    %1852 = vadd.xlane.f32.xlu0 %v1851
    %v1853 = vpop.xlane.xlu0 %1852
    %v1854 = vmul.f32 %v1844, %v1829
    %v1855 = vmul.f32 %v1847, %v1829
    %v1856 = vmul.f32 %v1850, %v1829
    %v1857 = vmul.f32 %v1853, %v1829
    %v1858 = vadd.f32 %v1854, 1e-05
    %v1859 = vadd.f32 %v1855, 1e-05
    %v1860 = vadd.f32 %v1856, 1e-05
    %v1861 = vadd.f32 %v1857, 1e-05
    %v1862 = vrsqrt.pop %v1858
    %v1863 = vrsqrt.pop %v1859
    %v1864 = vrsqrt.pop %v1860
    %v1865 = vrsqrt.pop %v1861
    %v1866 = vmul.f32 %v1834, %v1862
    %v1867 = vmul.f32 %v1835, %v1863
    %v1868 = vmul.f32 %v1836, %v1864
    %v1869 = vmul.f32 %v1837, %v1865
    %v1871 = vlaneseq
    %v1872 = vshrl.u32 %v1871, 7
    %v1873 = vsub.s32 0, %v1872
    %v1874 = vrot.slane %v1814, %v1873
    %v1876 = vmul.f32 %v1866, %v1874
    %v1877 = vmul.f32 %v1867, %v1874
    %v1878 = vmul.f32 %v1868, %v1874
    %v1879 = vmul.f32 %v1869, %v1874
    %v1881 = vlaneseq
    %v1882 = vshrl.u32 %v1881, 7
    %v1883 = vsub.s32 0, %v1882
    %v1884 = vrot.slane %v1816, %v1883
    %v1886 = vadd.f32 %v1876, %v1884
    %v1887 = vadd.f32 %v1877, %v1884
    %v1888 = vadd.f32 %v1878, %v1884
    %v1889 = vadd.f32 %v1879, %v1884
    %v1890 = vld [vmem:[%s23] sm:$0xff]
    %v1891 = vld [vmem:[%s23 + $0x8] sm:$0xff]
    %v1892 = vld [vmem:[%s23 + $0x10] sm:$0xff]
    %v1893 = vld [vmem:[%s23 + $0x18] sm:$0xff]
    %v1894 = vld [vmem:[%s25] sm:$0x1]
    %v1896 = vlaneseq
    %v1897 = vshrl.u32 %v1896, 7
    %v1898 = vsub.s32 0, %v1897
    %v1899 = vrot.slane %v1894, %v1898
    %v1902 = vsel %vm267, %v1886, 0
    %v1905 = vsel %vm267, %v1887, 0
    %v1908 = vsel %vm267, %v1888, 0
    %v1911 = vsel %vm267, %v1889, 0
    %1913 = vmatprep.subr.mxu0 0.0
    %1914 = vmatpush1.msra.mxu0 %v1890
    %1915 = vmatprep.subr.mxu0 0.0
    %1916 = vmatpush1.msra.mxu0 %v1891
    %1917 = vmatprep.subr.mxu0 0.0
    %1918 = vmatpush1.msra.mxu0 %v1892
    %1919 = vmatprep.subr.mxu0 0.0
    %1920 = vmatpush1.msra.mxu0 %v1893
    %1921 = vmatprep.subr.mxu0 0.0
    %1922 = vmatpush1.msra.mxu0 0.0
    %1923 = vmatprep.subr.mxu0 0.0
    %1924 = vmatpush1.msra.mxu0 0.0
    %1925 = vmatprep.subr.mxu0 0.0
    %1926 = vmatpush1.msra.mxu0 0.0
    %1927 = vmatprep.subr.mxu0 0.0
    %1928 = vmatpush1.msra.mxu0 0.0
    %1929 = vmatprep.subr.mxu0 0.0
    %1930 = vmatpush1.msra.mxu0 0.0
    %1931 = vmatprep.subr.mxu0 0.0
    %1932 = vmatpush1.msra.mxu0 0.0
    %1933 = vmatprep.subr.mxu0 0.0
    %1934 = vmatpush1.msra.mxu0 0.0
    %1935 = vmatprep.subr.mxu0 0.0
    %1936 = vmatpush1.msra.mxu0 0.0
    %1937 = vmatprep.subr.mxu0 0.0
    %1938 = vmatpush1.msra.mxu0 0.0
    %1939 = vmatprep.subr.mxu0 0.0
    %1940 = vmatpush1.msra.mxu0 0.0
    %1941 = vmatprep.subr.mxu0 0.0
    %1942 = vmatpush1.msra.mxu0 0.0
    %1943 = vmatprep.subr.mxu0 0.0
    %1944 = vmatpush1.msra.mxu0 0.0
    %1945 = vmatprep.subr.mxu0 0.0
    %1946 = vmatpush1.msra.mxu0 0.0
    %1947 = vmatprep.subr.mxu0 0.0
    %1948 = vmatpush1.msra.mxu0 0.0
    %1949 = vmatprep.subr.mxu0 0.0
    %1950 = vmatpush1.msra.mxu0 0.0
    %1951 = vmatprep.subr.mxu0 0.0
    %1952 = vmatpush1.msra.mxu0 0.0
    %1953 = vmatprep.subr.mxu0 0.0
    %1954 = vmatpush1.msra.mxu0 0.0
    %1955 = vmatprep.subr.mxu0 0.0
    %1956 = vmatpush1.msra.mxu0 0.0
    %1957 = vmatprep.subr.mxu0 0.0
    %1958 = vmatpush1.msra.mxu0 0.0
    %1959 = vmatprep.subr.mxu0 0.0
    %1960 = vmatpush1.msra.mxu0 0.0
    %1961 = vmatprep.subr.mxu0 0.0
    %1962 = vmatpush1.msra.mxu0 0.0
    %1963 = vmatprep.subr.mxu0 0.0
    %1964 = vmatpush1.msra.mxu0 0.0
    %1965 = vmatprep.subr.mxu0 0.0
    %1966 = vmatpush1.msra.mxu0 0.0
    %1967 = vmatprep.subr.mxu0 0.0
    %1968 = vmatpush1.msra.mxu0 0.0
    %1969 = vmatprep.subr.mxu0 0.0
    %1970 = vmatpush1.msra.mxu0 0.0
    %1971 = vmatprep.subr.mxu0 0.0
    %1972 = vmatpush1.msra.mxu0 0.0
    %1973 = vmatprep.subr.mxu0 0.0
    %1974 = vmatpush1.msra.mxu0 0.0
    %1975 = vmatprep.subr.mxu0 0.0
    %1976 = vmatpush1.msra.mxu0 0.0
    %1977 = vmatprep.mubr.f32.mxu0 0.0
    %1978 = vmatmul.mubr.f32.gmra.mrb[0].mxu0 %v1902
    %v1979 = vpop.f32.mrb[0].mxu0
    %v1980 = vadd.f32 %v1899, %v1979
    %v1981 = vpop.f32.mrb[0].mxu0
    %1982 = vmatprep.mubr.f32.mxu0 0.0
    %1983 = vmatmul.mubr.f32.gmra.mrb[0].mxu0 %v1905
    %v1984 = vpop.f32.mrb[0].mxu0
    %v1985 = vadd.f32 %v1899, %v1984
    %v1986 = vpop.f32.mrb[0].mxu0
    %1987 = vmatprep.mubr.f32.mxu0 0.0
    %1988 = vmatmul.mubr.f32.gmra.mrb[0].mxu0 %v1908
    %v1989 = vpop.f32.mrb[0].mxu0
    %v1990 = vadd.f32 %v1899, %v1989
    %v1991 = vpop.f32.mrb[0].mxu0
    %1992 = vmatprep.mubr.f32.mxu0 0.0
    %1993 = vmatmul.mubr.f32.gmra.mrb[0].mxu0 %v1911
    %v1994 = vpop.f32.mrb[0].mxu0
    %v1995 = vadd.f32 %v1899, %v1994
    %v1996 = vpop.f32.mrb[0].mxu0
    %1997 = vdwg.mxu0
    %v1998 = vmax.f32 %v1980, 0.0
    %v1999 = vmax.f32 %v1985, 0.0
    %v2000 = vmax.f32 %v1990, 0.0
    %v2001 = vmax.f32 %v1995, 0.0
    %v2002 = vld [vmem:[%s27] sm:$0xff]
    %v2003 = vld [vmem:[%s27 + $0x8] sm:$0xff]
    %v2004 = vld [vmem:[%s27 + $0x10] sm:$0xff]
    %v2005 = vld [vmem:[%s27 + $0x18] sm:$0xff]
    %v2006 = vld [vmem:[%s27 + $0x20] sm:$0xff]
    %v2007 = vld [vmem:[%s27 + $0x28] sm:$0xff]
    %v2008 = vld [vmem:[%s27 + $0x30] sm:$0xff]
    %v2009 = vld [vmem:[%s27 + $0x38] sm:$0xff]
    %v2010 = vld [vmem:[%s29] sm:$0x1]
    %v2012 = vlaneseq
    %v2013 = vshrl.u32 %v2012, 7
    %v2014 = vsub.s32 0, %v2013
    %v2015 = vrot.slane %v2010, %v2014
    %vm2017 = vcmask 523264
    %v2019 = vsel %vm2017, %v1998, 0
    %v2022 = vsel %vm2017, %v1999, 0
    %v2025 = vsel %vm2017, %v2000, 0
    %v2028 = vsel %vm2017, %v2001, 0
    %2030 = vmatprep.subr.mxu0 0.0
    %2031 = vmatpush1.msra.mxu0 %v2002
    %2032 = vmatprep.subr.mxu0 0.0
    %2033 = vmatpush1.msra.mxu0 %v2003
    %2034 = vmatprep.subr.mxu0 0.0
    %2035 = vmatpush1.msra.mxu0 %v2004
    %2036 = vmatprep.subr.mxu0 0.0
    %2037 = vmatpush1.msra.mxu0 %v2005
    %2038 = vmatprep.subr.mxu0 0.0
    %2039 = vmatpush1.msra.mxu0 %v2006
    %2040 = vmatprep.subr.mxu0 0.0
    %2041 = vmatpush1.msra.mxu0 %v2007
    %2042 = vmatprep.subr.mxu0 0.0
    %2043 = vmatpush1.msra.mxu0 %v2008
    %2044 = vmatprep.subr.mxu0 0.0
    %2045 = vmatpush1.msra.mxu0 %v2009
    %2046 = vmatprep.subr.mxu0 0.0
    %2047 = vmatpush1.msra.mxu0 0.0
    %2048 = vmatprep.subr.mxu0 0.0
    %2049 = vmatpush1.msra.mxu0 0.0
    %2050 = vmatprep.subr.mxu0 0.0
    %2051 = vmatpush1.msra.mxu0 0.0
    %2052 = vmatprep.subr.mxu0 0.0
    %2053 = vmatpush1.msra.mxu0 0.0
    %2054 = vmatprep.subr.mxu0 0.0
    %2055 = vmatpush1.msra.mxu0 0.0
    %2056 = vmatprep.subr.mxu0 0.0
    %2057 = vmatpush1.msra.mxu0 0.0
    %2058 = vmatprep.subr.mxu0 0.0
    %2059 = vmatpush1.msra.mxu0 0.0
    %2060 = vmatprep.subr.mxu0 0.0
    %2061 = vmatpush1.msra.mxu0 0.0
    %2062 = vmatprep.subr.mxu0 0.0
    %2063 = vmatpush1.msra.mxu0 0.0
    %2064 = vmatprep.subr.mxu0 0.0
    %2065 = vmatpush1.msra.mxu0 0.0
    %2066 = vmatprep.subr.mxu0 0.0
    %2067 = vmatpush1.msra.mxu0 0.0
    %2068 = vmatprep.subr.mxu0 0.0
    %2069 = vmatpush1.msra.mxu0 0.0
    %2070 = vmatprep.subr.mxu0 0.0
    %2071 = vmatpush1.msra.mxu0 0.0
    %2072 = vmatprep.subr.mxu0 0.0
    %2073 = vmatpush1.msra.mxu0 0.0
    %2074 = vmatprep.subr.mxu0 0.0
    %2075 = vmatpush1.msra.mxu0 0.0
    %2076 = vmatprep.subr.mxu0 0.0
    %2077 = vmatpush1.msra.mxu0 0.0
    %2078 = vmatprep.subr.mxu0 0.0
    %2079 = vmatpush1.msra.mxu0 0.0
    %2080 = vmatprep.subr.mxu0 0.0
    %2081 = vmatpush1.msra.mxu0 0.0
    %2082 = vmatprep.subr.mxu0 0.0
    %2083 = vmatpush1.msra.mxu0 0.0
    %2084 = vmatprep.subr.mxu0 0.0
    %2085 = vmatpush1.msra.mxu0 0.0
    %2086 = vmatprep.subr.mxu0 0.0
    %2087 = vmatpush1.msra.mxu0 0.0
    %2088 = vmatprep.subr.mxu0 0.0
    %2089 = vmatpush1.msra.mxu0 0.0
    %2090 = vmatprep.subr.mxu0 0.0
    %2091 = vmatpush1.msra.mxu0 0.0
    %2092 = vmatprep.subr.mxu0 0.0
    %2093 = vmatpush1.msra.mxu0 0.0
    %2094 = vmatprep.mubr.f32.mxu0 0.0
    %2095 = vmatmul.mubr.f32.gmra.mrb[0].mxu0 %v2019
    %v2096 = vpop.f32.mrb[0].mxu0
    %v2097 = vadd.f32 %v2015, %v2096
    %v2098 = vpop.f32.mrb[0].mxu0
    %2099 = vmatprep.mubr.f32.mxu0 0.0
    %2100 = vmatmul.mubr.f32.gmra.mrb[0].mxu0 %v2022
    %v2101 = vpop.f32.mrb[0].mxu0
    %v2102 = vadd.f32 %v2015, %v2101
    %v2103 = vpop.f32.mrb[0].mxu0
    %2104 = vmatprep.mubr.f32.mxu0 0.0
    %2105 = vmatmul.mubr.f32.gmra.mrb[0].mxu0 %v2025
    %v2106 = vpop.f32.mrb[0].mxu0
    %v2107 = vadd.f32 %v2015, %v2106
    %v2108 = vpop.f32.mrb[0].mxu0
    %2109 = vmatprep.mubr.f32.mxu0 0.0
    %2110 = vmatmul.mubr.f32.gmra.mrb[0].mxu0 %v2028
    %v2111 = vpop.f32.mrb[0].mxu0
    %v2112 = vadd.f32 %v2015, %v2111
    %v2113 = vpop.f32.mrb[0].mxu0
    %2114 = vdwg.mxu0
    %v2115 = vadd.f32 %v1886, %v2097
    %v2116 = vadd.f32 %v1887, %v2102
    %v2117 = vadd.f32 %v1888, %v2107
    %v2118 = vadd.f32 %v1889, %v2112
    %v2119 = vld [vmem:[%s31] sm:$0x1]
    %s2120 = scalar_lea.vmem %s31, 1
    %v2121 = vld [vmem:[%s2120] sm:$0x1]
    %v2122 = vsel %vm267, %v2115, 0.0
    %2123 = vadd.xlane.f32.xlu0 %v2122
    %v2124 = vpop.xlane.xlu0 %2123
    %v2125 = vsel %vm267, %v2116, 0.0
    %2126 = vadd.xlane.f32.xlu0 %v2125
    %v2127 = vpop.xlane.xlu0 %2126
    %v2128 = vsel %vm267, %v2117, 0.0
    %2129 = vadd.xlane.f32.xlu0 %v2128
    %v2130 = vpop.xlane.xlu0 %2129
    %v2131 = vsel %vm267, %v2118, 0.0
    %2132 = vadd.xlane.f32.xlu0 %v2131
    %v2133 = vpop.xlane.xlu0 %2132
    %v2134 = vmul.f32 %v2124, %v1829
    %v2135 = vmul.f32 %v2127, %v1829
    %v2136 = vmul.f32 %v2130, %v1829
    %v2137 = vmul.f32 %v2133, %v1829
    %v2138 = vsub.f32 %v2115, %v2134
    %v2139 = vsub.f32 %v2116, %v2135
    %v2140 = vsub.f32 %v2117, %v2136
    %v2141 = vsub.f32 %v2118, %v2137
    %v2142 = vmul.f32 %v2138, %v2138
    %v2143 = vmul.f32 %v2139, %v2139
    %v2144 = vmul.f32 %v2140, %v2140
    %v2145 = vmul.f32 %v2141, %v2141
    %v2146 = vsel %vm267, %v2142, 0.0
    %2147 = vadd.xlane.f32.xlu0 %v2146
    %v2148 = vpop.xlane.xlu0 %2147
    %v2149 = vsel %vm267, %v2143, 0.0
    %2150 = vadd.xlane.f32.xlu0 %v2149
    %v2151 = vpop.xlane.xlu0 %2150
    %v2152 = vsel %vm267, %v2144, 0.0
    %2153 = vadd.xlane.f32.xlu0 %v2152
    %v2154 = vpop.xlane.xlu0 %2153
    %v2155 = vsel %vm267, %v2145, 0.0
    %2156 = vadd.xlane.f32.xlu0 %v2155
    %v2157 = vpop.xlane.xlu0 %2156
    %v2158 = vmul.f32 %v2148, %v1829
    %v2159 = vmul.f32 %v2151, %v1829
    %v2160 = vmul.f32 %v2154, %v1829
    %v2161 = vmul.f32 %v2157, %v1829
    %v2162 = vadd.f32 %v2158, 1e-05
    %v2163 = vadd.f32 %v2159, 1e-05
    %v2164 = vadd.f32 %v2160, 1e-05
    %v2165 = vadd.f32 %v2161, 1e-05
    %v2166 = vrsqrt.pop %v2162
    %v2167 = vrsqrt.pop %v2163
    %v2168 = vrsqrt.pop %v2164
    %v2169 = vrsqrt.pop %v2165
    %v2170 = vmul.f32 %v2138, %v2166
    %v2171 = vmul.f32 %v2139, %v2167
    %v2172 = vmul.f32 %v2140, %v2168
    %v2173 = vmul.f32 %v2141, %v2169
    %v2175 = vlaneseq
    %v2176 = vshrl.u32 %v2175, 7
    %v2177 = vsub.s32 0, %v2176
    %v2178 = vrot.slane %v2119, %v2177
    %v2180 = vmul.f32 %v2170, %v2178
    %v2181 = vmul.f32 %v2171, %v2178
    %v2182 = vmul.f32 %v2172, %v2178
    %v2183 = vmul.f32 %v2173, %v2178
    %v2185 = vlaneseq
    %v2186 = vshrl.u32 %v2185, 7
    %v2187 = vsub.s32 0, %v2186
    %v2188 = vrot.slane %v2121, %v2187
    %v2190 = vadd.f32 %v2180, %v2188
    %v2191 = vadd.f32 %v2181, %v2188
    %v2192 = vadd.f32 %v2182, %v2188
    %v2193 = vadd.f32 %v2183, %v2188
    %2194 = vst.msk [vmem:[#allocation4] sm:$0xff] %vm267, %v2190
    %2195 = vst.msk [vmem:[#allocation4 + $0x8] sm:$0xff] %vm267, %v2191
    %2196 = vst.msk [vmem:[#allocation4 + $0x10] sm:$0xff] %vm267, %v2192
    %2197 = vst.msk [vmem:[#allocation4 + $0x18] sm:$0xff] %vm267, %v2193
    %v2198 = vadd.f32 %v2190, %v134
    %v2199 = vadd.f32 %v2191, %v135
    %v2200 = vadd.f32 %v2192, %v136
    %v2201 = vadd.f32 %v2193, %v137
    %v2202 = vadd.f32 %v138, 0.0
    %v2203 = vadd.f32 %v139, 0.0
    %v2204 = vld [vmem:[%s33] sm:$0xff]
    %v2205 = vld [vmem:[%s33 + $0x8] sm:$0xff]
    %v2206 = vld [vmem:[%s33 + $0x10] sm:$0xff]
    %v2207 = vld [vmem:[%s33 + $0x18] sm:$0xff]
    %v2208 = vld [vmem:[%s35] sm:$0x1]
    %v2210 = vlaneseq
    %v2211 = vshrl.u32 %v2210, 7
    %v2212 = vsub.s32 0, %v2211
    %v2213 = vrot.slane %v2208, %v2212
    %v2216 = vsel %vm267, %v2202, 0
    %v2219 = vsel %vm267, %v2203, 0
    %2221 = vmatprep.subr.mxu0 0.0
    %2222 = vmatpush1.msra.mxu0 %v2204
    %2223 = vmatprep.subr.mxu0 0.0
    %2224 = vmatpush1.msra.mxu0 %v2205
    %2225 = vmatprep.subr.mxu0 0.0
    %2226 = vmatpush1.msra.mxu0 %v2206
    %2227 = vmatprep.subr.mxu0 0.0
    %2228 = vmatpush1.msra.mxu0 %v2207
    %2229 = vmatprep.subr.mxu0 0.0
    %2230 = vmatpush1.msra.mxu0 0.0
    %2231 = vmatprep.subr.mxu0 0.0
    %2232 = vmatpush1.msra.mxu0 0.0
    %2233 = vmatprep.subr.mxu0 0.0
    %2234 = vmatpush1.msra.mxu0 0.0
    %2235 = vmatprep.subr.mxu0 0.0
    %2236 = vmatpush1.msra.mxu0 0.0
    %2237 = vmatprep.subr.mxu0 0.0
    %2238 = vmatpush1.msra.mxu0 0.0
    %2239 = vmatprep.subr.mxu0 0.0
    %2240 = vmatpush1.msra.mxu0 0.0
    %2241 = vmatprep.subr.mxu0 0.0
    %2242 = vmatpush1.msra.mxu0 0.0
    %2243 = vmatprep.subr.mxu0 0.0
    %2244 = vmatpush1.msra.mxu0 0.0
    %2245 = vmatprep.subr.mxu0 0.0
    %2246 = vmatpush1.msra.mxu0 0.0
    %2247 = vmatprep.subr.mxu0 0.0
    %2248 = vmatpush1.msra.mxu0 0.0
    %2249 = vmatprep.subr.mxu0 0.0
    %2250 = vmatpush1.msra.mxu0 0.0
    %2251 = vmatprep.subr.mxu0 0.0
    %2252 = vmatpush1.msra.mxu0 0.0
    %2253 = vmatprep.subr.mxu0 0.0
    %2254 = vmatpush1.msra.mxu0 0.0
    %2255 = vmatprep.subr.mxu0 0.0
    %2256 = vmatpush1.msra.mxu0 0.0
    %2257 = vmatprep.subr.mxu0 0.0
    %2258 = vmatpush1.msra.mxu0 0.0
    %2259 = vmatprep.subr.mxu0 0.0
    %2260 = vmatpush1.msra.mxu0 0.0
    %2261 = vmatprep.subr.mxu0 0.0
    %2262 = vmatpush1.msra.mxu0 0.0
    %2263 = vmatprep.subr.mxu0 0.0
    %2264 = vmatpush1.msra.mxu0 0.0
    %2265 = vmatprep.subr.mxu0 0.0
    %2266 = vmatpush1.msra.mxu0 0.0
    %2267 = vmatprep.subr.mxu0 0.0
    %2268 = vmatpush1.msra.mxu0 0.0
    %2269 = vmatprep.subr.mxu0 0.0
    %2270 = vmatpush1.msra.mxu0 0.0
    %2271 = vmatprep.subr.mxu0 0.0
    %2272 = vmatpush1.msra.mxu0 0.0
    %2273 = vmatprep.subr.mxu0 0.0
    %2274 = vmatpush1.msra.mxu0 0.0
    %2275 = vmatprep.subr.mxu0 0.0
    %2276 = vmatpush1.msra.mxu0 0.0
    %2277 = vmatprep.subr.mxu0 0.0
    %2278 = vmatpush1.msra.mxu0 0.0
    %2279 = vmatprep.subr.mxu0 0.0
    %2280 = vmatpush1.msra.mxu0 0.0
    %2281 = vmatprep.subr.mxu0 0.0
    %2282 = vmatpush1.msra.mxu0 0.0
    %2283 = vmatprep.subr.mxu0 0.0
    %2284 = vmatpush1.msra.mxu0 0.0
    %2285 = vmatprep.mubr.f32.mxu0 0.0
    %2286 = vmatmul.mubr.f32.gmra.mrb[0].mxu0 %v2216
    %v2287 = vpop.f32.mrb[0].mxu0
    %v2288 = vadd.f32 %v2213, %v2287
    %v2289 = vpop.f32.mrb[0].mxu0
    %2290 = vmatprep.mubr.f32.mxu0 0.0
    %2291 = vmatmul.mubr.f32.gmra.mrb[0].mxu0 %v2219
    %v2292 = vpop.f32.mrb[0].mxu0
    %v2293 = vadd.f32 %v2213, %v2292
    %v2294 = vpop.f32.mrb[0].mxu0
    %2295 = vdwg.mxu0
    %s2296 = scalar_lea.vmem %s33, 32
    %v2297 = vld [vmem:[%s2296] sm:$0xff]
    %v2298 = vld [vmem:[%s2296 + $0x8] sm:$0xff]
    %v2299 = vld [vmem:[%s2296 + $0x10] sm:$0xff]
    %v2300 = vld [vmem:[%s2296 + $0x18] sm:$0xff]
    %s2301 = scalar_lea.vmem %s35, 1
    %v2302 = vld [vmem:[%s2301] sm:$0x1]
    %v2304 = vlaneseq
    %v2305 = vshrl.u32 %v2304, 7
    %v2306 = vsub.s32 0, %v2305
    %v2307 = vrot.slane %v2302, %v2306
    %2309 = vmatprep.subr.mxu0 0.0
    %2310 = vmatpush1.msra.mxu0 %v2297
    %2311 = vmatprep.subr.mxu0 0.0
    %2312 = vmatpush1.msra.mxu0 %v2298
    %2313 = vmatprep.subr.mxu0 0.0
    %2314 = vmatpush1.msra.mxu0 %v2299
    %2315 = vmatprep.subr.mxu0 0.0
    %2316 = vmatpush1.msra.mxu0 %v2300
    %2317 = vmatprep.subr.mxu0 0.0
    %2318 = vmatpush1.msra.mxu0 0.0
    %2319 = vmatprep.subr.mxu0 0.0
    %2320 = vmatpush1.msra.mxu0 0.0
    %2321 = vmatprep.subr.mxu0 0.0
    %2322 = vmatpush1.msra.mxu0 0.0
    %2323 = vmatprep.subr.mxu0 0.0
    %2324 = vmatpush1.msra.mxu0 0.0
    %2325 = vmatprep.subr.mxu0 0.0
    %2326 = vmatpush1.msra.mxu0 0.0
    %2327 = vmatprep.subr.mxu0 0.0
    %2328 = vmatpush1.msra.mxu0 0.0
    %2329 = vmatprep.subr.mxu0 0.0
    %2330 = vmatpush1.msra.mxu0 0.0
    %2331 = vmatprep.subr.mxu0 0.0
    %2332 = vmatpush1.msra.mxu0 0.0
    %2333 = vmatprep.subr.mxu0 0.0
    %2334 = vmatpush1.msra.mxu0 0.0
    %2335 = vmatprep.subr.mxu0 0.0
    %2336 = vmatpush1.msra.mxu0 0.0
    %2337 = vmatprep.subr.mxu0 0.0
    %2338 = vmatpush1.msra.mxu0 0.0
    %2339 = vmatprep.subr.mxu0 0.0
    %2340 = vmatpush1.msra.mxu0 0.0
    %2341 = vmatprep.subr.mxu0 0.0
    %2342 = vmatpush1.msra.mxu0 0.0
    %2343 = vmatprep.subr.mxu0 0.0
    %2344 = vmatpush1.msra.mxu0 0.0
    %2345 = vmatprep.subr.mxu0 0.0
    %2346 = vmatpush1.msra.mxu0 0.0
    %2347 = vmatprep.subr.mxu0 0.0
    %2348 = vmatpush1.msra.mxu0 0.0
    %2349 = vmatprep.subr.mxu0 0.0
    %2350 = vmatpush1.msra.mxu0 0.0
    %2351 = vmatprep.subr.mxu0 0.0
    %2352 = vmatpush1.msra.mxu0 0.0
    %2353 = vmatprep.subr.mxu0 0.0
    %2354 = vmatpush1.msra.mxu0 0.0
    %2355 = vmatprep.subr.mxu0 0.0
    %2356 = vmatpush1.msra.mxu0 0.0
    %2357 = vmatprep.subr.mxu0 0.0
    %2358 = vmatpush1.msra.mxu0 0.0
    %2359 = vmatprep.subr.mxu0 0.0
    %2360 = vmatpush1.msra.mxu0 0.0
    %2361 = vmatprep.subr.mxu0 0.0
    %2362 = vmatpush1.msra.mxu0 0.0
    %2363 = vmatprep.subr.mxu0 0.0
    %2364 = vmatpush1.msra.mxu0 0.0
    %2365 = vmatprep.subr.mxu0 0.0
    %2366 = vmatpush1.msra.mxu0 0.0
    %2367 = vmatprep.subr.mxu0 0.0
    %2368 = vmatpush1.msra.mxu0 0.0
    %2369 = vmatprep.subr.mxu0 0.0
    %2370 = vmatpush1.msra.mxu0 0.0
    %2371 = vmatprep.subr.mxu0 0.0
    %2372 = vmatpush1.msra.mxu0 0.0
    %2373 = vmatprep.mubr.f32.mxu0 0.0
    %2374 = vmatmul.mubr.f32.gmra.mrb[0].mxu0 %v2216
    %v2375 = vpop.f32.mrb[0].mxu0
    %v2376 = vadd.f32 %v2307, %v2375
    %v2377 = vpop.f32.mrb[0].mxu0
    %2378 = vmatprep.mubr.f32.mxu0 0.0
    %2379 = vmatmul.mubr.f32.gmra.mrb[0].mxu0 %v2219
    %v2380 = vpop.f32.mrb[0].mxu0
    %v2381 = vadd.f32 %v2307, %v2380
    %v2382 = vpop.f32.mrb[0].mxu0
    %2383 = vdwg.mxu0
    %s2384 = scalar_lea.vmem %s33, 64
    %v2385 = vld [vmem:[%s2384] sm:$0xff]
    %v2386 = vld [vmem:[%s2384 + $0x8] sm:$0xff]
    %v2387 = vld [vmem:[%s2384 + $0x10] sm:$0xff]
    %v2388 = vld [vmem:[%s2384 + $0x18] sm:$0xff]
    %s2389 = scalar_lea.vmem %s35, 2
    %v2390 = vld [vmem:[%s2389] sm:$0x1]
    %v2392 = vlaneseq
    %v2393 = vshrl.u32 %v2392, 7
    %v2394 = vsub.s32 0, %v2393
    %v2395 = vrot.slane %v2390, %v2394
    %v2398 = vsel %vm267, 0.0, 0
    %2400 = vmatprep.subr.mxu0 0.0
    %2401 = vmatpush1.msra.mxu0 %v2385
    %2402 = vmatprep.subr.mxu0 0.0
    %2403 = vmatpush1.msra.mxu0 %v2386
    %2404 = vmatprep.subr.mxu0 0.0
    %2405 = vmatpush1.msra.mxu0 %v2387
    %2406 = vmatprep.subr.mxu0 0.0
    %2407 = vmatpush1.msra.mxu0 %v2388
    %2408 = vmatprep.subr.mxu0 0.0
    %2409 = vmatpush1.msra.mxu0 0.0
    %2410 = vmatprep.subr.mxu0 0.0
    %2411 = vmatpush1.msra.mxu0 0.0
    %2412 = vmatprep.subr.mxu0 0.0
    %2413 = vmatpush1.msra.mxu0 0.0
    %2414 = vmatprep.subr.mxu0 0.0
    %2415 = vmatpush1.msra.mxu0 0.0
    %2416 = vmatprep.subr.mxu0 0.0
    %2417 = vmatpush1.msra.mxu0 0.0
    %2418 = vmatprep.subr.mxu0 0.0
    %2419 = vmatpush1.msra.mxu0 0.0
    %2420 = vmatprep.subr.mxu0 0.0
    %2421 = vmatpush1.msra.mxu0 0.0
    %2422 = vmatprep.subr.mxu0 0.0
    %2423 = vmatpush1.msra.mxu0 0.0
    %2424 = vmatprep.subr.mxu0 0.0
    %2425 = vmatpush1.msra.mxu0 0.0
    %2426 = vmatprep.subr.mxu0 0.0
    %2427 = vmatpush1.msra.mxu0 0.0
    %2428 = vmatprep.subr.mxu0 0.0
    %2429 = vmatpush1.msra.mxu0 0.0
    %2430 = vmatprep.subr.mxu0 0.0
    %2431 = vmatpush1.msra.mxu0 0.0
    %2432 = vmatprep.subr.mxu0 0.0
    %2433 = vmatpush1.msra.mxu0 0.0
    %2434 = vmatprep.subr.mxu0 0.0
    %2435 = vmatpush1.msra.mxu0 0.0
    %2436 = vmatprep.subr.mxu0 0.0
    %2437 = vmatpush1.msra.mxu0 0.0
    %2438 = vmatprep.subr.mxu0 0.0
    %2439 = vmatpush1.msra.mxu0 0.0
    %2440 = vmatprep.subr.mxu0 0.0
    %2441 = vmatpush1.msra.mxu0 0.0
    %2442 = vmatprep.subr.mxu0 0.0
    %2443 = vmatpush1.msra.mxu0 0.0
    %2444 = vmatprep.subr.mxu0 0.0
    %2445 = vmatpush1.msra.mxu0 0.0
    %2446 = vmatprep.subr.mxu0 0.0
    %2447 = vmatpush1.msra.mxu0 0.0
    %2448 = vmatprep.subr.mxu0 0.0
    %2449 = vmatpush1.msra.mxu0 0.0
    %2450 = vmatprep.subr.mxu0 0.0
    %2451 = vmatpush1.msra.mxu0 0.0
    %2452 = vmatprep.subr.mxu0 0.0
    %2453 = vmatpush1.msra.mxu0 0.0
    %2454 = vmatprep.subr.mxu0 0.0
    %2455 = vmatpush1.msra.mxu0 0.0
    %2456 = vmatprep.subr.mxu0 0.0
    %2457 = vmatpush1.msra.mxu0 0.0
    %2458 = vmatprep.subr.mxu0 0.0
    %2459 = vmatpush1.msra.mxu0 0.0
    %2460 = vmatprep.subr.mxu0 0.0
    %2461 = vmatpush1.msra.mxu0 0.0
    %2462 = vmatprep.subr.mxu0 0.0
    %2463 = vmatpush1.msra.mxu0 0.0
    %2464 = vmatprep.mubr.f32.mxu0 0.0
    %2465 = vmatmul.mubr.f32.gmra.mrb[0].mxu0 %v2398
    %v2466 = vpop.f32.mrb[0].mxu0
    %v2467 = vadd.f32 %v2395, %v2466
    %v2468 = vpop.f32.mrb[0].mxu0
    %2469 = vmatprep.mubr.f32.mxu0 0.0
    %2470 = vmatmul.mubr.f32.gmra.mrb[0].mxu0 %v2398
    %v2471 = vpop.f32.mrb[0].mxu0
    %v2472 = vadd.f32 %v2395, %v2471
    %v2473 = vpop.f32.mrb[0].mxu0
    %2474 = vdwg.mxu0
    %v2476 = vsel %vm573, %v2288, 0
    %v2479 = vsel %vm573, %v2293, 0
    %v2482 = vsel %vm573, %v2376, 0
    %v2485 = vsel %vm573, %v2381, 0
    %2487 = vmatprep.subr.mxu0 0.0
    %2488 = vmatpush1.xpose.msra.mxu0 %v2482
    %2489 = vmatprep.subr.mxu0 0.0
    %2490 = vmatpush1.xpose.msra.mxu0 %v2485
    %2491 = vmatprep.subr.mxu0 0.0
    %2492 = vmatpush1.xpose.msra.mxu0 0.0
    %2493 = vmatprep.subr.mxu0 0.0
    %2494 = vmatpush1.xpose.msra.mxu0 0.0
    %2495 = vmatprep.subr.mxu0 0.0
    %2496 = vmatpush1.xpose.msra.mxu0 0.0
    %2497 = vmatprep.subr.mxu0 0.0
    %2498 = vmatpush1.xpose.msra.mxu0 0.0
    %2499 = vmatprep.subr.mxu0 0.0
    %2500 = vmatpush1.xpose.msra.mxu0 0.0
    %2501 = vmatprep.subr.mxu0 0.0
    %2502 = vmatpush1.xpose.msra.mxu0 0.0
    %2503 = vmatprep.subr.mxu0 0.0
    %2504 = vmatpush1.xpose.msra.mxu0 0.0
    %2505 = vmatprep.subr.mxu0 0.0
    %2506 = vmatpush1.xpose.msra.mxu0 0.0
    %2507 = vmatprep.subr.mxu0 0.0
    %2508 = vmatpush1.xpose.msra.mxu0 0.0
    %2509 = vmatprep.subr.mxu0 0.0
    %2510 = vmatpush1.xpose.msra.mxu0 0.0
    %2511 = vmatprep.subr.mxu0 0.0
    %2512 = vmatpush1.xpose.msra.mxu0 0.0
    %2513 = vmatprep.subr.mxu0 0.0
    %2514 = vmatpush1.xpose.msra.mxu0 0.0
    %2515 = vmatprep.subr.mxu0 0.0
    %2516 = vmatpush1.xpose.msra.mxu0 0.0
    %2517 = vmatprep.subr.mxu0 0.0
    %2518 = vmatpush1.xpose.msra.mxu0 0.0
    %2519 = vmatprep.subr.mxu0 0.0
    %2520 = vmatpush1.xpose.msra.mxu0 0.0
    %2521 = vmatprep.subr.mxu0 0.0
    %2522 = vmatpush1.xpose.msra.mxu0 0.0
    %2523 = vmatprep.subr.mxu0 0.0
    %2524 = vmatpush1.xpose.msra.mxu0 0.0
    %2525 = vmatprep.subr.mxu0 0.0
    %2526 = vmatpush1.xpose.msra.mxu0 0.0
    %2527 = vmatprep.subr.mxu0 0.0
    %2528 = vmatpush1.xpose.msra.mxu0 0.0
    %2529 = vmatprep.subr.mxu0 0.0
    %2530 = vmatpush1.xpose.msra.mxu0 0.0
    %2531 = vmatprep.subr.mxu0 0.0
    %2532 = vmatpush1.xpose.msra.mxu0 0.0
    %2533 = vmatprep.subr.mxu0 0.0
    %2534 = vmatpush1.xpose.msra.mxu0 0.0
    %2535 = vmatprep.subr.mxu0 0.0
    %2536 = vmatpush1.xpose.msra.mxu0 0.0
    %2537 = vmatprep.subr.mxu0 0.0
    %2538 = vmatpush1.xpose.msra.mxu0 0.0
    %2539 = vmatprep.subr.mxu0 0.0
    %2540 = vmatpush1.xpose.msra.mxu0 0.0
    %2541 = vmatprep.subr.mxu0 0.0
    %2542 = vmatpush1.xpose.msra.mxu0 0.0
    %2543 = vmatprep.subr.mxu0 0.0
    %2544 = vmatpush1.xpose.msra.mxu0 0.0
    %2545 = vmatprep.subr.mxu0 0.0
    %2546 = vmatpush1.xpose.msra.mxu0 0.0
    %2547 = vmatprep.subr.mxu0 0.0
    %2548 = vmatpush1.xpose.msra.mxu0 0.0
    %2549 = vmatprep.subr.mxu0 0.0
    %2550 = vmatpush1.xpose.msra.mxu0 0.0
    %2551 = vmatprep.mubr.f32.mxu0 0.0
    %2552 = vmatmul.mubr.f32.gmra.mrb[0].mxu0 %v2476
    %v2553 = vpop.f32.mrb[0].mxu0
    %v2554 = vadd.f32 %v144, %v2553
    %v2555 = vpop.f32.mrb[0].mxu0
    %2556 = vmatprep.mubr.f32.mxu0 0.0
    %2557 = vmatmul.mubr.f32.gmra.mrb[0].mxu0 %v2479
    %v2558 = vpop.f32.mrb[0].mxu0
    %v2559 = vadd.f32 %v145, %v2558
    %v2560 = vpop.f32.mrb[0].mxu0
    %2561 = vdwg.mxu0
    %v2562 = vsel %vm1690, %v2554, -inf
    %2563 = vmax.xlane.f32.xlu0 %v2562
    %v2564 = vpop.xlane.xlu0 %2563
    %v2565 = vsel %vm1690, %v2559, -inf
    %2566 = vmax.xlane.f32.xlu0 %v2565
    %v2567 = vpop.xlane.xlu0 %2566
    %v2568 = vsub.f32 %v2554, %v2564
    %v2569 = vsub.f32 %v2559, %v2567
    %v2570 = vmul.f32 %v2568, 1.442695
    %v2571 = vpow.pop %v2570
    %v2572 = vmul.f32 %v2569, 1.442695
    %v2573 = vpow.pop %v2572
    %v2574 = vsel %vm1690, %v2571, 0.0
    %2575 = vadd.xlane.f32.xlu0 %v2574
    %v2576 = vpop.xlane.xlu0 %2575
    %v2577 = vsel %vm1690, %v2573, 0.0
    %2578 = vadd.xlane.f32.xlu0 %v2577
    %v2579 = vpop.xlane.xlu0 %2578
    %v2580 = vrcp.pop %v2576
    %v2581 = vrcp.pop %v2579
    %v2582 = vmul.f32 %v2571, %v2580
    %v2583 = vmul.f32 %v2573, %v2581
    %v2585 = vsel %vm1690, %v2582, 0
    %v2588 = vsel %vm1690, %v2583, 0
    %2590 = vmatprep.subr.mxu0 0.0
    %2591 = vmatpush1.msra.mxu0 %v2467
    %2592 = vmatprep.subr.mxu0 0.0
    %2593 = vmatpush1.msra.mxu0 %v2472
    %2594 = vmatprep.subr.mxu0 0.0
    %2595 = vmatpush1.msra.mxu0 0.0
    %2596 = vmatprep.subr.mxu0 0.0
    %2597 = vmatpush1.msra.mxu0 0.0
    %2598 = vmatprep.subr.mxu0 0.0
    %2599 = vmatpush1.msra.mxu0 0.0
    %2600 = vmatprep.subr.mxu0 0.0
    %2601 = vmatpush1.msra.mxu0 0.0
    %2602 = vmatprep.subr.mxu0 0.0
    %2603 = vmatpush1.msra.mxu0 0.0
    %2604 = vmatprep.subr.mxu0 0.0
    %2605 = vmatpush1.msra.mxu0 0.0
    %2606 = vmatprep.subr.mxu0 0.0
    %2607 = vmatpush1.msra.mxu0 0.0
    %2608 = vmatprep.subr.mxu0 0.0
    %2609 = vmatpush1.msra.mxu0 0.0
    %2610 = vmatprep.subr.mxu0 0.0
    %2611 = vmatpush1.msra.mxu0 0.0
    %2612 = vmatprep.subr.mxu0 0.0
    %2613 = vmatpush1.msra.mxu0 0.0
    %2614 = vmatprep.subr.mxu0 0.0
    %2615 = vmatpush1.msra.mxu0 0.0
    %2616 = vmatprep.subr.mxu0 0.0
    %2617 = vmatpush1.msra.mxu0 0.0
    %2618 = vmatprep.subr.mxu0 0.0
    %2619 = vmatpush1.msra.mxu0 0.0
    %2620 = vmatprep.subr.mxu0 0.0
    %2621 = vmatpush1.msra.mxu0 0.0
    %2622 = vmatprep.subr.mxu0 0.0
    %2623 = vmatpush1.msra.mxu0 0.0
    %2624 = vmatprep.subr.mxu0 0.0
    %2625 = vmatpush1.msra.mxu0 0.0
    %2626 = vmatprep.subr.mxu0 0.0
    %2627 = vmatpush1.msra.mxu0 0.0
    %2628 = vmatprep.subr.mxu0 0.0
    %2629 = vmatpush1.msra.mxu0 0.0
    %2630 = vmatprep.subr.mxu0 0.0
    %2631 = vmatpush1.msra.mxu0 0.0
    %2632 = vmatprep.subr.mxu0 0.0
    %2633 = vmatpush1.msra.mxu0 0.0
    %2634 = vmatprep.subr.mxu0 0.0
    %2635 = vmatpush1.msra.mxu0 0.0
    %2636 = vmatprep.subr.mxu0 0.0
    %2637 = vmatpush1.msra.mxu0 0.0
    %2638 = vmatprep.subr.mxu0 0.0
    %2639 = vmatpush1.msra.mxu0 0.0
    %2640 = vmatprep.subr.mxu0 0.0
    %2641 = vmatpush1.msra.mxu0 0.0
    %2642 = vmatprep.subr.mxu0 0.0
    %2643 = vmatpush1.msra.mxu0 0.0
    %2644 = vmatprep.subr.mxu0 0.0
    %2645 = vmatpush1.msra.mxu0 0.0
    %2646 = vmatprep.subr.mxu0 0.0
    %2647 = vmatpush1.msra.mxu0 0.0
    %2648 = vmatprep.subr.mxu0 0.0
    %2649 = vmatpush1.msra.mxu0 0.0
    %2650 = vmatprep.subr.mxu0 0.0
    %2651 = vmatpush1.msra.mxu0 0.0
    %2652 = vmatprep.subr.mxu0 0.0
    %2653 = vmatpush1.msra.mxu0 0.0
    %2654 = vmatprep.mubr.f32.mxu0 0.0
    %2655 = vmatmul.mubr.f32.gmra.mrb[0].mxu0 %v2585
    %v2656 = vpop.f32.mrb[0].mxu0
    %v2657 = vadd.f32 0.0, %v2656
    %v2658 = vpop.f32.mrb[0].mxu0
    %2659 = vmatprep.mubr.f32.mxu0 0.0
    %2660 = vmatmul.mubr.f32.gmra.mrb[0].mxu0 %v2588
    %v2661 = vpop.f32.mrb[0].mxu0
    %v2662 = vadd.f32 0.0, %v2661
    %v2663 = vpop.f32.mrb[0].mxu0
    %2664 = vdwg.mxu0
    %2665 = vrot.lane.b32.xlu0 %v2288, 120
    %v2666 = vpop.permute.xlu0 %2665
    %2667 = vrot.lane.b32.xlu0 %v2293, 120
    %v2668 = vpop.permute.xlu0 %2667
    %2669 = vrot.lane.b32.xlu0 %v2376, 120
    %v2670 = vpop.permute.xlu0 %2669
    %2671 = vrot.lane.b32.xlu0 %v2381, 120
    %v2672 = vpop.permute.xlu0 %2671
    %v2673 = vsel %vm573, %v2666, 0
    %v2675 = vsel %vm573, %v2668, 0
    %v2677 = vsel %vm573, %v2670, 0
    %v2679 = vsel %vm573, %v2672, 0
    %2681 = vmatprep.subr.mxu0 0.0
    %2682 = vmatpush1.xpose.msra.mxu0 %v2677
    %2683 = vmatprep.subr.mxu0 0.0
    %2684 = vmatpush1.xpose.msra.mxu0 %v2679
    %2685 = vmatprep.subr.mxu0 0.0
    %2686 = vmatpush1.xpose.msra.mxu0 0.0
    %2687 = vmatprep.subr.mxu0 0.0
    %2688 = vmatpush1.xpose.msra.mxu0 0.0
    %2689 = vmatprep.subr.mxu0 0.0
    %2690 = vmatpush1.xpose.msra.mxu0 0.0
    %2691 = vmatprep.subr.mxu0 0.0
    %2692 = vmatpush1.xpose.msra.mxu0 0.0
    %2693 = vmatprep.subr.mxu0 0.0
    %2694 = vmatpush1.xpose.msra.mxu0 0.0
    %2695 = vmatprep.subr.mxu0 0.0
    %2696 = vmatpush1.xpose.msra.mxu0 0.0
    %2697 = vmatprep.subr.mxu0 0.0
    %2698 = vmatpush1.xpose.msra.mxu0 0.0
    %2699 = vmatprep.subr.mxu0 0.0
    %2700 = vmatpush1.xpose.msra.mxu0 0.0
    %2701 = vmatprep.subr.mxu0 0.0
    %2702 = vmatpush1.xpose.msra.mxu0 0.0
    %2703 = vmatprep.subr.mxu0 0.0
    %2704 = vmatpush1.xpose.msra.mxu0 0.0
    %2705 = vmatprep.subr.mxu0 0.0
    %2706 = vmatpush1.xpose.msra.mxu0 0.0
    %2707 = vmatprep.subr.mxu0 0.0
    %2708 = vmatpush1.xpose.msra.mxu0 0.0
    %2709 = vmatprep.subr.mxu0 0.0
    %2710 = vmatpush1.xpose.msra.mxu0 0.0
    %2711 = vmatprep.subr.mxu0 0.0
    %2712 = vmatpush1.xpose.msra.mxu0 0.0
    %2713 = vmatprep.subr.mxu0 0.0
    %2714 = vmatpush1.xpose.msra.mxu0 0.0
    %2715 = vmatprep.subr.mxu0 0.0
    %2716 = vmatpush1.xpose.msra.mxu0 0.0
    %2717 = vmatprep.subr.mxu0 0.0
    %2718 = vmatpush1.xpose.msra.mxu0 0.0
    %2719 = vmatprep.subr.mxu0 0.0
    %2720 = vmatpush1.xpose.msra.mxu0 0.0
    %2721 = vmatprep.subr.mxu0 0.0
    %2722 = vmatpush1.xpose.msra.mxu0 0.0
    %2723 = vmatprep.subr.mxu0 0.0
    %2724 = vmatpush1.xpose.msra.mxu0 0.0
    %2725 = vmatprep.subr.mxu0 0.0
    %2726 = vmatpush1.xpose.msra.mxu0 0.0
    %2727 = vmatprep.subr.mxu0 0.0
    %2728 = vmatpush1.xpose.msra.mxu0 0.0
    %2729 = vmatprep.subr.mxu0 0.0
    %2730 = vmatpush1.xpose.msra.mxu0 0.0
    %2731 = vmatprep.subr.mxu0 0.0
    %2732 = vmatpush1.xpose.msra.mxu0 0.0
    %2733 = vmatprep.subr.mxu0 0.0
    %2734 = vmatpush1.xpose.msra.mxu0 0.0
    %2735 = vmatprep.subr.mxu0 0.0
    %2736 = vmatpush1.xpose.msra.mxu0 0.0
    %2737 = vmatprep.subr.mxu0 0.0
    %2738 = vmatpush1.xpose.msra.mxu0 0.0
    %2739 = vmatprep.subr.mxu0 0.0
    %2740 = vmatpush1.xpose.msra.mxu0 0.0
    %2741 = vmatprep.subr.mxu0 0.0
    %2742 = vmatpush1.xpose.msra.mxu0 0.0
    %2743 = vmatprep.subr.mxu0 0.0
    %2744 = vmatpush1.xpose.msra.mxu0 0.0
    %2745 = vmatprep.mubr.f32.mxu0 0.0
    %2746 = vmatmul.mubr.f32.gmra.mrb[0].mxu0 %v2673
    %v2747 = vpop.f32.mrb[0].mxu0
    %v2748 = vadd.f32 %v144, %v2747
    %v2749 = vpop.f32.mrb[0].mxu0
    %2750 = vmatprep.mubr.f32.mxu0 0.0
    %2751 = vmatmul.mubr.f32.gmra.mrb[0].mxu0 %v2675
    %v2752 = vpop.f32.mrb[0].mxu0
    %v2753 = vadd.f32 %v145, %v2752
    %v2754 = vpop.f32.mrb[0].mxu0
    %2755 = vdwg.mxu0
    %v2756 = vsel %vm1690, %v2748, -inf
    %2757 = vmax.xlane.f32.xlu0 %v2756
    %v2758 = vpop.xlane.xlu0 %2757
    %v2759 = vsel %vm1690, %v2753, -inf
    %2760 = vmax.xlane.f32.xlu0 %v2759
    %v2761 = vpop.xlane.xlu0 %2760
    %v2762 = vsub.f32 %v2748, %v2758
    %v2763 = vsub.f32 %v2753, %v2761
    %v2764 = vmul.f32 %v2762, 1.442695
    %v2765 = vpow.pop %v2764
    %v2766 = vmul.f32 %v2763, 1.442695
    %v2767 = vpow.pop %v2766
    %v2768 = vsel %vm1690, %v2765, 0.0
    %2769 = vadd.xlane.f32.xlu0 %v2768
    %v2770 = vpop.xlane.xlu0 %2769
    %v2771 = vsel %vm1690, %v2767, 0.0
    %2772 = vadd.xlane.f32.xlu0 %v2771
    %v2773 = vpop.xlane.xlu0 %2772
    %v2774 = vrcp.pop %v2770
    %v2775 = vrcp.pop %v2773
    %v2776 = vmul.f32 %v2765, %v2774
    %v2777 = vmul.f32 %v2767, %v2775
    %2780 = vrot.lane.b32.xlu0 %v2467, 120
    %v2781 = vpop.permute.xlu0 %2780
    %2782 = vrot.lane.b32.xlu0 %v2472, 120
    %v2783 = vpop.permute.xlu0 %2782
    %v2787 = vsel %vm1690, %v2776, 0
    %v2790 = vsel %vm1690, %v2777, 0
    %2792 = vmatprep.subr.mxu0 0.0
    %2793 = vmatpush1.msra.mxu0 %v2781
    %2794 = vmatprep.subr.mxu0 0.0
    %2795 = vmatpush1.msra.mxu0 %v2783
    %2796 = vmatprep.subr.mxu0 0.0
    %2797 = vmatpush1.msra.mxu0 0.0
    %2798 = vmatprep.subr.mxu0 0.0
    %2799 = vmatpush1.msra.mxu0 0.0
    %2800 = vmatprep.subr.mxu0 0.0
    %2801 = vmatpush1.msra.mxu0 0.0
    %2802 = vmatprep.subr.mxu0 0.0
    %2803 = vmatpush1.msra.mxu0 0.0
    %2804 = vmatprep.subr.mxu0 0.0
    %2805 = vmatpush1.msra.mxu0 0.0
    %2806 = vmatprep.subr.mxu0 0.0
    %2807 = vmatpush1.msra.mxu0 0.0
    %2808 = vmatprep.subr.mxu0 0.0
    %2809 = vmatpush1.msra.mxu0 0.0
    %2810 = vmatprep.subr.mxu0 0.0
    %2811 = vmatpush1.msra.mxu0 0.0
    %2812 = vmatprep.subr.mxu0 0.0
    %2813 = vmatpush1.msra.mxu0 0.0
    %2814 = vmatprep.subr.mxu0 0.0
    %2815 = vmatpush1.msra.mxu0 0.0
    %2816 = vmatprep.subr.mxu0 0.0
    %2817 = vmatpush1.msra.mxu0 0.0
    %2818 = vmatprep.subr.mxu0 0.0
    %2819 = vmatpush1.msra.mxu0 0.0
    %2820 = vmatprep.subr.mxu0 0.0
    %2821 = vmatpush1.msra.mxu0 0.0
    %2822 = vmatprep.subr.mxu0 0.0
    %2823 = vmatpush1.msra.mxu0 0.0
    %2824 = vmatprep.subr.mxu0 0.0
    %2825 = vmatpush1.msra.mxu0 0.0
    %2826 = vmatprep.subr.mxu0 0.0
    %2827 = vmatpush1.msra.mxu0 0.0
    %2828 = vmatprep.subr.mxu0 0.0
    %2829 = vmatpush1.msra.mxu0 0.0
    %2830 = vmatprep.subr.mxu0 0.0
    %2831 = vmatpush1.msra.mxu0 0.0
    %2832 = vmatprep.subr.mxu0 0.0
    %2833 = vmatpush1.msra.mxu0 0.0
    %2834 = vmatprep.subr.mxu0 0.0
    %2835 = vmatpush1.msra.mxu0 0.0
    %2836 = vmatprep.subr.mxu0 0.0
    %2837 = vmatpush1.msra.mxu0 0.0
    %2838 = vmatprep.subr.mxu0 0.0
    %2839 = vmatpush1.msra.mxu0 0.0
    %2840 = vmatprep.subr.mxu0 0.0
    %2841 = vmatpush1.msra.mxu0 0.0
    %2842 = vmatprep.subr.mxu0 0.0
    %2843 = vmatpush1.msra.mxu0 0.0
    %2844 = vmatprep.subr.mxu0 0.0
    %2845 = vmatpush1.msra.mxu0 0.0
    %2846 = vmatprep.subr.mxu0 0.0
    %2847 = vmatpush1.msra.mxu0 0.0
    %2848 = vmatprep.subr.mxu0 0.0
    %2849 = vmatpush1.msra.mxu0 0.0
    %2850 = vmatprep.subr.mxu0 0.0
    %2851 = vmatpush1.msra.mxu0 0.0
    %2852 = vmatprep.subr.mxu0 0.0
    %2853 = vmatpush1.msra.mxu0 0.0
    %2854 = vmatprep.subr.mxu0 0.0
    %2855 = vmatpush1.msra.mxu0 0.0
    %2856 = vmatprep.mubr.f32.mxu0 0.0
    %2857 = vmatmul.mubr.f32.gmra.mrb[0].mxu0 %v2787
    %v2858 = vpop.f32.mrb[0].mxu0
    %v2859 = vadd.f32 0.0, %v2858
    %v2860 = vpop.f32.mrb[0].mxu0
    %2861 = vmatprep.mubr.f32.mxu0 0.0
    %2862 = vmatmul.mubr.f32.gmra.mrb[0].mxu0 %v2790
    %v2863 = vpop.f32.mrb[0].mxu0
    %v2864 = vadd.f32 0.0, %v2863
    %v2865 = vpop.f32.mrb[0].mxu0
    %2866 = vdwg.mxu0
    %2867 = vrot.lane.b32.xlu0 %v2288, 112
    %v2868 = vpop.permute.xlu0 %2867
    %2869 = vrot.lane.b32.xlu0 %v2293, 112
    %v2870 = vpop.permute.xlu0 %2869
    %2871 = vrot.lane.b32.xlu0 %v2376, 112
    %v2872 = vpop.permute.xlu0 %2871
    %2873 = vrot.lane.b32.xlu0 %v2381, 112
    %v2874 = vpop.permute.xlu0 %2873
    %v2875 = vsel %vm573, %v2868, 0
    %v2877 = vsel %vm573, %v2870, 0
    %v2879 = vsel %vm573, %v2872, 0
    %v2881 = vsel %vm573, %v2874, 0
    %2883 = vmatprep.subr.mxu0 0.0
    %2884 = vmatpush1.xpose.msra.mxu0 %v2879
    %2885 = vmatprep.subr.mxu0 0.0
    %2886 = vmatpush1.xpose.msra.mxu0 %v2881
    %2887 = vmatprep.subr.mxu0 0.0
    %2888 = vmatpush1.xpose.msra.mxu0 0.0
    %2889 = vmatprep.subr.mxu0 0.0
    %2890 = vmatpush1.xpose.msra.mxu0 0.0
    %2891 = vmatprep.subr.mxu0 0.0
    %2892 = vmatpush1.xpose.msra.mxu0 0.0
    %2893 = vmatprep.subr.mxu0 0.0
    %2894 = vmatpush1.xpose.msra.mxu0 0.0
    %2895 = vmatprep.subr.mxu0 0.0
    %2896 = vmatpush1.xpose.msra.mxu0 0.0
    %2897 = vmatprep.subr.mxu0 0.0
    %2898 = vmatpush1.xpose.msra.mxu0 0.0
    %2899 = vmatprep.subr.mxu0 0.0
    %2900 = vmatpush1.xpose.msra.mxu0 0.0
    %2901 = vmatprep.subr.mxu0 0.0
    %2902 = vmatpush1.xpose.msra.mxu0 0.0
    %2903 = vmatprep.subr.mxu0 0.0
    %2904 = vmatpush1.xpose.msra.mxu0 0.0
    %2905 = vmatprep.subr.mxu0 0.0
    %2906 = vmatpush1.xpose.msra.mxu0 0.0
    %2907 = vmatprep.subr.mxu0 0.0
    %2908 = vmatpush1.xpose.msra.mxu0 0.0
    %2909 = vmatprep.subr.mxu0 0.0
    %2910 = vmatpush1.xpose.msra.mxu0 0.0
    %2911 = vmatprep.subr.mxu0 0.0
    %2912 = vmatpush1.xpose.msra.mxu0 0.0
    %2913 = vmatprep.subr.mxu0 0.0
    %2914 = vmatpush1.xpose.msra.mxu0 0.0
    %2915 = vmatprep.subr.mxu0 0.0
    %2916 = vmatpush1.xpose.msra.mxu0 0.0
    %2917 = vmatprep.subr.mxu0 0.0
    %2918 = vmatpush1.xpose.msra.mxu0 0.0
    %2919 = vmatprep.subr.mxu0 0.0
    %2920 = vmatpush1.xpose.msra.mxu0 0.0
    %2921 = vmatprep.subr.mxu0 0.0
    %2922 = vmatpush1.xpose.msra.mxu0 0.0
    %2923 = vmatprep.subr.mxu0 0.0
    %2924 = vmatpush1.xpose.msra.mxu0 0.0
    %2925 = vmatprep.subr.mxu0 0.0
    %2926 = vmatpush1.xpose.msra.mxu0 0.0
    %2927 = vmatprep.subr.mxu0 0.0
    %2928 = vmatpush1.xpose.msra.mxu0 0.0
    %2929 = vmatprep.subr.mxu0 0.0
    %2930 = vmatpush1.xpose.msra.mxu0 0.0
    %2931 = vmatprep.subr.mxu0 0.0
    %2932 = vmatpush1.xpose.msra.mxu0 0.0
    %2933 = vmatprep.subr.mxu0 0.0
    %2934 = vmatpush1.xpose.msra.mxu0 0.0
    %2935 = vmatprep.subr.mxu0 0.0
    %2936 = vmatpush1.xpose.msra.mxu0 0.0
    %2937 = vmatprep.subr.mxu0 0.0
    %2938 = vmatpush1.xpose.msra.mxu0 0.0
    %2939 = vmatprep.subr.mxu0 0.0
    %2940 = vmatpush1.xpose.msra.mxu0 0.0
    %2941 = vmatprep.subr.mxu0 0.0
    %2942 = vmatpush1.xpose.msra.mxu0 0.0
    %2943 = vmatprep.subr.mxu0 0.0
    %2944 = vmatpush1.xpose.msra.mxu0 0.0
    %2945 = vmatprep.subr.mxu0 0.0
    %2946 = vmatpush1.xpose.msra.mxu0 0.0
    %2947 = vmatprep.mubr.f32.mxu0 0.0
    %2948 = vmatmul.mubr.f32.gmra.mrb[0].mxu0 %v2875
    %v2949 = vpop.f32.mrb[0].mxu0
    %v2950 = vadd.f32 %v144, %v2949
    %v2951 = vpop.f32.mrb[0].mxu0
    %2952 = vmatprep.mubr.f32.mxu0 0.0
    %2953 = vmatmul.mubr.f32.gmra.mrb[0].mxu0 %v2877
    %v2954 = vpop.f32.mrb[0].mxu0
    %v2955 = vadd.f32 %v145, %v2954
    %v2956 = vpop.f32.mrb[0].mxu0
    %2957 = vdwg.mxu0
    %v2958 = vsel %vm1690, %v2950, -inf
    %2959 = vmax.xlane.f32.xlu0 %v2958
    %v2960 = vpop.xlane.xlu0 %2959
    %v2961 = vsel %vm1690, %v2955, -inf
    %2962 = vmax.xlane.f32.xlu0 %v2961
    %v2963 = vpop.xlane.xlu0 %2962
    %v2964 = vsub.f32 %v2950, %v2960
    %v2965 = vsub.f32 %v2955, %v2963
    %v2966 = vmul.f32 %v2964, 1.442695
    %v2967 = vpow.pop %v2966
    %v2968 = vmul.f32 %v2965, 1.442695
    %v2969 = vpow.pop %v2968
    %v2970 = vsel %vm1690, %v2967, 0.0
    %2971 = vadd.xlane.f32.xlu0 %v2970
    %v2972 = vpop.xlane.xlu0 %2971
    %v2973 = vsel %vm1690, %v2969, 0.0
    %2974 = vadd.xlane.f32.xlu0 %v2973
    %v2975 = vpop.xlane.xlu0 %2974
    %v2976 = vrcp.pop %v2972
    %v2977 = vrcp.pop %v2975
    %v2978 = vmul.f32 %v2967, %v2976
    %v2979 = vmul.f32 %v2969, %v2977
    %2980 = vrot.lane.b32.xlu0 %v2467, 112
    %v2981 = vpop.permute.xlu0 %2980
    %2982 = vrot.lane.b32.xlu0 %v2472, 112
    %v2983 = vpop.permute.xlu0 %2982
    %v2987 = vsel %vm1690, %v2978, 0
    %v2990 = vsel %vm1690, %v2979, 0
    %2992 = vmatprep.subr.mxu0 0.0
    %2993 = vmatpush1.msra.mxu0 %v2981
    %2994 = vmatprep.subr.mxu0 0.0
    %2995 = vmatpush1.msra.mxu0 %v2983
    %2996 = vmatprep.subr.mxu0 0.0
    %2997 = vmatpush1.msra.mxu0 0.0
    %2998 = vmatprep.subr.mxu0 0.0
    %2999 = vmatpush1.msra.mxu0 0.0
    %3000 = vmatprep.subr.mxu0 0.0
    %3001 = vmatpush1.msra.mxu0 0.0
    %3002 = vmatprep.subr.mxu0 0.0
    %3003 = vmatpush1.msra.mxu0 0.0
    %3004 = vmatprep.subr.mxu0 0.0
    %3005 = vmatpush1.msra.mxu0 0.0
    %3006 = vmatprep.subr.mxu0 0.0
    %3007 = vmatpush1.msra.mxu0 0.0
    %3008 = vmatprep.subr.mxu0 0.0
    %3009 = vmatpush1.msra.mxu0 0.0
    %3010 = vmatprep.subr.mxu0 0.0
    %3011 = vmatpush1.msra.mxu0 0.0
    %3012 = vmatprep.subr.mxu0 0.0
    %3013 = vmatpush1.msra.mxu0 0.0
    %3014 = vmatprep.subr.mxu0 0.0
    %3015 = vmatpush1.msra.mxu0 0.0
    %3016 = vmatprep.subr.mxu0 0.0
    %3017 = vmatpush1.msra.mxu0 0.0
    %3018 = vmatprep.subr.mxu0 0.0
    %3019 = vmatpush1.msra.mxu0 0.0
    %3020 = vmatprep.subr.mxu0 0.0
    %3021 = vmatpush1.msra.mxu0 0.0
    %3022 = vmatprep.subr.mxu0 0.0
    %3023 = vmatpush1.msra.mxu0 0.0
    %3024 = vmatprep.subr.mxu0 0.0
    %3025 = vmatpush1.msra.mxu0 0.0
    %3026 = vmatprep.subr.mxu0 0.0
    %3027 = vmatpush1.msra.mxu0 0.0
    %3028 = vmatprep.subr.mxu0 0.0
    %3029 = vmatpush1.msra.mxu0 0.0
    %3030 = vmatprep.subr.mxu0 0.0
    %3031 = vmatpush1.msra.mxu0 0.0
    %3032 = vmatprep.subr.mxu0 0.0
    %3033 = vmatpush1.msra.mxu0 0.0
    %3034 = vmatprep.subr.mxu0 0.0
    %3035 = vmatpush1.msra.mxu0 0.0
    %3036 = vmatprep.subr.mxu0 0.0
    %3037 = vmatpush1.msra.mxu0 0.0
    %3038 = vmatprep.subr.mxu0 0.0
    %3039 = vmatpush1.msra.mxu0 0.0
    %3040 = vmatprep.subr.mxu0 0.0
    %3041 = vmatpush1.msra.mxu0 0.0
    %3042 = vmatprep.subr.mxu0 0.0
    %3043 = vmatpush1.msra.mxu0 0.0
    %3044 = vmatprep.subr.mxu0 0.0
    %3045 = vmatpush1.msra.mxu0 0.0
    %3046 = vmatprep.subr.mxu0 0.0
    %3047 = vmatpush1.msra.mxu0 0.0
    %3048 = vmatprep.subr.mxu0 0.0
    %3049 = vmatpush1.msra.mxu0 0.0
    %3050 = vmatprep.subr.mxu0 0.0
    %3051 = vmatpush1.msra.mxu0 0.0
    %3052 = vmatprep.subr.mxu0 0.0
    %3053 = vmatpush1.msra.mxu0 0.0
    %3054 = vmatprep.subr.mxu0 0.0
    %3055 = vmatpush1.msra.mxu0 0.0
    %3056 = vmatprep.mubr.f32.mxu0 0.0
    %3057 = vmatmul.mubr.f32.gmra.mrb[0].mxu0 %v2987
    %v3058 = vpop.f32.mrb[0].mxu0
    %v3059 = vadd.f32 0.0, %v3058
    %v3060 = vpop.f32.mrb[0].mxu0
    %3061 = vmatprep.mubr.f32.mxu0 0.0
    %3062 = vmatmul.mubr.f32.gmra.mrb[0].mxu0 %v2990
    %v3063 = vpop.f32.mrb[0].mxu0
    %v3064 = vadd.f32 0.0, %v3063
    %v3065 = vpop.f32.mrb[0].mxu0
    %3066 = vdwg.mxu0
    %3067 = vrot.lane.b32.xlu0 %v2288, 104
    %v3068 = vpop.permute.xlu0 %3067
    %3069 = vrot.lane.b32.xlu0 %v2293, 104
    %v3070 = vpop.permute.xlu0 %3069
    %3071 = vrot.lane.b32.xlu0 %v2376, 104
    %v3072 = vpop.permute.xlu0 %3071
    %3073 = vrot.lane.b32.xlu0 %v2381, 104
    %v3074 = vpop.permute.xlu0 %3073
    %v3075 = vsel %vm573, %v3068, 0
    %v3077 = vsel %vm573, %v3070, 0
    %v3079 = vsel %vm573, %v3072, 0
    %v3081 = vsel %vm573, %v3074, 0
    %3083 = vmatprep.subr.mxu0 0.0
    %3084 = vmatpush1.xpose.msra.mxu0 %v3079
    %3085 = vmatprep.subr.mxu0 0.0
    %3086 = vmatpush1.xpose.msra.mxu0 %v3081
    %3087 = vmatprep.subr.mxu0 0.0
    %3088 = vmatpush1.xpose.msra.mxu0 0.0
    %3089 = vmatprep.subr.mxu0 0.0
    %3090 = vmatpush1.xpose.msra.mxu0 0.0
    %3091 = vmatprep.subr.mxu0 0.0
    %3092 = vmatpush1.xpose.msra.mxu0 0.0
    %3093 = vmatprep.subr.mxu0 0.0
    %3094 = vmatpush1.xpose.msra.mxu0 0.0
    %3095 = vmatprep.subr.mxu0 0.0
    %3096 = vmatpush1.xpose.msra.mxu0 0.0
    %3097 = vmatprep.subr.mxu0 0.0
    %3098 = vmatpush1.xpose.msra.mxu0 0.0
    %3099 = vmatprep.subr.mxu0 0.0
    %3100 = vmatpush1.xpose.msra.mxu0 0.0
    %3101 = vmatprep.subr.mxu0 0.0
    %3102 = vmatpush1.xpose.msra.mxu0 0.0
    %3103 = vmatprep.subr.mxu0 0.0
    %3104 = vmatpush1.xpose.msra.mxu0 0.0
    %3105 = vmatprep.subr.mxu0 0.0
    %3106 = vmatpush1.xpose.msra.mxu0 0.0
    %3107 = vmatprep.subr.mxu0 0.0
    %3108 = vmatpush1.xpose.msra.mxu0 0.0
    %3109 = vmatprep.subr.mxu0 0.0
    %3110 = vmatpush1.xpose.msra.mxu0 0.0
    %3111 = vmatprep.subr.mxu0 0.0
    %3112 = vmatpush1.xpose.msra.mxu0 0.0
    %3113 = vmatprep.subr.mxu0 0.0
    %3114 = vmatpush1.xpose.msra.mxu0 0.0
    %3115 = vmatprep.subr.mxu0 0.0
    %3116 = vmatpush1.xpose.msra.mxu0 0.0
    %3117 = vmatprep.subr.mxu0 0.0
    %3118 = vmatpush1.xpose.msra.mxu0 0.0
    %3119 = vmatprep.subr.mxu0 0.0
    %3120 = vmatpush1.xpose.msra.mxu0 0.0
    %3121 = vmatprep.subr.mxu0 0.0
    %3122 = vmatpush1.xpose.msra.mxu0 0.0
    %3123 = vmatprep.subr.mxu0 0.0
    %3124 = vmatpush1.xpose.msra.mxu0 0.0
    %3125 = vmatprep.subr.mxu0 0.0
    %3126 = vmatpush1.xpose.msra.mxu0 0.0
    %3127 = vmatprep.subr.mxu0 0.0
    %3128 = vmatpush1.xpose.msra.mxu0 0.0
    %3129 = vmatprep.subr.mxu0 0.0
    %3130 = vmatpush1.xpose.msra.mxu0 0.0
    %3131 = vmatprep.subr.mxu0 0.0
    %3132 = vmatpush1.xpose.msra.mxu0 0.0
    %3133 = vmatprep.subr.mxu0 0.0
    %3134 = vmatpush1.xpose.msra.mxu0 0.0
    %3135 = vmatprep.subr.mxu0 0.0
    %3136 = vmatpush1.xpose.msra.mxu0 0.0
    %3137 = vmatprep.subr.mxu0 0.0
    %3138 = vmatpush1.xpose.msra.mxu0 0.0
    %3139 = vmatprep.subr.mxu0 0.0
    %3140 = vmatpush1.xpose.msra.mxu0 0.0
    %3141 = vmatprep.subr.mxu0 0.0
    %3142 = vmatpush1.xpose.msra.mxu0 0.0
    %3143 = vmatprep.subr.mxu0 0.0
    %3144 = vmatpush1.xpose.msra.mxu0 0.0
    %3145 = vmatprep.subr.mxu0 0.0
    %3146 = vmatpush1.xpose.msra.mxu0 0.0
    %3147 = vmatprep.mubr.f32.mxu0 0.0
    %3148 = vmatmul.mubr.f32.gmra.mrb[0].mxu0 %v3075
    %v3149 = vpop.f32.mrb[0].mxu0
    %v3150 = vadd.f32 %v144, %v3149
    %v3151 = vpop.f32.mrb[0].mxu0
    %3152 = vmatprep.mubr.f32.mxu0 0.0
    %3153 = vmatmul.mubr.f32.gmra.mrb[0].mxu0 %v3077
    %v3154 = vpop.f32.mrb[0].mxu0
    %v3155 = vadd.f32 %v145, %v3154
    %v3156 = vpop.f32.mrb[0].mxu0
    %3157 = vdwg.mxu0
    %v3158 = vsel %vm1690, %v3150, -inf
    %3159 = vmax.xlane.f32.xlu0 %v3158
    %v3160 = vpop.xlane.xlu0 %3159
    %v3161 = vsel %vm1690, %v3155, -inf
    %3162 = vmax.xlane.f32.xlu0 %v3161
    %v3163 = vpop.xlane.xlu0 %3162
    %v3164 = vsub.f32 %v3150, %v3160
    %v3165 = vsub.f32 %v3155, %v3163
    %v3166 = vmul.f32 %v3164, 1.442695
    %v3167 = vpow.pop %v3166
    %v3168 = vmul.f32 %v3165, 1.442695
    %v3169 = vpow.pop %v3168
    %v3170 = vsel %vm1690, %v3167, 0.0
    %3171 = vadd.xlane.f32.xlu0 %v3170
    %v3172 = vpop.xlane.xlu0 %3171
    %v3173 = vsel %vm1690, %v3169, 0.0
    %3174 = vadd.xlane.f32.xlu0 %v3173
    %v3175 = vpop.xlane.xlu0 %3174
    %v3176 = vrcp.pop %v3172
    %v3177 = vrcp.pop %v3175
    %v3178 = vmul.f32 %v3167, %v3176
    %v3179 = vmul.f32 %v3169, %v3177
    %3180 = vrot.lane.b32.xlu0 %v2467, 104
    %v3181 = vpop.permute.xlu0 %3180
    %3182 = vrot.lane.b32.xlu0 %v2472, 104
    %v3183 = vpop.permute.xlu0 %3182
    %v3187 = vsel %vm1690, %v3178, 0
    %v3190 = vsel %vm1690, %v3179, 0
    %3192 = vmatprep.subr.mxu0 0.0
    %3193 = vmatpush1.msra.mxu0 %v3181
    %3194 = vmatprep.subr.mxu0 0.0
    %3195 = vmatpush1.msra.mxu0 %v3183
    %3196 = vmatprep.subr.mxu0 0.0
    %3197 = vmatpush1.msra.mxu0 0.0
    %3198 = vmatprep.subr.mxu0 0.0
    %3199 = vmatpush1.msra.mxu0 0.0
    %3200 = vmatprep.subr.mxu0 0.0
    %3201 = vmatpush1.msra.mxu0 0.0
    %3202 = vmatprep.subr.mxu0 0.0
    %3203 = vmatpush1.msra.mxu0 0.0
    %3204 = vmatprep.subr.mxu0 0.0
    %3205 = vmatpush1.msra.mxu0 0.0
    %3206 = vmatprep.subr.mxu0 0.0
    %3207 = vmatpush1.msra.mxu0 0.0
    %3208 = vmatprep.subr.mxu0 0.0
    %3209 = vmatpush1.msra.mxu0 0.0
    %3210 = vmatprep.subr.mxu0 0.0
    %3211 = vmatpush1.msra.mxu0 0.0
    %3212 = vmatprep.subr.mxu0 0.0
    %3213 = vmatpush1.msra.mxu0 0.0
    %3214 = vmatprep.subr.mxu0 0.0
    %3215 = vmatpush1.msra.mxu0 0.0
    %3216 = vmatprep.subr.mxu0 0.0
    %3217 = vmatpush1.msra.mxu0 0.0
    %3218 = vmatprep.subr.mxu0 0.0
    %3219 = vmatpush1.msra.mxu0 0.0
    %3220 = vmatprep.subr.mxu0 0.0
    %3221 = vmatpush1.msra.mxu0 0.0
    %3222 = vmatprep.subr.mxu0 0.0
    %3223 = vmatpush1.msra.mxu0 0.0
    %3224 = vmatprep.subr.mxu0 0.0
    %3225 = vmatpush1.msra.mxu0 0.0
    %3226 = vmatprep.subr.mxu0 0.0
    %3227 = vmatpush1.msra.mxu0 0.0
    %3228 = vmatprep.subr.mxu0 0.0
    %3229 = vmatpush1.msra.mxu0 0.0
    %3230 = vmatprep.subr.mxu0 0.0
    %3231 = vmatpush1.msra.mxu0 0.0
    %3232 = vmatprep.subr.mxu0 0.0
    %3233 = vmatpush1.msra.mxu0 0.0
    %3234 = vmatprep.subr.mxu0 0.0
    %3235 = vmatpush1.msra.mxu0 0.0
    %3236 = vmatprep.subr.mxu0 0.0
    %3237 = vmatpush1.msra.mxu0 0.0
    %3238 = vmatprep.subr.mxu0 0.0
    %3239 = vmatpush1.msra.mxu0 0.0
    %3240 = vmatprep.subr.mxu0 0.0
    %3241 = vmatpush1.msra.mxu0 0.0
    %3242 = vmatprep.subr.mxu0 0.0
    %3243 = vmatpush1.msra.mxu0 0.0
    %3244 = vmatprep.subr.mxu0 0.0
    %3245 = vmatpush1.msra.mxu0 0.0
    %3246 = vmatprep.subr.mxu0 0.0
    %3247 = vmatpush1.msra.mxu0 0.0
    %3248 = vmatprep.subr.mxu0 0.0
    %3249 = vmatpush1.msra.mxu0 0.0
    %3250 = vmatprep.subr.mxu0 0.0
    %3251 = vmatpush1.msra.mxu0 0.0
    %3252 = vmatprep.subr.mxu0 0.0
    %3253 = vmatpush1.msra.mxu0 0.0
    %3254 = vmatprep.subr.mxu0 0.0
    %3255 = vmatpush1.msra.mxu0 0.0
    %3256 = vmatprep.mubr.f32.mxu0 0.0
    %3257 = vmatmul.mubr.f32.gmra.mrb[0].mxu0 %v3187
    %v3258 = vpop.f32.mrb[0].mxu0
    %v3259 = vadd.f32 0.0, %v3258
    %v3260 = vpop.f32.mrb[0].mxu0
    %3261 = vmatprep.mubr.f32.mxu0 0.0
    %3262 = vmatmul.mubr.f32.gmra.mrb[0].mxu0 %v3190
    %v3263 = vpop.f32.mrb[0].mxu0
    %v3264 = vadd.f32 0.0, %v3263
    %v3265 = vpop.f32.mrb[0].mxu0
    %3266 = vdwg.mxu0
    %3269 = vrot.lane.b32.xlu0 %v2859, 8
    %v3270 = vpop.permute.xlu0 %3269
    %3271 = vrot.lane.b32.xlu0 %v2864, 8
    %v3272 = vpop.permute.xlu0 %3271
    %3277 = vrot.lane.b32.xlu0 %v3059, 16
    %v3278 = vpop.permute.xlu0 %3277
    %3279 = vrot.lane.b32.xlu0 %v3064, 16
    %v3280 = vpop.permute.xlu0 %3279
    %3285 = vrot.lane.b32.xlu0 %v3259, 24
    %v3286 = vpop.permute.xlu0 %3285
    %3287 = vrot.lane.b32.xlu0 %v3264, 24
    %v3288 = vpop.permute.xlu0 %3287
    %v3291 = vsel %vm573, %v2657, %v3270
    %v3292 = vsel %vm573, %v2662, %v3272
    %v3293 = vsel %vm1690, %v3291, %v3278
    %v3294 = vsel %vm1690, %v3292, %v3280
    %v3295 = vsel %vm1695, %v3293, %v3286
    %v3296 = vsel %vm1695, %v3294, %v3288
    %s3297 = scalar_lea.vmem %s33, 96
    %v3298 = vld [vmem:[%s3297] sm:$0xff]
    %v3299 = vld [vmem:[%s3297 + $0x8] sm:$0xff]
    %v3300 = vld [vmem:[%s3297 + $0x10] sm:$0xff]
    %v3301 = vld [vmem:[%s3297 + $0x18] sm:$0xff]
    %s3302 = scalar_lea.vmem %s35, 3
    %v3303 = vld [vmem:[%s3302] sm:$0x1]
    %v3305 = vlaneseq
    %v3306 = vshrl.u32 %v3305, 7
    %v3307 = vsub.s32 0, %v3306
    %v3308 = vrot.slane %v3303, %v3307
    %v3311 = vsel %vm267, %v3295, 0
    %v3314 = vsel %vm267, %v3296, 0
    %3316 = vmatprep.subr.mxu0 0.0
    %3317 = vmatpush1.msra.mxu0 %v3298
    %3318 = vmatprep.subr.mxu0 0.0
    %3319 = vmatpush1.msra.mxu0 %v3299
    %3320 = vmatprep.subr.mxu0 0.0
    %3321 = vmatpush1.msra.mxu0 %v3300
    %3322 = vmatprep.subr.mxu0 0.0
    %3323 = vmatpush1.msra.mxu0 %v3301
    %3324 = vmatprep.subr.mxu0 0.0
    %3325 = vmatpush1.msra.mxu0 0.0
    %3326 = vmatprep.subr.mxu0 0.0
    %3327 = vmatpush1.msra.mxu0 0.0
    %3328 = vmatprep.subr.mxu0 0.0
    %3329 = vmatpush1.msra.mxu0 0.0
    %3330 = vmatprep.subr.mxu0 0.0
    %3331 = vmatpush1.msra.mxu0 0.0
    %3332 = vmatprep.subr.mxu0 0.0
    %3333 = vmatpush1.msra.mxu0 0.0
    %3334 = vmatprep.subr.mxu0 0.0
    %3335 = vmatpush1.msra.mxu0 0.0
    %3336 = vmatprep.subr.mxu0 0.0
    %3337 = vmatpush1.msra.mxu0 0.0
    %3338 = vmatprep.subr.mxu0 0.0
    %3339 = vmatpush1.msra.mxu0 0.0
    %3340 = vmatprep.subr.mxu0 0.0
    %3341 = vmatpush1.msra.mxu0 0.0
    %3342 = vmatprep.subr.mxu0 0.0
    %3343 = vmatpush1.msra.mxu0 0.0
    %3344 = vmatprep.subr.mxu0 0.0
    %3345 = vmatpush1.msra.mxu0 0.0
    %3346 = vmatprep.subr.mxu0 0.0
    %3347 = vmatpush1.msra.mxu0 0.0
    %3348 = vmatprep.subr.mxu0 0.0
    %3349 = vmatpush1.msra.mxu0 0.0
    %3350 = vmatprep.subr.mxu0 0.0
    %3351 = vmatpush1.msra.mxu0 0.0
    %3352 = vmatprep.subr.mxu0 0.0
    %3353 = vmatpush1.msra.mxu0 0.0
    %3354 = vmatprep.subr.mxu0 0.0
    %3355 = vmatpush1.msra.mxu0 0.0
    %3356 = vmatprep.subr.mxu0 0.0
    %3357 = vmatpush1.msra.mxu0 0.0
    %3358 = vmatprep.subr.mxu0 0.0
    %3359 = vmatpush1.msra.mxu0 0.0
    %3360 = vmatprep.subr.mxu0 0.0
    %3361 = vmatpush1.msra.mxu0 0.0
    %3362 = vmatprep.subr.mxu0 0.0
    %3363 = vmatpush1.msra.mxu0 0.0
    %3364 = vmatprep.subr.mxu0 0.0
    %3365 = vmatpush1.msra.mxu0 0.0
    %3366 = vmatprep.subr.mxu0 0.0
    %3367 = vmatpush1.msra.mxu0 0.0
    %3368 = vmatprep.subr.mxu0 0.0
    %3369 = vmatpush1.msra.mxu0 0.0
    %3370 = vmatprep.subr.mxu0 0.0
    %3371 = vmatpush1.msra.mxu0 0.0
    %3372 = vmatprep.subr.mxu0 0.0
    %3373 = vmatpush1.msra.mxu0 0.0
    %3374 = vmatprep.subr.mxu0 0.0
    %3375 = vmatpush1.msra.mxu0 0.0
    %3376 = vmatprep.subr.mxu0 0.0
    %3377 = vmatpush1.msra.mxu0 0.0
    %3378 = vmatprep.subr.mxu0 0.0
    %3379 = vmatpush1.msra.mxu0 0.0
    %3380 = vmatprep.mubr.f32.mxu0 0.0
    %3381 = vmatmul.mubr.f32.gmra.mrb[0].mxu0 %v3311
    %v3382 = vpop.f32.mrb[0].mxu0
    %v3383 = vadd.f32 %v3308, %v3382
    %v3384 = vpop.f32.mrb[0].mxu0
    %3385 = vmatprep.mubr.f32.mxu0 0.0
    %3386 = vmatmul.mubr.f32.gmra.mrb[0].mxu0 %v3314
    %v3387 = vpop.f32.mrb[0].mxu0
    %v3388 = vadd.f32 %v3308, %v3387
    %v3389 = vpop.f32.mrb[0].mxu0
    %3390 = vdwg.mxu0
    %v3391 = vadd.f32 %v3383, 0.0
    %v3392 = vadd.f32 %v3388, 0.0
    %v3393 = vld [vmem:[%s37] sm:$0x1]
    %s3394 = scalar_lea.vmem %s37, 1
    %v3395 = vld [vmem:[%s3394] sm:$0x1]
    %v3396 = vsel %vm267, %v3391, 0.0
    %3397 = vadd.xlane.f32.xlu0 %v3396
    %v3398 = vpop.xlane.xlu0 %3397
    %v3399 = vsel %vm267, %v3392, 0.0
    %3400 = vadd.xlane.f32.xlu0 %v3399
    %v3401 = vpop.xlane.xlu0 %3400
    %v3402 = vmul.f32 %v3398, %v1829
    %v3403 = vmul.f32 %v3401, %v1829
    %v3404 = vsub.f32 %v3391, %v3402
    %v3405 = vsub.f32 %v3392, %v3403
    %v3406 = vmul.f32 %v3404, %v3404
    %v3407 = vmul.f32 %v3405, %v3405
    %v3408 = vsel %vm267, %v3406, 0.0
    %3409 = vadd.xlane.f32.xlu0 %v3408
    %v3410 = vpop.xlane.xlu0 %3409
    %v3411 = vsel %vm267, %v3407, 0.0
    %3412 = vadd.xlane.f32.xlu0 %v3411
    %v3413 = vpop.xlane.xlu0 %3412
    %v3414 = vmul.f32 %v3410, %v1829
    %v3415 = vmul.f32 %v3413, %v1829
    %v3416 = vadd.f32 %v3414, 1e-05
    %v3417 = vadd.f32 %v3415, 1e-05
    %v3418 = vrsqrt.pop %v3416
    %v3419 = vrsqrt.pop %v3417
    %v3420 = vmul.f32 %v3404, %v3418
    %v3421 = vmul.f32 %v3405, %v3419
    %v3423 = vlaneseq
    %v3424 = vshrl.u32 %v3423, 7
    %v3425 = vsub.s32 0, %v3424
    %v3426 = vrot.slane %v3393, %v3425
    %v3428 = vmul.f32 %v3420, %v3426
    %v3429 = vmul.f32 %v3421, %v3426
    %v3431 = vlaneseq
    %v3432 = vshrl.u32 %v3431, 7
    %v3433 = vsub.s32 0, %v3432
    %v3434 = vrot.slane %v3395, %v3433
    %v3436 = vadd.f32 %v3428, %v3434
    %v3437 = vadd.f32 %v3429, %v3434
    %v3438 = vadd.f32 %v3436, %v138
    %v3439 = vadd.f32 %v3437, %v139
    %v3440 = vld [vmem:[%s39] sm:$0xff]
    %v3441 = vld [vmem:[%s39 + $0x8] sm:$0xff]
    %v3442 = vld [vmem:[%s39 + $0x10] sm:$0xff]
    %v3443 = vld [vmem:[%s39 + $0x18] sm:$0xff]
    %v3444 = vld [vmem:[%s41] sm:$0x1]
    %v3446 = vlaneseq
    %v3447 = vshrl.u32 %v3446, 7
    %v3448 = vsub.s32 0, %v3447
    %v3449 = vrot.slane %v3444, %v3448
    %v3452 = vsel %vm267, %v3438, 0
    %v3455 = vsel %vm267, %v3439, 0
    %3457 = vmatprep.subr.mxu0 0.0
    %3458 = vmatpush1.msra.mxu0 %v3440
    %3459 = vmatprep.subr.mxu0 0.0
    %3460 = vmatpush1.msra.mxu0 %v3441
    %3461 = vmatprep.subr.mxu0 0.0
    %3462 = vmatpush1.msra.mxu0 %v3442
    %3463 = vmatprep.subr.mxu0 0.0
    %3464 = vmatpush1.msra.mxu0 %v3443
    %3465 = vmatprep.subr.mxu0 0.0
    %3466 = vmatpush1.msra.mxu0 0.0
    %3467 = vmatprep.subr.mxu0 0.0
    %3468 = vmatpush1.msra.mxu0 0.0
    %3469 = vmatprep.subr.mxu0 0.0
    %3470 = vmatpush1.msra.mxu0 0.0
    %3471 = vmatprep.subr.mxu0 0.0
    %3472 = vmatpush1.msra.mxu0 0.0
    %3473 = vmatprep.subr.mxu0 0.0
    %3474 = vmatpush1.msra.mxu0 0.0
    %3475 = vmatprep.subr.mxu0 0.0
    %3476 = vmatpush1.msra.mxu0 0.0
    %3477 = vmatprep.subr.mxu0 0.0
    %3478 = vmatpush1.msra.mxu0 0.0
    %3479 = vmatprep.subr.mxu0 0.0
    %3480 = vmatpush1.msra.mxu0 0.0
    %3481 = vmatprep.subr.mxu0 0.0
    %3482 = vmatpush1.msra.mxu0 0.0
    %3483 = vmatprep.subr.mxu0 0.0
    %3484 = vmatpush1.msra.mxu0 0.0
    %3485 = vmatprep.subr.mxu0 0.0
    %3486 = vmatpush1.msra.mxu0 0.0
    %3487 = vmatprep.subr.mxu0 0.0
    %3488 = vmatpush1.msra.mxu0 0.0
    %3489 = vmatprep.subr.mxu0 0.0
    %3490 = vmatpush1.msra.mxu0 0.0
    %3491 = vmatprep.subr.mxu0 0.0
    %3492 = vmatpush1.msra.mxu0 0.0
    %3493 = vmatprep.subr.mxu0 0.0
    %3494 = vmatpush1.msra.mxu0 0.0
    %3495 = vmatprep.subr.mxu0 0.0
    %3496 = vmatpush1.msra.mxu0 0.0
    %3497 = vmatprep.subr.mxu0 0.0
    %3498 = vmatpush1.msra.mxu0 0.0
    %3499 = vmatprep.subr.mxu0 0.0
    %3500 = vmatpush1.msra.mxu0 0.0
    %3501 = vmatprep.subr.mxu0 0.0
    %3502 = vmatpush1.msra.mxu0 0.0
    %3503 = vmatprep.subr.mxu0 0.0
    %3504 = vmatpush1.msra.mxu0 0.0
    %3505 = vmatprep.subr.mxu0 0.0
    %3506 = vmatpush1.msra.mxu0 0.0
    %3507 = vmatprep.subr.mxu0 0.0
    %3508 = vmatpush1.msra.mxu0 0.0
    %3509 = vmatprep.subr.mxu0 0.0
    %3510 = vmatpush1.msra.mxu0 0.0
    %3511 = vmatprep.subr.mxu0 0.0
    %3512 = vmatpush1.msra.mxu0 0.0
    %3513 = vmatprep.subr.mxu0 0.0
    %3514 = vmatpush1.msra.mxu0 0.0
    %3515 = vmatprep.subr.mxu0 0.0
    %3516 = vmatpush1.msra.mxu0 0.0
    %3517 = vmatprep.subr.mxu0 0.0
    %3518 = vmatpush1.msra.mxu0 0.0
    %3519 = vmatprep.subr.mxu0 0.0
    %3520 = vmatpush1.msra.mxu0 0.0
    %3521 = vmatprep.mubr.f32.mxu0 0.0
    %3522 = vmatmul.mubr.f32.gmra.mrb[0].mxu0 %v3452
    %v3523 = vpop.f32.mrb[0].mxu0
    %v3524 = vadd.f32 %v3449, %v3523
    %v3525 = vpop.f32.mrb[0].mxu0
    %3526 = vmatprep.mubr.f32.mxu0 0.0
    %3527 = vmatmul.mubr.f32.gmra.mrb[0].mxu0 %v3455
    %v3528 = vpop.f32.mrb[0].mxu0
    %v3529 = vadd.f32 %v3449, %v3528
    %v3530 = vpop.f32.mrb[0].mxu0
    %3531 = vdwg.mxu0
    %s3532 = scalar_lea.vmem %s39, 32
    %v3533 = vld [vmem:[%s3532] sm:$0xff]
    %v3534 = vld [vmem:[%s3532 + $0x8] sm:$0xff]
    %v3535 = vld [vmem:[%s3532 + $0x10] sm:$0xff]
    %v3536 = vld [vmem:[%s3532 + $0x18] sm:$0xff]
    %s3537 = scalar_lea.vmem %s41, 1
    %v3538 = vld [vmem:[%s3537] sm:$0x1]
    %v3540 = vlaneseq
    %v3541 = vshrl.u32 %v3540, 7
    %v3542 = vsub.s32 0, %v3541
    %v3543 = vrot.slane %v3538, %v3542
    %v3546 = vsel %vm267, %v2198, 0
    %v3549 = vsel %vm267, %v2199, 0
    %v3552 = vsel %vm267, %v2200, 0
    %v3555 = vsel %vm267, %v2201, 0
    %3557 = vmatprep.subr.mxu0 0.0
    %3558 = vmatpush1.msra.mxu0 %v3533
    %3559 = vmatprep.subr.mxu0 0.0
    %3560 = vmatpush1.msra.mxu0 %v3534
    %3561 = vmatprep.subr.mxu0 0.0
    %3562 = vmatpush1.msra.mxu0 %v3535
    %3563 = vmatprep.subr.mxu0 0.0
    %3564 = vmatpush1.msra.mxu0 %v3536
    %3565 = vmatprep.subr.mxu0 0.0
    %3566 = vmatpush1.msra.mxu0 0.0
    %3567 = vmatprep.subr.mxu0 0.0
    %3568 = vmatpush1.msra.mxu0 0.0
    %3569 = vmatprep.subr.mxu0 0.0
    %3570 = vmatpush1.msra.mxu0 0.0
    %3571 = vmatprep.subr.mxu0 0.0
    %3572 = vmatpush1.msra.mxu0 0.0
    %3573 = vmatprep.subr.mxu0 0.0
    %3574 = vmatpush1.msra.mxu0 0.0
    %3575 = vmatprep.subr.mxu0 0.0
    %3576 = vmatpush1.msra.mxu0 0.0
    %3577 = vmatprep.subr.mxu0 0.0
    %3578 = vmatpush1.msra.mxu0 0.0
    %3579 = vmatprep.subr.mxu0 0.0
    %3580 = vmatpush1.msra.mxu0 0.0
    %3581 = vmatprep.subr.mxu0 0.0
    %3582 = vmatpush1.msra.mxu0 0.0
    %3583 = vmatprep.subr.mxu0 0.0
    %3584 = vmatpush1.msra.mxu0 0.0
    %3585 = vmatprep.subr.mxu0 0.0
    %3586 = vmatpush1.msra.mxu0 0.0
    %3587 = vmatprep.subr.mxu0 0.0
    %3588 = vmatpush1.msra.mxu0 0.0
    %3589 = vmatprep.subr.mxu0 0.0
    %3590 = vmatpush1.msra.mxu0 0.0
    %3591 = vmatprep.subr.mxu0 0.0
    %3592 = vmatpush1.msra.mxu0 0.0
    %3593 = vmatprep.subr.mxu0 0.0
    %3594 = vmatpush1.msra.mxu0 0.0
    %3595 = vmatprep.subr.mxu0 0.0
    %3596 = vmatpush1.msra.mxu0 0.0
    %3597 = vmatprep.subr.mxu0 0.0
    %3598 = vmatpush1.msra.mxu0 0.0
    %3599 = vmatprep.subr.mxu0 0.0
    %3600 = vmatpush1.msra.mxu0 0.0
    %3601 = vmatprep.subr.mxu0 0.0
    %3602 = vmatpush1.msra.mxu0 0.0
    %3603 = vmatprep.subr.mxu0 0.0
    %3604 = vmatpush1.msra.mxu0 0.0
    %3605 = vmatprep.subr.mxu0 0.0
    %3606 = vmatpush1.msra.mxu0 0.0
    %3607 = vmatprep.subr.mxu0 0.0
    %3608 = vmatpush1.msra.mxu0 0.0
    %3609 = vmatprep.subr.mxu0 0.0
    %3610 = vmatpush1.msra.mxu0 0.0
    %3611 = vmatprep.subr.mxu0 0.0
    %3612 = vmatpush1.msra.mxu0 0.0
    %3613 = vmatprep.subr.mxu0 0.0
    %3614 = vmatpush1.msra.mxu0 0.0
    %3615 = vmatprep.subr.mxu0 0.0
    %3616 = vmatpush1.msra.mxu0 0.0
    %3617 = vmatprep.subr.mxu0 0.0
    %3618 = vmatpush1.msra.mxu0 0.0
    %3619 = vmatprep.subr.mxu0 0.0
    %3620 = vmatpush1.msra.mxu0 0.0
    %3621 = vmatprep.mubr.f32.mxu0 0.0
    %3622 = vmatmul.mubr.f32.gmra.mrb[0].mxu0 %v3546
    %v3623 = vpop.f32.mrb[0].mxu0
    %v3624 = vadd.f32 %v3543, %v3623
    %v3625 = vpop.f32.mrb[0].mxu0
    %3626 = vmatprep.mubr.f32.mxu0 0.0
    %3627 = vmatmul.mubr.f32.gmra.mrb[0].mxu0 %v3549
    %v3628 = vpop.f32.mrb[0].mxu0
    %v3629 = vadd.f32 %v3543, %v3628
    %v3630 = vpop.f32.mrb[0].mxu0
    %3631 = vmatprep.mubr.f32.mxu0 0.0
    %3632 = vmatmul.mubr.f32.gmra.mrb[0].mxu0 %v3552
    %v3633 = vpop.f32.mrb[0].mxu0
    %v3634 = vadd.f32 %v3543, %v3633
    %v3635 = vpop.f32.mrb[0].mxu0
    %3636 = vmatprep.mubr.f32.mxu0 0.0
    %3637 = vmatmul.mubr.f32.gmra.mrb[0].mxu0 %v3555
    %v3638 = vpop.f32.mrb[0].mxu0
    %v3639 = vadd.f32 %v3543, %v3638
    %v3640 = vpop.f32.mrb[0].mxu0
    %3641 = vdwg.mxu0
    %s3642 = scalar_lea.vmem %s39, 64
    %v3643 = vld [vmem:[%s3642] sm:$0xff]
    %v3644 = vld [vmem:[%s3642 + $0x8] sm:$0xff]
    %v3645 = vld [vmem:[%s3642 + $0x10] sm:$0xff]
    %v3646 = vld [vmem:[%s3642 + $0x18] sm:$0xff]
    %s3647 = scalar_lea.vmem %s41, 2
    %v3648 = vld [vmem:[%s3647] sm:$0x1]
    %v3650 = vlaneseq
    %v3651 = vshrl.u32 %v3650, 7
    %v3652 = vsub.s32 0, %v3651
    %v3653 = vrot.slane %v3648, %v3652
    %v3656 = vsel %vm267, %v2190, 0
    %v3659 = vsel %vm267, %v2191, 0
    %v3662 = vsel %vm267, %v2192, 0
    %v3665 = vsel %vm267, %v2193, 0
    %3667 = vmatprep.subr.mxu0 0.0
    %3668 = vmatpush1.msra.mxu0 %v3643
    %3669 = vmatprep.subr.mxu0 0.0
    %3670 = vmatpush1.msra.mxu0 %v3644
    %3671 = vmatprep.subr.mxu0 0.0
    %3672 = vmatpush1.msra.mxu0 %v3645
    %3673 = vmatprep.subr.mxu0 0.0
    %3674 = vmatpush1.msra.mxu0 %v3646
    %3675 = vmatprep.subr.mxu0 0.0
    %3676 = vmatpush1.msra.mxu0 0.0
    %3677 = vmatprep.subr.mxu0 0.0
    %3678 = vmatpush1.msra.mxu0 0.0
    %3679 = vmatprep.subr.mxu0 0.0
    %3680 = vmatpush1.msra.mxu0 0.0
    %3681 = vmatprep.subr.mxu0 0.0
    %3682 = vmatpush1.msra.mxu0 0.0
    %3683 = vmatprep.subr.mxu0 0.0
    %3684 = vmatpush1.msra.mxu0 0.0
    %3685 = vmatprep.subr.mxu0 0.0
    %3686 = vmatpush1.msra.mxu0 0.0
    %3687 = vmatprep.subr.mxu0 0.0
    %3688 = vmatpush1.msra.mxu0 0.0
    %3689 = vmatprep.subr.mxu0 0.0
    %3690 = vmatpush1.msra.mxu0 0.0
    %3691 = vmatprep.subr.mxu0 0.0
    %3692 = vmatpush1.msra.mxu0 0.0
    %3693 = vmatprep.subr.mxu0 0.0
    %3694 = vmatpush1.msra.mxu0 0.0
    %3695 = vmatprep.subr.mxu0 0.0
    %3696 = vmatpush1.msra.mxu0 0.0
    %3697 = vmatprep.subr.mxu0 0.0
    %3698 = vmatpush1.msra.mxu0 0.0
    %3699 = vmatprep.subr.mxu0 0.0
    %3700 = vmatpush1.msra.mxu0 0.0
    %3701 = vmatprep.subr.mxu0 0.0
    %3702 = vmatpush1.msra.mxu0 0.0
    %3703 = vmatprep.subr.mxu0 0.0
    %3704 = vmatpush1.msra.mxu0 0.0
    %3705 = vmatprep.subr.mxu0 0.0
    %3706 = vmatpush1.msra.mxu0 0.0
    %3707 = vmatprep.subr.mxu0 0.0
    %3708 = vmatpush1.msra.mxu0 0.0
    %3709 = vmatprep.subr.mxu0 0.0
    %3710 = vmatpush1.msra.mxu0 0.0
    %3711 = vmatprep.subr.mxu0 0.0
    %3712 = vmatpush1.msra.mxu0 0.0
    %3713 = vmatprep.subr.mxu0 0.0
    %3714 = vmatpush1.msra.mxu0 0.0
    %3715 = vmatprep.subr.mxu0 0.0
    %3716 = vmatpush1.msra.mxu0 0.0
    %3717 = vmatprep.subr.mxu0 0.0
    %3718 = vmatpush1.msra.mxu0 0.0
    %3719 = vmatprep.subr.mxu0 0.0
    %3720 = vmatpush1.msra.mxu0 0.0
    %3721 = vmatprep.subr.mxu0 0.0
    %3722 = vmatpush1.msra.mxu0 0.0
    %3723 = vmatprep.subr.mxu0 0.0
    %3724 = vmatpush1.msra.mxu0 0.0
    %3725 = vmatprep.subr.mxu0 0.0
    %3726 = vmatpush1.msra.mxu0 0.0
    %3727 = vmatprep.subr.mxu0 0.0
    %3728 = vmatpush1.msra.mxu0 0.0
    %3729 = vmatprep.subr.mxu0 0.0
    %3730 = vmatpush1.msra.mxu0 0.0
    %3731 = vmatprep.mubr.f32.mxu0 0.0
    %3732 = vmatmul.mubr.f32.gmra.mrb[0].mxu0 %v3656
    %v3733 = vpop.f32.mrb[0].mxu0
    %v3734 = vadd.f32 %v3653, %v3733
    %v3735 = vpop.f32.mrb[0].mxu0
    %3736 = vmatprep.mubr.f32.mxu0 0.0
    %3737 = vmatmul.mubr.f32.gmra.mrb[0].mxu0 %v3659
    %v3738 = vpop.f32.mrb[0].mxu0
    %v3739 = vadd.f32 %v3653, %v3738
    %v3740 = vpop.f32.mrb[0].mxu0
    %3741 = vmatprep.mubr.f32.mxu0 0.0
    %3742 = vmatmul.mubr.f32.gmra.mrb[0].mxu0 %v3662
    %v3743 = vpop.f32.mrb[0].mxu0
    %v3744 = vadd.f32 %v3653, %v3743
    %v3745 = vpop.f32.mrb[0].mxu0
    %3746 = vmatprep.mubr.f32.mxu0 0.0
    %3747 = vmatmul.mubr.f32.gmra.mrb[0].mxu0 %v3665
    %v3748 = vpop.f32.mrb[0].mxu0
    %v3749 = vadd.f32 %v3653, %v3748
    %v3750 = vpop.f32.mrb[0].mxu0
    %3751 = vdwg.mxu0
    %v3753 = vsel %vm573, %v3524, 0
    %v3756 = vsel %vm573, %v3529, 0
    %v3759 = vsel %vm573, %v3624, 0
    %v3762 = vsel %vm573, %v3629, 0
    %v3765 = vsel %vm573, %v3634, 0
    %v3768 = vsel %vm573, %v3639, 0
    %3770 = vmatprep.subr.mxu0 0.0
    %3771 = vmatpush1.xpose.msra.mxu0 %v3759
    %3772 = vmatprep.subr.mxu0 0.0
    %3773 = vmatpush1.xpose.msra.mxu0 %v3762
    %3774 = vmatprep.subr.mxu0 0.0
    %3775 = vmatpush1.xpose.msra.mxu0 %v3765
    %3776 = vmatprep.subr.mxu0 0.0
    %3777 = vmatpush1.xpose.msra.mxu0 %v3768
    %3778 = vmatprep.subr.mxu0 0.0
    %3779 = vmatpush1.xpose.msra.mxu0 0.0
    %3780 = vmatprep.subr.mxu0 0.0
    %3781 = vmatpush1.xpose.msra.mxu0 0.0
    %3782 = vmatprep.subr.mxu0 0.0
    %3783 = vmatpush1.xpose.msra.mxu0 0.0
    %3784 = vmatprep.subr.mxu0 0.0
    %3785 = vmatpush1.xpose.msra.mxu0 0.0
    %3786 = vmatprep.subr.mxu0 0.0
    %3787 = vmatpush1.xpose.msra.mxu0 0.0
    %3788 = vmatprep.subr.mxu0 0.0
    %3789 = vmatpush1.xpose.msra.mxu0 0.0
    %3790 = vmatprep.subr.mxu0 0.0
    %3791 = vmatpush1.xpose.msra.mxu0 0.0
    %3792 = vmatprep.subr.mxu0 0.0
    %3793 = vmatpush1.xpose.msra.mxu0 0.0
    %3794 = vmatprep.subr.mxu0 0.0
    %3795 = vmatpush1.xpose.msra.mxu0 0.0
    %3796 = vmatprep.subr.mxu0 0.0
    %3797 = vmatpush1.xpose.msra.mxu0 0.0
    %3798 = vmatprep.subr.mxu0 0.0
    %3799 = vmatpush1.xpose.msra.mxu0 0.0
    %3800 = vmatprep.subr.mxu0 0.0
    %3801 = vmatpush1.xpose.msra.mxu0 0.0
    %3802 = vmatprep.subr.mxu0 0.0
    %3803 = vmatpush1.xpose.msra.mxu0 0.0
    %3804 = vmatprep.subr.mxu0 0.0
    %3805 = vmatpush1.xpose.msra.mxu0 0.0
    %3806 = vmatprep.subr.mxu0 0.0
    %3807 = vmatpush1.xpose.msra.mxu0 0.0
    %3808 = vmatprep.subr.mxu0 0.0
    %3809 = vmatpush1.xpose.msra.mxu0 0.0
    %3810 = vmatprep.subr.mxu0 0.0
    %3811 = vmatpush1.xpose.msra.mxu0 0.0
    %3812 = vmatprep.subr.mxu0 0.0
    %3813 = vmatpush1.xpose.msra.mxu0 0.0
    %3814 = vmatprep.subr.mxu0 0.0
    %3815 = vmatpush1.xpose.msra.mxu0 0.0
    %3816 = vmatprep.subr.mxu0 0.0
    %3817 = vmatpush1.xpose.msra.mxu0 0.0
    %3818 = vmatprep.subr.mxu0 0.0
    %3819 = vmatpush1.xpose.msra.mxu0 0.0
    %3820 = vmatprep.subr.mxu0 0.0
    %3821 = vmatpush1.xpose.msra.mxu0 0.0
    %3822 = vmatprep.subr.mxu0 0.0
    %3823 = vmatpush1.xpose.msra.mxu0 0.0
    %3824 = vmatprep.subr.mxu0 0.0
    %3825 = vmatpush1.xpose.msra.mxu0 0.0
    %3826 = vmatprep.subr.mxu0 0.0
    %3827 = vmatpush1.xpose.msra.mxu0 0.0
    %3828 = vmatprep.subr.mxu0 0.0
    %3829 = vmatpush1.xpose.msra.mxu0 0.0
    %3830 = vmatprep.subr.mxu0 0.0
    %3831 = vmatpush1.xpose.msra.mxu0 0.0
    %3832 = vmatprep.subr.mxu0 0.0
    %3833 = vmatpush1.xpose.msra.mxu0 0.0
    %3834 = vmatprep.mubr.f32.mxu0 0.0
    %3835 = vmatmul.mubr.f32.gmra.mrb[0].mxu0 %v3753
    %v3836 = vpop.f32.mrb[0].mxu0
    %v3837 = vadd.f32 %v146, %v3836
    %v3838 = vpop.f32.mrb[0].mxu0
    %3839 = vmatprep.mubr.f32.mxu0 0.0
    %3840 = vmatmul.mubr.f32.gmra.mrb[0].mxu0 %v3756
    %v3841 = vpop.f32.mrb[0].mxu0
    %v3842 = vadd.f32 %v147, %v3841
    %v3843 = vpop.f32.mrb[0].mxu0
    %3844 = vdwg.mxu0
    %v3845 = vsel %vm267, %v3837, -inf
    %3846 = vmax.xlane.f32.xlu0 %v3845
    %v3847 = vpop.xlane.xlu0 %3846
    %v3848 = vsel %vm267, %v3842, -inf
    %3849 = vmax.xlane.f32.xlu0 %v3848
    %v3850 = vpop.xlane.xlu0 %3849
    %v3851 = vsub.f32 %v3837, %v3847
    %v3852 = vsub.f32 %v3842, %v3850
    %v3853 = vmul.f32 %v3851, 1.442695
    %v3854 = vpow.pop %v3853
    %v3855 = vmul.f32 %v3852, 1.442695
    %v3856 = vpow.pop %v3855
    %v3857 = vsel %vm267, %v3854, 0.0
    %3858 = vadd.xlane.f32.xlu0 %v3857
    %v3859 = vpop.xlane.xlu0 %3858
    %v3860 = vsel %vm267, %v3856, 0.0
    %3861 = vadd.xlane.f32.xlu0 %v3860
    %v3862 = vpop.xlane.xlu0 %3861
    %v3863 = vrcp.pop %v3859
    %v3864 = vrcp.pop %v3862
    %v3865 = vmul.f32 %v3854, %v3863
    %v3866 = vmul.f32 %v3856, %v3864
    %v3868 = vsel %vm267, %v3865, 0
    %v3871 = vsel %vm267, %v3866, 0
    %3873 = vmatprep.subr.mxu0 0.0
    %3874 = vmatpush1.msra.mxu0 %v3734
    %3875 = vmatprep.subr.mxu0 0.0
    %3876 = vmatpush1.msra.mxu0 %v3739
    %3877 = vmatprep.subr.mxu0 0.0
    %3878 = vmatpush1.msra.mxu0 %v3744
    %3879 = vmatprep.subr.mxu0 0.0
    %3880 = vmatpush1.msra.mxu0 %v3749
    %3881 = vmatprep.subr.mxu0 0.0
    %3882 = vmatpush1.msra.mxu0 0.0
    %3883 = vmatprep.subr.mxu0 0.0
    %3884 = vmatpush1.msra.mxu0 0.0
    %3885 = vmatprep.subr.mxu0 0.0
    %3886 = vmatpush1.msra.mxu0 0.0
    %3887 = vmatprep.subr.mxu0 0.0
    %3888 = vmatpush1.msra.mxu0 0.0
    %3889 = vmatprep.subr.mxu0 0.0
    %3890 = vmatpush1.msra.mxu0 0.0
    %3891 = vmatprep.subr.mxu0 0.0
    %3892 = vmatpush1.msra.mxu0 0.0
    %3893 = vmatprep.subr.mxu0 0.0
    %3894 = vmatpush1.msra.mxu0 0.0
    %3895 = vmatprep.subr.mxu0 0.0
    %3896 = vmatpush1.msra.mxu0 0.0
    %3897 = vmatprep.subr.mxu0 0.0
    %3898 = vmatpush1.msra.mxu0 0.0
    %3899 = vmatprep.subr.mxu0 0.0
    %3900 = vmatpush1.msra.mxu0 0.0
    %3901 = vmatprep.subr.mxu0 0.0
    %3902 = vmatpush1.msra.mxu0 0.0
    %3903 = vmatprep.subr.mxu0 0.0
    %3904 = vmatpush1.msra.mxu0 0.0
    %3905 = vmatprep.subr.mxu0 0.0
    %3906 = vmatpush1.msra.mxu0 0.0
    %3907 = vmatprep.subr.mxu0 0.0
    %3908 = vmatpush1.msra.mxu0 0.0
    %3909 = vmatprep.subr.mxu0 0.0
    %3910 = vmatpush1.msra.mxu0 0.0
    %3911 = vmatprep.subr.mxu0 0.0
    %3912 = vmatpush1.msra.mxu0 0.0
    %3913 = vmatprep.subr.mxu0 0.0
    %3914 = vmatpush1.msra.mxu0 0.0
    %3915 = vmatprep.subr.mxu0 0.0
    %3916 = vmatpush1.msra.mxu0 0.0
    %3917 = vmatprep.subr.mxu0 0.0
    %3918 = vmatpush1.msra.mxu0 0.0
    %3919 = vmatprep.subr.mxu0 0.0
    %3920 = vmatpush1.msra.mxu0 0.0
    %3921 = vmatprep.subr.mxu0 0.0
    %3922 = vmatpush1.msra.mxu0 0.0
    %3923 = vmatprep.subr.mxu0 0.0
    %3924 = vmatpush1.msra.mxu0 0.0
    %3925 = vmatprep.subr.mxu0 0.0
    %3926 = vmatpush1.msra.mxu0 0.0
    %3927 = vmatprep.subr.mxu0 0.0
    %3928 = vmatpush1.msra.mxu0 0.0
    %3929 = vmatprep.subr.mxu0 0.0
    %3930 = vmatpush1.msra.mxu0 0.0
    %3931 = vmatprep.subr.mxu0 0.0
    %3932 = vmatpush1.msra.mxu0 0.0
    %3933 = vmatprep.subr.mxu0 0.0
    %3934 = vmatpush1.msra.mxu0 0.0
    %3935 = vmatprep.subr.mxu0 0.0
    %3936 = vmatpush1.msra.mxu0 0.0
    %3937 = vmatprep.mubr.f32.mxu0 0.0
    %3938 = vmatmul.mubr.f32.gmra.mrb[0].mxu0 %v3868
    %v3939 = vpop.f32.mrb[0].mxu0
    %v3940 = vadd.f32 0.0, %v3939
    %v3941 = vpop.f32.mrb[0].mxu0
    %3942 = vmatprep.mubr.f32.mxu0 0.0
    %3943 = vmatmul.mubr.f32.gmra.mrb[0].mxu0 %v3871
    %v3944 = vpop.f32.mrb[0].mxu0
    %v3945 = vadd.f32 0.0, %v3944
    %v3946 = vpop.f32.mrb[0].mxu0
    %3947 = vdwg.mxu0
    %3948 = vrot.lane.b32.xlu0 %v3524, 120
    %v3949 = vpop.permute.xlu0 %3948
    %3950 = vrot.lane.b32.xlu0 %v3529, 120
    %v3951 = vpop.permute.xlu0 %3950
    %3952 = vrot.lane.b32.xlu0 %v3624, 120
    %v3953 = vpop.permute.xlu0 %3952
    %3954 = vrot.lane.b32.xlu0 %v3629, 120
    %v3955 = vpop.permute.xlu0 %3954
    %3956 = vrot.lane.b32.xlu0 %v3634, 120
    %v3957 = vpop.permute.xlu0 %3956
    %3958 = vrot.lane.b32.xlu0 %v3639, 120
    %v3959 = vpop.permute.xlu0 %3958
    %v3960 = vsel %vm573, %v3949, 0
    %v3962 = vsel %vm573, %v3951, 0
    %v3964 = vsel %vm573, %v3953, 0
    %v3966 = vsel %vm573, %v3955, 0
    %v3968 = vsel %vm573, %v3957, 0
    %v3970 = vsel %vm573, %v3959, 0
    %3972 = vmatprep.subr.mxu0 0.0
    %3973 = vmatpush1.xpose.msra.mxu0 %v3964
    %3974 = vmatprep.subr.mxu0 0.0
    %3975 = vmatpush1.xpose.msra.mxu0 %v3966
    %3976 = vmatprep.subr.mxu0 0.0
    %3977 = vmatpush1.xpose.msra.mxu0 %v3968
    %3978 = vmatprep.subr.mxu0 0.0
    %3979 = vmatpush1.xpose.msra.mxu0 %v3970
    %3980 = vmatprep.subr.mxu0 0.0
    %3981 = vmatpush1.xpose.msra.mxu0 0.0
    %3982 = vmatprep.subr.mxu0 0.0
    %3983 = vmatpush1.xpose.msra.mxu0 0.0
    %3984 = vmatprep.subr.mxu0 0.0
    %3985 = vmatpush1.xpose.msra.mxu0 0.0
    %3986 = vmatprep.subr.mxu0 0.0
    %3987 = vmatpush1.xpose.msra.mxu0 0.0
    %3988 = vmatprep.subr.mxu0 0.0
    %3989 = vmatpush1.xpose.msra.mxu0 0.0
    %3990 = vmatprep.subr.mxu0 0.0
    %3991 = vmatpush1.xpose.msra.mxu0 0.0
    %3992 = vmatprep.subr.mxu0 0.0
    %3993 = vmatpush1.xpose.msra.mxu0 0.0
    %3994 = vmatprep.subr.mxu0 0.0
    %3995 = vmatpush1.xpose.msra.mxu0 0.0
    %3996 = vmatprep.subr.mxu0 0.0
    %3997 = vmatpush1.xpose.msra.mxu0 0.0
    %3998 = vmatprep.subr.mxu0 0.0
    %3999 = vmatpush1.xpose.msra.mxu0 0.0
    %4000 = vmatprep.subr.mxu0 0.0
    %4001 = vmatpush1.xpose.msra.mxu0 0.0
    %4002 = vmatprep.subr.mxu0 0.0
    %4003 = vmatpush1.xpose.msra.mxu0 0.0
    %4004 = vmatprep.subr.mxu0 0.0
    %4005 = vmatpush1.xpose.msra.mxu0 0.0
    %4006 = vmatprep.subr.mxu0 0.0
    %4007 = vmatpush1.xpose.msra.mxu0 0.0
    %4008 = vmatprep.subr.mxu0 0.0
    %4009 = vmatpush1.xpose.msra.mxu0 0.0
    %4010 = vmatprep.subr.mxu0 0.0
    %4011 = vmatpush1.xpose.msra.mxu0 0.0
    %4012 = vmatprep.subr.mxu0 0.0
    %4013 = vmatpush1.xpose.msra.mxu0 0.0
    %4014 = vmatprep.subr.mxu0 0.0
    %4015 = vmatpush1.xpose.msra.mxu0 0.0
    %4016 = vmatprep.subr.mxu0 0.0
    %4017 = vmatpush1.xpose.msra.mxu0 0.0
    %4018 = vmatprep.subr.mxu0 0.0
    %4019 = vmatpush1.xpose.msra.mxu0 0.0
    %4020 = vmatprep.subr.mxu0 0.0
    %4021 = vmatpush1.xpose.msra.mxu0 0.0
    %4022 = vmatprep.subr.mxu0 0.0
    %4023 = vmatpush1.xpose.msra.mxu0 0.0
    %4024 = vmatprep.subr.mxu0 0.0
    %4025 = vmatpush1.xpose.msra.mxu0 0.0
    %4026 = vmatprep.subr.mxu0 0.0
    %4027 = vmatpush1.xpose.msra.mxu0 0.0
    %4028 = vmatprep.subr.mxu0 0.0
    %4029 = vmatpush1.xpose.msra.mxu0 0.0
    %4030 = vmatprep.subr.mxu0 0.0
    %4031 = vmatpush1.xpose.msra.mxu0 0.0
    %4032 = vmatprep.subr.mxu0 0.0
    %4033 = vmatpush1.xpose.msra.mxu0 0.0
    %4034 = vmatprep.subr.mxu0 0.0
    %4035 = vmatpush1.xpose.msra.mxu0 0.0
    %4036 = vmatprep.mubr.f32.mxu0 0.0
    %4037 = vmatmul.mubr.f32.gmra.mrb[0].mxu0 %v3960
    %v4038 = vpop.f32.mrb[0].mxu0
    %v4039 = vadd.f32 %v146, %v4038
    %v4040 = vpop.f32.mrb[0].mxu0
    %4041 = vmatprep.mubr.f32.mxu0 0.0
    %4042 = vmatmul.mubr.f32.gmra.mrb[0].mxu0 %v3962
    %v4043 = vpop.f32.mrb[0].mxu0
    %v4044 = vadd.f32 %v147, %v4043
    %v4045 = vpop.f32.mrb[0].mxu0
    %4046 = vdwg.mxu0
    %v4047 = vsel %vm267, %v4039, -inf
    %4048 = vmax.xlane.f32.xlu0 %v4047
    %v4049 = vpop.xlane.xlu0 %4048
    %v4050 = vsel %vm267, %v4044, -inf
    %4051 = vmax.xlane.f32.xlu0 %v4050
    %v4052 = vpop.xlane.xlu0 %4051
    %v4053 = vsub.f32 %v4039, %v4049
    %v4054 = vsub.f32 %v4044, %v4052
    %v4055 = vmul.f32 %v4053, 1.442695
    %v4056 = vpow.pop %v4055
    %v4057 = vmul.f32 %v4054, 1.442695
    %v4058 = vpow.pop %v4057
    %v4059 = vsel %vm267, %v4056, 0.0
    %4060 = vadd.xlane.f32.xlu0 %v4059
    %v4061 = vpop.xlane.xlu0 %4060
    %v4062 = vsel %vm267, %v4058, 0.0
    %4063 = vadd.xlane.f32.xlu0 %v4062
    %v4064 = vpop.xlane.xlu0 %4063
    %v4065 = vrcp.pop %v4061
    %v4066 = vrcp.pop %v4064
    %v4067 = vmul.f32 %v4056, %v4065
    %v4068 = vmul.f32 %v4058, %v4066
    %4073 = vrot.lane.b32.xlu0 %v3734, 120
    %v4074 = vpop.permute.xlu0 %4073
    %4075 = vrot.lane.b32.xlu0 %v3739, 120
    %v4076 = vpop.permute.xlu0 %4075
    %4077 = vrot.lane.b32.xlu0 %v3744, 120
    %v4078 = vpop.permute.xlu0 %4077
    %4079 = vrot.lane.b32.xlu0 %v3749, 120
    %v4080 = vpop.permute.xlu0 %4079
    %v4086 = vsel %vm267, %v4067, 0
    %v4089 = vsel %vm267, %v4068, 0
    %4091 = vmatprep.subr.mxu0 0.0
    %4092 = vmatpush1.msra.mxu0 %v4074
    %4093 = vmatprep.subr.mxu0 0.0
    %4094 = vmatpush1.msra.mxu0 %v4076
    %4095 = vmatprep.subr.mxu0 0.0
    %4096 = vmatpush1.msra.mxu0 %v4078
    %4097 = vmatprep.subr.mxu0 0.0
    %4098 = vmatpush1.msra.mxu0 %v4080
    %4099 = vmatprep.subr.mxu0 0.0
    %4100 = vmatpush1.msra.mxu0 0.0
    %4101 = vmatprep.subr.mxu0 0.0
    %4102 = vmatpush1.msra.mxu0 0.0
    %4103 = vmatprep.subr.mxu0 0.0
    %4104 = vmatpush1.msra.mxu0 0.0
    %4105 = vmatprep.subr.mxu0 0.0
    %4106 = vmatpush1.msra.mxu0 0.0
    %4107 = vmatprep.subr.mxu0 0.0
    %4108 = vmatpush1.msra.mxu0 0.0
    %4109 = vmatprep.subr.mxu0 0.0
    %4110 = vmatpush1.msra.mxu0 0.0
    %4111 = vmatprep.subr.mxu0 0.0
    %4112 = vmatpush1.msra.mxu0 0.0
    %4113 = vmatprep.subr.mxu0 0.0
    %4114 = vmatpush1.msra.mxu0 0.0
    %4115 = vmatprep.subr.mxu0 0.0
    %4116 = vmatpush1.msra.mxu0 0.0
    %4117 = vmatprep.subr.mxu0 0.0
    %4118 = vmatpush1.msra.mxu0 0.0
    %4119 = vmatprep.subr.mxu0 0.0
    %4120 = vmatpush1.msra.mxu0 0.0
    %4121 = vmatprep.subr.mxu0 0.0
    %4122 = vmatpush1.msra.mxu0 0.0
    %4123 = vmatprep.subr.mxu0 0.0
    %4124 = vmatpush1.msra.mxu0 0.0
    %4125 = vmatprep.subr.mxu0 0.0
    %4126 = vmatpush1.msra.mxu0 0.0
    %4127 = vmatprep.subr.mxu0 0.0
    %4128 = vmatpush1.msra.mxu0 0.0
    %4129 = vmatprep.subr.mxu0 0.0
    %4130 = vmatpush1.msra.mxu0 0.0
    %4131 = vmatprep.subr.mxu0 0.0
    %4132 = vmatpush1.msra.mxu0 0.0
    %4133 = vmatprep.subr.mxu0 0.0
    %4134 = vmatpush1.msra.mxu0 0.0
    %4135 = vmatprep.subr.mxu0 0.0
    %4136 = vmatpush1.msra.mxu0 0.0
    %4137 = vmatprep.subr.mxu0 0.0
    %4138 = vmatpush1.msra.mxu0 0.0
    %4139 = vmatprep.subr.mxu0 0.0
    %4140 = vmatpush1.msra.mxu0 0.0
    %4141 = vmatprep.subr.mxu0 0.0
    %4142 = vmatpush1.msra.mxu0 0.0
    %4143 = vmatprep.subr.mxu0 0.0
    %4144 = vmatpush1.msra.mxu0 0.0
    %4145 = vmatprep.subr.mxu0 0.0
    %4146 = vmatpush1.msra.mxu0 0.0
    %4147 = vmatprep.subr.mxu0 0.0
    %4148 = vmatpush1.msra.mxu0 0.0
    %4149 = vmatprep.subr.mxu0 0.0
    %4150 = vmatpush1.msra.mxu0 0.0
    %4151 = vmatprep.subr.mxu0 0.0
    %4152 = vmatpush1.msra.mxu0 0.0
    %4153 = vmatprep.subr.mxu0 0.0
    %4154 = vmatpush1.msra.mxu0 0.0
    %4155 = vmatprep.mubr.f32.mxu0 0.0
    %4156 = vmatmul.mubr.f32.gmra.mrb[0].mxu0 %v4086
    %v4157 = vpop.f32.mrb[0].mxu0
    %v4158 = vadd.f32 0.0, %v4157
    %v4159 = vpop.f32.mrb[0].mxu0
    %4160 = vmatprep.mubr.f32.mxu0 0.0
    %4161 = vmatmul.mubr.f32.gmra.mrb[0].mxu0 %v4089
    %v4162 = vpop.f32.mrb[0].mxu0
    %v4163 = vadd.f32 0.0, %v4162
    %v4164 = vpop.f32.mrb[0].mxu0
    %4165 = vdwg.mxu0
    %4166 = vrot.lane.b32.xlu0 %v3524, 112
    %v4167 = vpop.permute.xlu0 %4166
    %4168 = vrot.lane.b32.xlu0 %v3529, 112
    %v4169 = vpop.permute.xlu0 %4168
    %4170 = vrot.lane.b32.xlu0 %v3624, 112
    %v4171 = vpop.permute.xlu0 %4170
    %4172 = vrot.lane.b32.xlu0 %v3629, 112
    %v4173 = vpop.permute.xlu0 %4172
    %4174 = vrot.lane.b32.xlu0 %v3634, 112
    %v4175 = vpop.permute.xlu0 %4174
    %4176 = vrot.lane.b32.xlu0 %v3639, 112
    %v4177 = vpop.permute.xlu0 %4176
    %v4178 = vsel %vm573, %v4167, 0
    %v4180 = vsel %vm573, %v4169, 0
    %v4182 = vsel %vm573, %v4171, 0
    %v4184 = vsel %vm573, %v4173, 0
    %v4186 = vsel %vm573, %v4175, 0
    %v4188 = vsel %vm573, %v4177, 0
    %4190 = vmatprep.subr.mxu0 0.0
    %4191 = vmatpush1.xpose.msra.mxu0 %v4182
    %4192 = vmatprep.subr.mxu0 0.0
    %4193 = vmatpush1.xpose.msra.mxu0 %v4184
    %4194 = vmatprep.subr.mxu0 0.0
    %4195 = vmatpush1.xpose.msra.mxu0 %v4186
    %4196 = vmatprep.subr.mxu0 0.0
    %4197 = vmatpush1.xpose.msra.mxu0 %v4188
    %4198 = vmatprep.subr.mxu0 0.0
    %4199 = vmatpush1.xpose.msra.mxu0 0.0
    %4200 = vmatprep.subr.mxu0 0.0
    %4201 = vmatpush1.xpose.msra.mxu0 0.0
    %4202 = vmatprep.subr.mxu0 0.0
    %4203 = vmatpush1.xpose.msra.mxu0 0.0
    %4204 = vmatprep.subr.mxu0 0.0
    %4205 = vmatpush1.xpose.msra.mxu0 0.0
    %4206 = vmatprep.subr.mxu0 0.0
    %4207 = vmatpush1.xpose.msra.mxu0 0.0
    %4208 = vmatprep.subr.mxu0 0.0
    %4209 = vmatpush1.xpose.msra.mxu0 0.0
    %4210 = vmatprep.subr.mxu0 0.0
    %4211 = vmatpush1.xpose.msra.mxu0 0.0
    %4212 = vmatprep.subr.mxu0 0.0
    %4213 = vmatpush1.xpose.msra.mxu0 0.0
    %4214 = vmatprep.subr.mxu0 0.0
    %4215 = vmatpush1.xpose.msra.mxu0 0.0
    %4216 = vmatprep.subr.mxu0 0.0
    %4217 = vmatpush1.xpose.msra.mxu0 0.0
    %4218 = vmatprep.subr.mxu0 0.0
    %4219 = vmatpush1.xpose.msra.mxu0 0.0
    %4220 = vmatprep.subr.mxu0 0.0
    %4221 = vmatpush1.xpose.msra.mxu0 0.0
    %4222 = vmatprep.subr.mxu0 0.0
    %4223 = vmatpush1.xpose.msra.mxu0 0.0
    %4224 = vmatprep.subr.mxu0 0.0
    %4225 = vmatpush1.xpose.msra.mxu0 0.0
    %4226 = vmatprep.subr.mxu0 0.0
    %4227 = vmatpush1.xpose.msra.mxu0 0.0
    %4228 = vmatprep.subr.mxu0 0.0
    %4229 = vmatpush1.xpose.msra.mxu0 0.0
    %4230 = vmatprep.subr.mxu0 0.0
    %4231 = vmatpush1.xpose.msra.mxu0 0.0
    %4232 = vmatprep.subr.mxu0 0.0
    %4233 = vmatpush1.xpose.msra.mxu0 0.0
    %4234 = vmatprep.subr.mxu0 0.0
    %4235 = vmatpush1.xpose.msra.mxu0 0.0
    %4236 = vmatprep.subr.mxu0 0.0
    %4237 = vmatpush1.xpose.msra.mxu0 0.0
    %4238 = vmatprep.subr.mxu0 0.0
    %4239 = vmatpush1.xpose.msra.mxu0 0.0
    %4240 = vmatprep.subr.mxu0 0.0
    %4241 = vmatpush1.xpose.msra.mxu0 0.0
    %4242 = vmatprep.subr.mxu0 0.0
    %4243 = vmatpush1.xpose.msra.mxu0 0.0
    %4244 = vmatprep.subr.mxu0 0.0
    %4245 = vmatpush1.xpose.msra.mxu0 0.0
    %4246 = vmatprep.subr.mxu0 0.0
    %4247 = vmatpush1.xpose.msra.mxu0 0.0
    %4248 = vmatprep.subr.mxu0 0.0
    %4249 = vmatpush1.xpose.msra.mxu0 0.0
    %4250 = vmatprep.subr.mxu0 0.0
    %4251 = vmatpush1.xpose.msra.mxu0 0.0
    %4252 = vmatprep.subr.mxu0 0.0
    %4253 = vmatpush1.xpose.msra.mxu0 0.0
    %4254 = vmatprep.mubr.f32.mxu0 0.0
    %4255 = vmatmul.mubr.f32.gmra.mrb[0].mxu0 %v4178
    %v4256 = vpop.f32.mrb[0].mxu0
    %v4257 = vadd.f32 %v146, %v4256
    %v4258 = vpop.f32.mrb[0].mxu0
    %4259 = vmatprep.mubr.f32.mxu0 0.0
    %4260 = vmatmul.mubr.f32.gmra.mrb[0].mxu0 %v4180
    %v4261 = vpop.f32.mrb[0].mxu0
    %v4262 = vadd.f32 %v147, %v4261
    %v4263 = vpop.f32.mrb[0].mxu0
    %4264 = vdwg.mxu0
    %v4265 = vsel %vm267, %v4257, -inf
    %4266 = vmax.xlane.f32.xlu0 %v4265
    %v4267 = vpop.xlane.xlu0 %4266
    %v4268 = vsel %vm267, %v4262, -inf
    %4269 = vmax.xlane.f32.xlu0 %v4268
    %v4270 = vpop.xlane.xlu0 %4269
    %v4271 = vsub.f32 %v4257, %v4267
    %v4272 = vsub.f32 %v4262, %v4270
    %v4273 = vmul.f32 %v4271, 1.442695
    %v4274 = vpow.pop %v4273
    %v4275 = vmul.f32 %v4272, 1.442695
    %v4276 = vpow.pop %v4275
    %v4277 = vsel %vm267, %v4274, 0.0
    %4278 = vadd.xlane.f32.xlu0 %v4277
    %v4279 = vpop.xlane.xlu0 %4278
    %v4280 = vsel %vm267, %v4276, 0.0
    %4281 = vadd.xlane.f32.xlu0 %v4280
    %v4282 = vpop.xlane.xlu0 %4281
    %v4283 = vrcp.pop %v4279
    %v4284 = vrcp.pop %v4282
    %v4285 = vmul.f32 %v4274, %v4283
    %v4286 = vmul.f32 %v4276, %v4284
    %4287 = vrot.lane.b32.xlu0 %v3734, 112
    %v4288 = vpop.permute.xlu0 %4287
    %4289 = vrot.lane.b32.xlu0 %v3739, 112
    %v4290 = vpop.permute.xlu0 %4289
    %4291 = vrot.lane.b32.xlu0 %v3744, 112
    %v4292 = vpop.permute.xlu0 %4291
    %4293 = vrot.lane.b32.xlu0 %v3749, 112
    %v4294 = vpop.permute.xlu0 %4293
    %v4300 = vsel %vm267, %v4285, 0
    %v4303 = vsel %vm267, %v4286, 0
    %4305 = vmatprep.subr.mxu0 0.0
    %4306 = vmatpush1.msra.mxu0 %v4288
    %4307 = vmatprep.subr.mxu0 0.0
    %4308 = vmatpush1.msra.mxu0 %v4290
    %4309 = vmatprep.subr.mxu0 0.0
    %4310 = vmatpush1.msra.mxu0 %v4292
    %4311 = vmatprep.subr.mxu0 0.0
    %4312 = vmatpush1.msra.mxu0 %v4294
    %4313 = vmatprep.subr.mxu0 0.0
    %4314 = vmatpush1.msra.mxu0 0.0
    %4315 = vmatprep.subr.mxu0 0.0
    %4316 = vmatpush1.msra.mxu0 0.0
    %4317 = vmatprep.subr.mxu0 0.0
    %4318 = vmatpush1.msra.mxu0 0.0
    %4319 = vmatprep.subr.mxu0 0.0
    %4320 = vmatpush1.msra.mxu0 0.0
    %4321 = vmatprep.subr.mxu0 0.0
    %4322 = vmatpush1.msra.mxu0 0.0
    %4323 = vmatprep.subr.mxu0 0.0
    %4324 = vmatpush1.msra.mxu0 0.0
    %4325 = vmatprep.subr.mxu0 0.0
    %4326 = vmatpush1.msra.mxu0 0.0
    %4327 = vmatprep.subr.mxu0 0.0
    %4328 = vmatpush1.msra.mxu0 0.0
    %4329 = vmatprep.subr.mxu0 0.0
    %4330 = vmatpush1.msra.mxu0 0.0
    %4331 = vmatprep.subr.mxu0 0.0
    %4332 = vmatpush1.msra.mxu0 0.0
    %4333 = vmatprep.subr.mxu0 0.0
    %4334 = vmatpush1.msra.mxu0 0.0
    %4335 = vmatprep.subr.mxu0 0.0
    %4336 = vmatpush1.msra.mxu0 0.0
    %4337 = vmatprep.subr.mxu0 0.0
    %4338 = vmatpush1.msra.mxu0 0.0
    %4339 = vmatprep.subr.mxu0 0.0
    %4340 = vmatpush1.msra.mxu0 0.0
    %4341 = vmatprep.subr.mxu0 0.0
    %4342 = vmatpush1.msra.mxu0 0.0
    %4343 = vmatprep.subr.mxu0 0.0
    %4344 = vmatpush1.msra.mxu0 0.0
    %4345 = vmatprep.subr.mxu0 0.0
    %4346 = vmatpush1.msra.mxu0 0.0
    %4347 = vmatprep.subr.mxu0 0.0
    %4348 = vmatpush1.msra.mxu0 0.0
    %4349 = vmatprep.subr.mxu0 0.0
    %4350 = vmatpush1.msra.mxu0 0.0
    %4351 = vmatprep.subr.mxu0 0.0
    %4352 = vmatpush1.msra.mxu0 0.0
    %4353 = vmatprep.subr.mxu0 0.0
    %4354 = vmatpush1.msra.mxu0 0.0
    %4355 = vmatprep.subr.mxu0 0.0
    %4356 = vmatpush1.msra.mxu0 0.0
    %4357 = vmatprep.subr.mxu0 0.0
    %4358 = vmatpush1.msra.mxu0 0.0
    %4359 = vmatprep.subr.mxu0 0.0
    %4360 = vmatpush1.msra.mxu0 0.0
    %4361 = vmatprep.subr.mxu0 0.0
    %4362 = vmatpush1.msra.mxu0 0.0
    %4363 = vmatprep.subr.mxu0 0.0
    %4364 = vmatpush1.msra.mxu0 0.0
    %4365 = vmatprep.subr.mxu0 0.0
    %4366 = vmatpush1.msra.mxu0 0.0
    %4367 = vmatprep.subr.mxu0 0.0
    %4368 = vmatpush1.msra.mxu0 0.0
    %4369 = vmatprep.mubr.f32.mxu0 0.0
    %4370 = vmatmul.mubr.f32.gmra.mrb[0].mxu0 %v4300
    %v4371 = vpop.f32.mrb[0].mxu0
    %v4372 = vadd.f32 0.0, %v4371
    %v4373 = vpop.f32.mrb[0].mxu0
    %4374 = vmatprep.mubr.f32.mxu0 0.0
    %4375 = vmatmul.mubr.f32.gmra.mrb[0].mxu0 %v4303
    %v4376 = vpop.f32.mrb[0].mxu0
    %v4377 = vadd.f32 0.0, %v4376
    %v4378 = vpop.f32.mrb[0].mxu0
    %4379 = vdwg.mxu0
    %4380 = vrot.lane.b32.xlu0 %v3524, 104
    %v4381 = vpop.permute.xlu0 %4380
    %4382 = vrot.lane.b32.xlu0 %v3529, 104
    %v4383 = vpop.permute.xlu0 %4382
    %4384 = vrot.lane.b32.xlu0 %v3624, 104
    %v4385 = vpop.permute.xlu0 %4384
    %4386 = vrot.lane.b32.xlu0 %v3629, 104
    %v4387 = vpop.permute.xlu0 %4386
    %4388 = vrot.lane.b32.xlu0 %v3634, 104
    %v4389 = vpop.permute.xlu0 %4388
    %4390 = vrot.lane.b32.xlu0 %v3639, 104
    %v4391 = vpop.permute.xlu0 %4390
    %v4392 = vsel %vm573, %v4381, 0
    %v4394 = vsel %vm573, %v4383, 0
    %v4396 = vsel %vm573, %v4385, 0
    %v4398 = vsel %vm573, %v4387, 0
    %v4400 = vsel %vm573, %v4389, 0
    %v4402 = vsel %vm573, %v4391, 0
    %4404 = vmatprep.subr.mxu0 0.0
    %4405 = vmatpush1.xpose.msra.mxu0 %v4396
    %4406 = vmatprep.subr.mxu0 0.0
    %4407 = vmatpush1.xpose.msra.mxu0 %v4398
    %4408 = vmatprep.subr.mxu0 0.0
    %4409 = vmatpush1.xpose.msra.mxu0 %v4400
    %4410 = vmatprep.subr.mxu0 0.0
    %4411 = vmatpush1.xpose.msra.mxu0 %v4402
    %4412 = vmatprep.subr.mxu0 0.0
    %4413 = vmatpush1.xpose.msra.mxu0 0.0
    %4414 = vmatprep.subr.mxu0 0.0
    %4415 = vmatpush1.xpose.msra.mxu0 0.0
    %4416 = vmatprep.subr.mxu0 0.0
    %4417 = vmatpush1.xpose.msra.mxu0 0.0
    %4418 = vmatprep.subr.mxu0 0.0
    %4419 = vmatpush1.xpose.msra.mxu0 0.0
    %4420 = vmatprep.subr.mxu0 0.0
    %4421 = vmatpush1.xpose.msra.mxu0 0.0
    %4422 = vmatprep.subr.mxu0 0.0
    %4423 = vmatpush1.xpose.msra.mxu0 0.0
    %4424 = vmatprep.subr.mxu0 0.0
    %4425 = vmatpush1.xpose.msra.mxu0 0.0
    %4426 = vmatprep.subr.mxu0 0.0
    %4427 = vmatpush1.xpose.msra.mxu0 0.0
    %4428 = vmatprep.subr.mxu0 0.0
    %4429 = vmatpush1.xpose.msra.mxu0 0.0
    %4430 = vmatprep.subr.mxu0 0.0
    %4431 = vmatpush1.xpose.msra.mxu0 0.0
    %4432 = vmatprep.subr.mxu0 0.0
    %4433 = vmatpush1.xpose.msra.mxu0 0.0
    %4434 = vmatprep.subr.mxu0 0.0
    %4435 = vmatpush1.xpose.msra.mxu0 0.0
    %4436 = vmatprep.subr.mxu0 0.0
    %4437 = vmatpush1.xpose.msra.mxu0 0.0
    %4438 = vmatprep.subr.mxu0 0.0
    %4439 = vmatpush1.xpose.msra.mxu0 0.0
    %4440 = vmatprep.subr.mxu0 0.0
    %4441 = vmatpush1.xpose.msra.mxu0 0.0
    %4442 = vmatprep.subr.mxu0 0.0
    %4443 = vmatpush1.xpose.msra.mxu0 0.0
    %4444 = vmatprep.subr.mxu0 0.0
    %4445 = vmatpush1.xpose.msra.mxu0 0.0
    %4446 = vmatprep.subr.mxu0 0.0
    %4447 = vmatpush1.xpose.msra.mxu0 0.0
    %4448 = vmatprep.subr.mxu0 0.0
    %4449 = vmatpush1.xpose.msra.mxu0 0.0
    %4450 = vmatprep.subr.mxu0 0.0
    %4451 = vmatpush1.xpose.msra.mxu0 0.0
    %4452 = vmatprep.subr.mxu0 0.0
    %4453 = vmatpush1.xpose.msra.mxu0 0.0
    %4454 = vmatprep.subr.mxu0 0.0
    %4455 = vmatpush1.xpose.msra.mxu0 0.0
    %4456 = vmatprep.subr.mxu0 0.0
    %4457 = vmatpush1.xpose.msra.mxu0 0.0
    %4458 = vmatprep.subr.mxu0 0.0
    %4459 = vmatpush1.xpose.msra.mxu0 0.0
    %4460 = vmatprep.subr.mxu0 0.0
    %4461 = vmatpush1.xpose.msra.mxu0 0.0
    %4462 = vmatprep.subr.mxu0 0.0
    %4463 = vmatpush1.xpose.msra.mxu0 0.0
    %4464 = vmatprep.subr.mxu0 0.0
    %4465 = vmatpush1.xpose.msra.mxu0 0.0
    %4466 = vmatprep.subr.mxu0 0.0
    %4467 = vmatpush1.xpose.msra.mxu0 0.0
    %4468 = vmatprep.mubr.f32.mxu0 0.0
    %4469 = vmatmul.mubr.f32.gmra.mrb[0].mxu0 %v4392
    %v4470 = vpop.f32.mrb[0].mxu0
    %v4471 = vadd.f32 %v146, %v4470
    %v4472 = vpop.f32.mrb[0].mxu0
    %4473 = vmatprep.mubr.f32.mxu0 0.0
    %4474 = vmatmul.mubr.f32.gmra.mrb[0].mxu0 %v4394
    %v4475 = vpop.f32.mrb[0].mxu0
    %v4476 = vadd.f32 %v147, %v4475
    %v4477 = vpop.f32.mrb[0].mxu0
    %4478 = vdwg.mxu0
    %v4479 = vsel %vm267, %v4471, -inf
    %4480 = vmax.xlane.f32.xlu0 %v4479
    %v4481 = vpop.xlane.xlu0 %4480
    %v4482 = vsel %vm267, %v4476, -inf
    %4483 = vmax.xlane.f32.xlu0 %v4482
    %v4484 = vpop.xlane.xlu0 %4483
    %v4485 = vsub.f32 %v4471, %v4481
    %v4486 = vsub.f32 %v4476, %v4484
    %v4487 = vmul.f32 %v4485, 1.442695
    %v4488 = vpow.pop %v4487
    %v4489 = vmul.f32 %v4486, 1.442695
    %v4490 = vpow.pop %v4489
    %v4491 = vsel %vm267, %v4488, 0.0
    %4492 = vadd.xlane.f32.xlu0 %v4491
    %v4493 = vpop.xlane.xlu0 %4492
    %v4494 = vsel %vm267, %v4490, 0.0
    %4495 = vadd.xlane.f32.xlu0 %v4494
    %v4496 = vpop.xlane.xlu0 %4495
    %v4497 = vrcp.pop %v4493
    %v4498 = vrcp.pop %v4496
    %v4499 = vmul.f32 %v4488, %v4497
    %v4500 = vmul.f32 %v4490, %v4498
    %4501 = vrot.lane.b32.xlu0 %v3734, 104
    %v4502 = vpop.permute.xlu0 %4501
    %4503 = vrot.lane.b32.xlu0 %v3739, 104
    %v4504 = vpop.permute.xlu0 %4503
    %4505 = vrot.lane.b32.xlu0 %v3744, 104
    %v4506 = vpop.permute.xlu0 %4505
    %4507 = vrot.lane.b32.xlu0 %v3749, 104
    %v4508 = vpop.permute.xlu0 %4507
    %v4514 = vsel %vm267, %v4499, 0
    %v4517 = vsel %vm267, %v4500, 0
    %4519 = vmatprep.subr.mxu0 0.0
    %4520 = vmatpush1.msra.mxu0 %v4502
    %4521 = vmatprep.subr.mxu0 0.0
    %4522 = vmatpush1.msra.mxu0 %v4504
    %4523 = vmatprep.subr.mxu0 0.0
    %4524 = vmatpush1.msra.mxu0 %v4506
    %4525 = vmatprep.subr.mxu0 0.0
    %4526 = vmatpush1.msra.mxu0 %v4508
    %4527 = vmatprep.subr.mxu0 0.0
    %4528 = vmatpush1.msra.mxu0 0.0
    %4529 = vmatprep.subr.mxu0 0.0
    %4530 = vmatpush1.msra.mxu0 0.0
    %4531 = vmatprep.subr.mxu0 0.0
    %4532 = vmatpush1.msra.mxu0 0.0
    %4533 = vmatprep.subr.mxu0 0.0
    %4534 = vmatpush1.msra.mxu0 0.0
    %4535 = vmatprep.subr.mxu0 0.0
    %4536 = vmatpush1.msra.mxu0 0.0
    %4537 = vmatprep.subr.mxu0 0.0
    %4538 = vmatpush1.msra.mxu0 0.0
    %4539 = vmatprep.subr.mxu0 0.0
    %4540 = vmatpush1.msra.mxu0 0.0
    %4541 = vmatprep.subr.mxu0 0.0
    %4542 = vmatpush1.msra.mxu0 0.0
    %4543 = vmatprep.subr.mxu0 0.0
    %4544 = vmatpush1.msra.mxu0 0.0
    %4545 = vmatprep.subr.mxu0 0.0
    %4546 = vmatpush1.msra.mxu0 0.0
    %4547 = vmatprep.subr.mxu0 0.0
    %4548 = vmatpush1.msra.mxu0 0.0
    %4549 = vmatprep.subr.mxu0 0.0
    %4550 = vmatpush1.msra.mxu0 0.0
    %4551 = vmatprep.subr.mxu0 0.0
    %4552 = vmatpush1.msra.mxu0 0.0
    %4553 = vmatprep.subr.mxu0 0.0
    %4554 = vmatpush1.msra.mxu0 0.0
    %4555 = vmatprep.subr.mxu0 0.0
    %4556 = vmatpush1.msra.mxu0 0.0
    %4557 = vmatprep.subr.mxu0 0.0
    %4558 = vmatpush1.msra.mxu0 0.0
    %4559 = vmatprep.subr.mxu0 0.0
    %4560 = vmatpush1.msra.mxu0 0.0
    %4561 = vmatprep.subr.mxu0 0.0
    %4562 = vmatpush1.msra.mxu0 0.0
    %4563 = vmatprep.subr.mxu0 0.0
    %4564 = vmatpush1.msra.mxu0 0.0
    %4565 = vmatprep.subr.mxu0 0.0
    %4566 = vmatpush1.msra.mxu0 0.0
    %4567 = vmatprep.subr.mxu0 0.0
    %4568 = vmatpush1.msra.mxu0 0.0
    %4569 = vmatprep.subr.mxu0 0.0
    %4570 = vmatpush1.msra.mxu0 0.0
    %4571 = vmatprep.subr.mxu0 0.0
    %4572 = vmatpush1.msra.mxu0 0.0
    %4573 = vmatprep.subr.mxu0 0.0
    %4574 = vmatpush1.msra.mxu0 0.0
    %4575 = vmatprep.subr.mxu0 0.0
    %4576 = vmatpush1.msra.mxu0 0.0
    %4577 = vmatprep.subr.mxu0 0.0
    %4578 = vmatpush1.msra.mxu0 0.0
    %4579 = vmatprep.subr.mxu0 0.0
    %4580 = vmatpush1.msra.mxu0 0.0
    %4581 = vmatprep.subr.mxu0 0.0
    %4582 = vmatpush1.msra.mxu0 0.0
    %4583 = vmatprep.mubr.f32.mxu0 0.0
    %4584 = vmatmul.mubr.f32.gmra.mrb[0].mxu0 %v4514
    %v4585 = vpop.f32.mrb[0].mxu0
    %v4586 = vadd.f32 0.0, %v4585
    %v4587 = vpop.f32.mrb[0].mxu0
    %4588 = vmatprep.mubr.f32.mxu0 0.0
    %4589 = vmatmul.mubr.f32.gmra.mrb[0].mxu0 %v4517
    %v4590 = vpop.f32.mrb[0].mxu0
    %v4591 = vadd.f32 0.0, %v4590
    %v4592 = vpop.f32.mrb[0].mxu0
    %4593 = vdwg.mxu0
    %4596 = vrot.lane.b32.xlu0 %v4158, 8
    %v4597 = vpop.permute.xlu0 %4596
    %4598 = vrot.lane.b32.xlu0 %v4163, 8
    %v4599 = vpop.permute.xlu0 %4598
    %4604 = vrot.lane.b32.xlu0 %v4372, 16
    %v4605 = vpop.permute.xlu0 %4604
    %4606 = vrot.lane.b32.xlu0 %v4377, 16
    %v4607 = vpop.permute.xlu0 %4606
    %4612 = vrot.lane.b32.xlu0 %v4586, 24
    %v4613 = vpop.permute.xlu0 %4612
    %4614 = vrot.lane.b32.xlu0 %v4591, 24
    %v4615 = vpop.permute.xlu0 %4614
    %v4618 = vsel %vm573, %v3940, %v4597
    %v4619 = vsel %vm573, %v3945, %v4599
    %v4620 = vsel %vm1690, %v4618, %v4605
    %v4621 = vsel %vm1690, %v4619, %v4607
    %v4622 = vsel %vm1695, %v4620, %v4613
    %v4623 = vsel %vm1695, %v4621, %v4615
    %s4624 = scalar_lea.vmem %s39, 96
    %v4625 = vld [vmem:[%s4624] sm:$0xff]
    %v4626 = vld [vmem:[%s4624 + $0x8] sm:$0xff]
    %v4627 = vld [vmem:[%s4624 + $0x10] sm:$0xff]
    %v4628 = vld [vmem:[%s4624 + $0x18] sm:$0xff]
    %s4629 = scalar_lea.vmem %s41, 3
    %v4630 = vld [vmem:[%s4629] sm:$0x1]
    %v4632 = vlaneseq
    %v4633 = vshrl.u32 %v4632, 7
    %v4634 = vsub.s32 0, %v4633
    %v4635 = vrot.slane %v4630, %v4634
    %v4638 = vsel %vm267, %v4622, 0
    %v4641 = vsel %vm267, %v4623, 0
    %4643 = vmatprep.subr.mxu0 0.0
    %4644 = vmatpush1.msra.mxu0 %v4625
    %4645 = vmatprep.subr.mxu0 0.0
    %4646 = vmatpush1.msra.mxu0 %v4626
    %4647 = vmatprep.subr.mxu0 0.0
    %4648 = vmatpush1.msra.mxu0 %v4627
    %4649 = vmatprep.subr.mxu0 0.0
    %4650 = vmatpush1.msra.mxu0 %v4628
    %4651 = vmatprep.subr.mxu0 0.0
    %4652 = vmatpush1.msra.mxu0 0.0
    %4653 = vmatprep.subr.mxu0 0.0
    %4654 = vmatpush1.msra.mxu0 0.0
    %4655 = vmatprep.subr.mxu0 0.0
    %4656 = vmatpush1.msra.mxu0 0.0
    %4657 = vmatprep.subr.mxu0 0.0
    %4658 = vmatpush1.msra.mxu0 0.0
    %4659 = vmatprep.subr.mxu0 0.0
    %4660 = vmatpush1.msra.mxu0 0.0
    %4661 = vmatprep.subr.mxu0 0.0
    %4662 = vmatpush1.msra.mxu0 0.0
    %4663 = vmatprep.subr.mxu0 0.0
    %4664 = vmatpush1.msra.mxu0 0.0
    %4665 = vmatprep.subr.mxu0 0.0
    %4666 = vmatpush1.msra.mxu0 0.0
    %4667 = vmatprep.subr.mxu0 0.0
    %4668 = vmatpush1.msra.mxu0 0.0
    %4669 = vmatprep.subr.mxu0 0.0
    %4670 = vmatpush1.msra.mxu0 0.0
    %4671 = vmatprep.subr.mxu0 0.0
    %4672 = vmatpush1.msra.mxu0 0.0
    %4673 = vmatprep.subr.mxu0 0.0
    %4674 = vmatpush1.msra.mxu0 0.0
    %4675 = vmatprep.subr.mxu0 0.0
    %4676 = vmatpush1.msra.mxu0 0.0
    %4677 = vmatprep.subr.mxu0 0.0
    %4678 = vmatpush1.msra.mxu0 0.0
    %4679 = vmatprep.subr.mxu0 0.0
    %4680 = vmatpush1.msra.mxu0 0.0
    %4681 = vmatprep.subr.mxu0 0.0
    %4682 = vmatpush1.msra.mxu0 0.0
    %4683 = vmatprep.subr.mxu0 0.0
    %4684 = vmatpush1.msra.mxu0 0.0
    %4685 = vmatprep.subr.mxu0 0.0
    %4686 = vmatpush1.msra.mxu0 0.0
    %4687 = vmatprep.subr.mxu0 0.0
    %4688 = vmatpush1.msra.mxu0 0.0
    %4689 = vmatprep.subr.mxu0 0.0
    %4690 = vmatpush1.msra.mxu0 0.0
    %4691 = vmatprep.subr.mxu0 0.0
    %4692 = vmatpush1.msra.mxu0 0.0
    %4693 = vmatprep.subr.mxu0 0.0
    %4694 = vmatpush1.msra.mxu0 0.0
    %4695 = vmatprep.subr.mxu0 0.0
    %4696 = vmatpush1.msra.mxu0 0.0
    %4697 = vmatprep.subr.mxu0 0.0
    %4698 = vmatpush1.msra.mxu0 0.0
    %4699 = vmatprep.subr.mxu0 0.0
    %4700 = vmatpush1.msra.mxu0 0.0
    %4701 = vmatprep.subr.mxu0 0.0
    %4702 = vmatpush1.msra.mxu0 0.0
    %4703 = vmatprep.subr.mxu0 0.0
    %4704 = vmatpush1.msra.mxu0 0.0
    %4705 = vmatprep.subr.mxu0 0.0
    %4706 = vmatpush1.msra.mxu0 0.0
    %4707 = vmatprep.mubr.f32.mxu0 0.0
    %4708 = vmatmul.mubr.f32.gmra.mrb[0].mxu0 %v4638
    %v4709 = vpop.f32.mrb[0].mxu0
    %v4710 = vadd.f32 %v4635, %v4709
    %v4711 = vpop.f32.mrb[0].mxu0
    %4712 = vmatprep.mubr.f32.mxu0 0.0
    %4713 = vmatmul.mubr.f32.gmra.mrb[0].mxu0 %v4641
    %v4714 = vpop.f32.mrb[0].mxu0
    %v4715 = vadd.f32 %v4635, %v4714
    %v4716 = vpop.f32.mrb[0].mxu0
    %4717 = vdwg.mxu0
    %v4718 = vadd.f32 %v3436, %v4710
    %v4719 = vadd.f32 %v3437, %v4715
    %v4720 = vld [vmem:[%s43] sm:$0x1]
    %s4721 = scalar_lea.vmem %s43, 1
    %v4722 = vld [vmem:[%s4721] sm:$0x1]
    %v4723 = vsel %vm267, %v4718, 0.0
    %4724 = vadd.xlane.f32.xlu0 %v4723
    %v4725 = vpop.xlane.xlu0 %4724
    %v4726 = vsel %vm267, %v4719, 0.0
    %4727 = vadd.xlane.f32.xlu0 %v4726
    %v4728 = vpop.xlane.xlu0 %4727
    %v4729 = vmul.f32 %v4725, %v1829
    %v4730 = vmul.f32 %v4728, %v1829
    %v4731 = vsub.f32 %v4718, %v4729
    %v4732 = vsub.f32 %v4719, %v4730
    %v4733 = vmul.f32 %v4731, %v4731
    %v4734 = vmul.f32 %v4732, %v4732
    %v4735 = vsel %vm267, %v4733, 0.0
    %4736 = vadd.xlane.f32.xlu0 %v4735
    %v4737 = vpop.xlane.xlu0 %4736
    %v4738 = vsel %vm267, %v4734, 0.0
    %4739 = vadd.xlane.f32.xlu0 %v4738
    %v4740 = vpop.xlane.xlu0 %4739
    %v4741 = vmul.f32 %v4737, %v1829
    %v4742 = vmul.f32 %v4740, %v1829
    %v4743 = vadd.f32 %v4741, 1e-05
    %v4744 = vadd.f32 %v4742, 1e-05
    %v4745 = vrsqrt.pop %v4743
    %v4746 = vrsqrt.pop %v4744
    %v4747 = vmul.f32 %v4731, %v4745
    %v4748 = vmul.f32 %v4732, %v4746
    %v4750 = vlaneseq
    %v4751 = vshrl.u32 %v4750, 7
    %v4752 = vsub.s32 0, %v4751
    %v4753 = vrot.slane %v4720, %v4752
    %v4755 = vmul.f32 %v4747, %v4753
    %v4756 = vmul.f32 %v4748, %v4753
    %v4758 = vlaneseq
    %v4759 = vshrl.u32 %v4758, 7
    %v4760 = vsub.s32 0, %v4759
    %v4761 = vrot.slane %v4722, %v4760
    %v4763 = vadd.f32 %v4755, %v4761
    %v4764 = vadd.f32 %v4756, %v4761
    %v4765 = vld [vmem:[%s45] sm:$0xff]
    %v4766 = vld [vmem:[%s45 + $0x8] sm:$0xff]
    %v4767 = vld [vmem:[%s45 + $0x10] sm:$0xff]
    %v4768 = vld [vmem:[%s45 + $0x18] sm:$0xff]
    %v4769 = vld [vmem:[%s47] sm:$0x1]
    %v4771 = vlaneseq
    %v4772 = vshrl.u32 %v4771, 7
    %v4773 = vsub.s32 0, %v4772
    %v4774 = vrot.slane %v4769, %v4773
    %v4777 = vsel %vm267, %v4763, 0
    %v4780 = vsel %vm267, %v4764, 0
    %4782 = vmatprep.subr.mxu0 0.0
    %4783 = vmatpush1.msra.mxu0 %v4765
    %4784 = vmatprep.subr.mxu0 0.0
    %4785 = vmatpush1.msra.mxu0 %v4766
    %4786 = vmatprep.subr.mxu0 0.0
    %4787 = vmatpush1.msra.mxu0 %v4767
    %4788 = vmatprep.subr.mxu0 0.0
    %4789 = vmatpush1.msra.mxu0 %v4768
    %4790 = vmatprep.subr.mxu0 0.0
    %4791 = vmatpush1.msra.mxu0 0.0
    %4792 = vmatprep.subr.mxu0 0.0
    %4793 = vmatpush1.msra.mxu0 0.0
    %4794 = vmatprep.subr.mxu0 0.0
    %4795 = vmatpush1.msra.mxu0 0.0
    %4796 = vmatprep.subr.mxu0 0.0
    %4797 = vmatpush1.msra.mxu0 0.0
    %4798 = vmatprep.subr.mxu0 0.0
    %4799 = vmatpush1.msra.mxu0 0.0
    %4800 = vmatprep.subr.mxu0 0.0
    %4801 = vmatpush1.msra.mxu0 0.0
    %4802 = vmatprep.subr.mxu0 0.0
    %4803 = vmatpush1.msra.mxu0 0.0
    %4804 = vmatprep.subr.mxu0 0.0
    %4805 = vmatpush1.msra.mxu0 0.0
    %4806 = vmatprep.subr.mxu0 0.0
    %4807 = vmatpush1.msra.mxu0 0.0
    %4808 = vmatprep.subr.mxu0 0.0
    %4809 = vmatpush1.msra.mxu0 0.0
    %4810 = vmatprep.subr.mxu0 0.0
    %4811 = vmatpush1.msra.mxu0 0.0
    %4812 = vmatprep.subr.mxu0 0.0
    %4813 = vmatpush1.msra.mxu0 0.0
    %4814 = vmatprep.subr.mxu0 0.0
    %4815 = vmatpush1.msra.mxu0 0.0
    %4816 = vmatprep.subr.mxu0 0.0
    %4817 = vmatpush1.msra.mxu0 0.0
    %4818 = vmatprep.subr.mxu0 0.0
    %4819 = vmatpush1.msra.mxu0 0.0
    %4820 = vmatprep.subr.mxu0 0.0
    %4821 = vmatpush1.msra.mxu0 0.0
    %4822 = vmatprep.subr.mxu0 0.0
    %4823 = vmatpush1.msra.mxu0 0.0
    %4824 = vmatprep.subr.mxu0 0.0
    %4825 = vmatpush1.msra.mxu0 0.0
    %4826 = vmatprep.subr.mxu0 0.0
    %4827 = vmatpush1.msra.mxu0 0.0
    %4828 = vmatprep.subr.mxu0 0.0
    %4829 = vmatpush1.msra.mxu0 0.0
    %4830 = vmatprep.subr.mxu0 0.0
    %4831 = vmatpush1.msra.mxu0 0.0
    %4832 = vmatprep.subr.mxu0 0.0
    %4833 = vmatpush1.msra.mxu0 0.0
    %4834 = vmatprep.subr.mxu0 0.0
    %4835 = vmatpush1.msra.mxu0 0.0
    %4836 = vmatprep.subr.mxu0 0.0
    %4837 = vmatpush1.msra.mxu0 0.0
    %4838 = vmatprep.subr.mxu0 0.0
    %4839 = vmatpush1.msra.mxu0 0.0
    %4840 = vmatprep.subr.mxu0 0.0
    %4841 = vmatpush1.msra.mxu0 0.0
    %4842 = vmatprep.subr.mxu0 0.0
    %4843 = vmatpush1.msra.mxu0 0.0
    %4844 = vmatprep.subr.mxu0 0.0
    %4845 = vmatpush1.msra.mxu0 0.0
    %4846 = vmatprep.mubr.f32.mxu0 0.0
    %4847 = vmatmul.mubr.f32.gmra.mrb[0].mxu0 %v4777
    %v4848 = vpop.f32.mrb[0].mxu0
    %v4849 = vadd.f32 %v4774, %v4848
    %v4850 = vpop.f32.mrb[0].mxu0
    %4851 = vmatprep.mubr.f32.mxu0 0.0
    %4852 = vmatmul.mubr.f32.gmra.mrb[0].mxu0 %v4780
    %v4853 = vpop.f32.mrb[0].mxu0
    %v4854 = vadd.f32 %v4774, %v4853
    %v4855 = vpop.f32.mrb[0].mxu0
    %4856 = vdwg.mxu0
    %v4857 = vmax.f32 %v4849, 0.0
    %v4858 = vmax.f32 %v4854, 0.0
    %v4859 = vld [vmem:[%s49] sm:$0xff]
    %v4860 = vld [vmem:[%s49 + $0x8] sm:$0xff]
    %v4861 = vld [vmem:[%s49 + $0x10] sm:$0xff]
    %v4862 = vld [vmem:[%s49 + $0x18] sm:$0xff]
    %v4863 = vld [vmem:[%s49 + $0x20] sm:$0xff]
    %v4864 = vld [vmem:[%s49 + $0x28] sm:$0xff]
    %v4865 = vld [vmem:[%s49 + $0x30] sm:$0xff]
    %v4866 = vld [vmem:[%s49 + $0x38] sm:$0xff]
    %v4867 = vld [vmem:[%s51] sm:$0x1]
    %v4869 = vlaneseq
    %v4870 = vshrl.u32 %v4869, 7
    %v4871 = vsub.s32 0, %v4870
    %v4872 = vrot.slane %v4867, %v4871
    %v4875 = vsel %vm2017, %v4857, 0
    %v4878 = vsel %vm2017, %v4858, 0
    %4880 = vmatprep.subr.mxu0 0.0
    %4881 = vmatpush1.msra.mxu0 %v4859
    %4882 = vmatprep.subr.mxu0 0.0
    %4883 = vmatpush1.msra.mxu0 %v4860
    %4884 = vmatprep.subr.mxu0 0.0
    %4885 = vmatpush1.msra.mxu0 %v4861
    %4886 = vmatprep.subr.mxu0 0.0
    %4887 = vmatpush1.msra.mxu0 %v4862
    %4888 = vmatprep.subr.mxu0 0.0
    %4889 = vmatpush1.msra.mxu0 %v4863
    %4890 = vmatprep.subr.mxu0 0.0
    %4891 = vmatpush1.msra.mxu0 %v4864
    %4892 = vmatprep.subr.mxu0 0.0
    %4893 = vmatpush1.msra.mxu0 %v4865
    %4894 = vmatprep.subr.mxu0 0.0
    %4895 = vmatpush1.msra.mxu0 %v4866
    %4896 = vmatprep.subr.mxu0 0.0
    %4897 = vmatpush1.msra.mxu0 0.0
    %4898 = vmatprep.subr.mxu0 0.0
    %4899 = vmatpush1.msra.mxu0 0.0
    %4900 = vmatprep.subr.mxu0 0.0
    %4901 = vmatpush1.msra.mxu0 0.0
    %4902 = vmatprep.subr.mxu0 0.0
    %4903 = vmatpush1.msra.mxu0 0.0
    %4904 = vmatprep.subr.mxu0 0.0
    %4905 = vmatpush1.msra.mxu0 0.0
    %4906 = vmatprep.subr.mxu0 0.0
    %4907 = vmatpush1.msra.mxu0 0.0
    %4908 = vmatprep.subr.mxu0 0.0
    %4909 = vmatpush1.msra.mxu0 0.0
    %4910 = vmatprep.subr.mxu0 0.0
    %4911 = vmatpush1.msra.mxu0 0.0
    %4912 = vmatprep.subr.mxu0 0.0
    %4913 = vmatpush1.msra.mxu0 0.0
    %4914 = vmatprep.subr.mxu0 0.0
    %4915 = vmatpush1.msra.mxu0 0.0
    %4916 = vmatprep.subr.mxu0 0.0
    %4917 = vmatpush1.msra.mxu0 0.0
    %4918 = vmatprep.subr.mxu0 0.0
    %4919 = vmatpush1.msra.mxu0 0.0
    %4920 = vmatprep.subr.mxu0 0.0
    %4921 = vmatpush1.msra.mxu0 0.0
    %4922 = vmatprep.subr.mxu0 0.0
    %4923 = vmatpush1.msra.mxu0 0.0
    %4924 = vmatprep.subr.mxu0 0.0
    %4925 = vmatpush1.msra.mxu0 0.0
    %4926 = vmatprep.subr.mxu0 0.0
    %4927 = vmatpush1.msra.mxu0 0.0
    %4928 = vmatprep.subr.mxu0 0.0
    %4929 = vmatpush1.msra.mxu0 0.0
    %4930 = vmatprep.subr.mxu0 0.0
    %4931 = vmatpush1.msra.mxu0 0.0
    %4932 = vmatprep.subr.mxu0 0.0
    %4933 = vmatpush1.msra.mxu0 0.0
    %4934 = vmatprep.subr.mxu0 0.0
    %4935 = vmatpush1.msra.mxu0 0.0
    %4936 = vmatprep.subr.mxu0 0.0
    %4937 = vmatpush1.msra.mxu0 0.0
    %4938 = vmatprep.subr.mxu0 0.0
    %4939 = vmatpush1.msra.mxu0 0.0
    %4940 = vmatprep.subr.mxu0 0.0
    %4941 = vmatpush1.msra.mxu0 0.0
    %4942 = vmatprep.subr.mxu0 0.0
    %4943 = vmatpush1.msra.mxu0 0.0
    %4944 = vmatprep.mubr.f32.mxu0 0.0
    %4945 = vmatmul.mubr.f32.gmra.mrb[0].mxu0 %v4875
    %v4946 = vpop.f32.mrb[0].mxu0
    %v4947 = vadd.f32 %v4872, %v4946
    %v4948 = vpop.f32.mrb[0].mxu0
    %4949 = vmatprep.mubr.f32.mxu0 0.0
    %4950 = vmatmul.mubr.f32.gmra.mrb[0].mxu0 %v4878
    %v4951 = vpop.f32.mrb[0].mxu0
    %v4952 = vadd.f32 %v4872, %v4951
    %v4953 = vpop.f32.mrb[0].mxu0
    %4954 = vdwg.mxu0
    %v4955 = vadd.f32 %v4763, %v4947
    %v4956 = vadd.f32 %v4764, %v4952
    %v4957 = vld [vmem:[%s53] sm:$0x1]
    %s4958 = scalar_lea.vmem %s53, 1
    %v4959 = vld [vmem:[%s4958] sm:$0x1]
    %v4960 = vsel %vm267, %v4955, 0.0
    %4961 = vadd.xlane.f32.xlu0 %v4960
    %v4962 = vpop.xlane.xlu0 %4961
    %v4963 = vsel %vm267, %v4956, 0.0
    %4964 = vadd.xlane.f32.xlu0 %v4963
    %v4965 = vpop.xlane.xlu0 %4964
    %v4966 = vmul.f32 %v4962, %v1829
    %v4967 = vmul.f32 %v4965, %v1829
    %v4968 = vsub.f32 %v4955, %v4966
    %v4969 = vsub.f32 %v4956, %v4967
    %v4970 = vmul.f32 %v4968, %v4968
    %v4971 = vmul.f32 %v4969, %v4969
    %v4972 = vsel %vm267, %v4970, 0.0
    %4973 = vadd.xlane.f32.xlu0 %v4972
    %v4974 = vpop.xlane.xlu0 %4973
    %v4975 = vsel %vm267, %v4971, 0.0
    %4976 = vadd.xlane.f32.xlu0 %v4975
    %v4977 = vpop.xlane.xlu0 %4976
    %v4978 = vmul.f32 %v4974, %v1829
    %v4979 = vmul.f32 %v4977, %v1829
    %v4980 = vadd.f32 %v4978, 1e-05
    %v4981 = vadd.f32 %v4979, 1e-05
    %v4982 = vrsqrt.pop %v4980
    %v4983 = vrsqrt.pop %v4981
    %v4984 = vmul.f32 %v4968, %v4982
    %v4985 = vmul.f32 %v4969, %v4983
    %v4987 = vlaneseq
    %v4988 = vshrl.u32 %v4987, 7
    %v4989 = vsub.s32 0, %v4988
    %v4990 = vrot.slane %v4957, %v4989
    %v4992 = vmul.f32 %v4984, %v4990
    %v4993 = vmul.f32 %v4985, %v4990
    %v4995 = vlaneseq
    %v4996 = vshrl.u32 %v4995, 7
    %v4997 = vsub.s32 0, %v4996
    %v4998 = vrot.slane %v4959, %v4997
    %v5000 = vadd.f32 %v4992, %v4998
    %v5001 = vadd.f32 %v4993, %v4998
    %v5002 = vld [vmem:[%s55] sm:$0x1]
    %s5003 = scalar_lea.vmem %s55, 1
    %v5004 = vld [vmem:[%s5003] sm:$0x1]
    %v5005 = vsel %vm267, %v5000, 0.0
    %5006 = vadd.xlane.f32.xlu0 %v5005
    %v5007 = vpop.xlane.xlu0 %5006
    %v5008 = vsel %vm267, %v5001, 0.0
    %5009 = vadd.xlane.f32.xlu0 %v5008
    %v5010 = vpop.xlane.xlu0 %5009
    %v5011 = vmul.f32 %v5007, %v1829
    %v5012 = vmul.f32 %v5010, %v1829
    %v5013 = vsub.f32 %v5000, %v5011
    %v5014 = vsub.f32 %v5001, %v5012
    %v5015 = vmul.f32 %v5013, %v5013
    %v5016 = vmul.f32 %v5014, %v5014
    %v5017 = vsel %vm267, %v5015, 0.0
    %5018 = vadd.xlane.f32.xlu0 %v5017
    %v5019 = vpop.xlane.xlu0 %5018
    %v5020 = vsel %vm267, %v5016, 0.0
    %5021 = vadd.xlane.f32.xlu0 %v5020
    %v5022 = vpop.xlane.xlu0 %5021
    %v5023 = vmul.f32 %v5019, %v1829
    %v5024 = vmul.f32 %v5022, %v1829
    %v5025 = vadd.f32 %v5023, 1e-05
    %v5026 = vadd.f32 %v5024, 1e-05
    %v5027 = vrsqrt.pop %v5025
    %v5028 = vrsqrt.pop %v5026
    %v5029 = vmul.f32 %v5013, %v5027
    %v5030 = vmul.f32 %v5014, %v5028
    %v5032 = vlaneseq
    %v5033 = vshrl.u32 %v5032, 7
    %v5034 = vsub.s32 0, %v5033
    %v5035 = vrot.slane %v5002, %v5034
    %v5037 = vmul.f32 %v5029, %v5035
    %v5038 = vmul.f32 %v5030, %v5035
    %v5040 = vlaneseq
    %v5041 = vshrl.u32 %v5040, 7
    %v5042 = vsub.s32 0, %v5041
    %v5043 = vrot.slane %v5004, %v5042
    %v5045 = vadd.f32 %v5037, %v5043
    %v5046 = vadd.f32 %v5038, %v5043
    %5047 = vst.msk [vmem:[#allocation2] sm:$0xff] %vm267, %v5045
    %5048 = vst.msk [vmem:[#allocation2 + $0x8] sm:$0xff] %vm267, %v5046
    // Predicated region
    $region114: #{detr_forward.1} parent=1 // pred_check
      _
    $region115: #{detr_forward.1} parent=1 // pred_check_branch
      %5050 = sbr.rel (0) target = $region117
    $region116: #{detr_forward.1} parent=1 // pred_region
      %s5052 = ssub.s32 256, 256
      %5053 = vsyncadd [#allocation3], %s5052
      %s5054 = sshll.u32 [#allocation2], 4
      %s5055 = int_to_ptr.vmem [resolvable:$true] %s5054
      %5060 = dma.vmem_to_hbm [thread:$0]  %s5055, 256, %s57, [#allocation3], 128, 128, 8
    $region117: #{detr_forward.1} parent=1 // pred_fallthru
      _
    // Predicated region
    $region118: #{detr_forward.1} parent=1 // pred_check
      _
    $region119: #{detr_forward.1} parent=1 // pred_check_branch
      %5062 = sbr.rel (0) target = $region121
    $region120: #{detr_forward.1} parent=1 // pred_region
      %s5064 = ssub.s32 512, 512
      %5065 = vsyncadd [#allocation5], %s5064
      %s5066 = sshll.u32 [#allocation4], 4
      %s5067 = int_to_ptr.vmem [resolvable:$true] %s5066
      %5072 = dma.vmem_to_hbm [thread:$0]  %s5067, 512, %s59, [#allocation5], 128, 128, 8
    $region121: #{detr_forward.1} parent=1 // pred_fallthru
      _
    // Predicated region
    $region122: #{detr_forward.1} parent=1 // pred_check
      _
    $region123: #{detr_forward.1} parent=1 // pred_check_branch
      %5074 = sbr.rel (0) target = $region125
    $region124: #{detr_forward.1} parent=1 // pred_region
      %5075 = dma.done [#allocation3], 256
    $region125: #{detr_forward.1} parent=1 // pred_fallthru
      _
    // Predicated region
    $region126: #{detr_forward.1} parent=1 // pred_check
      _
    $region127: #{detr_forward.1} parent=1 // pred_check_branch
      %5077 = sbr.rel (0) target = $region129
    $region128: #{detr_forward.1} parent=1 // pred_region
      %5078 = dma.done [#allocation5], 512
    $region129: #{detr_forward.1} parent=1 // pred_fallthru
      _
    %5079 = vsyncpa [#allocation3], 1
    %5080 = vsyncpa [#allocation5], 1

</llo_original>
